<compile_context>
chip_gen: v7x
topology: tpu7x:2x2x1
jax: 0.10.0
libtpu: 0.0.40
codegen_flags: <defaults>
</compile_context>

<pallas_src>
import functools

import jax
import jax.numpy as jnp
from jax.experimental import pallas as pl
from jax.experimental.pallas import tpu as pltpu

_D_PAD = 128     # lane-padded model width (real d_model occupies the first lanes)
_C_PAD = 128     # lane-padded classifier width (sliced back in the wrapper)
_LN_EPS = 1e-5


def _fused_gat_transformer_kernel(
    # GAT / input-norm stage
    x_ref, adj_ref, gat_w_ref, gat_asrc_ref, gat_adst_ref, gat_b_ref,
    nin_g_ref, nin_b_ref, lane_mask_ref,
    # stacked encoder-layer params (leading dim = layer)
    wqkv_ref, bqkv_ref, wo_ref, bo_ref, ln1_g_ref, ln1_b_ref,
    ff1_w_ref, ff1_b_ref, ff2_w_ref, ff2_b_ref, ln2_g_ref, ln2_b_ref,
    # final norm + classifier
    enc_g_ref, enc_b_ref, out_w_ref, out_b_ref,
    # output
    o_ref,
    *, nhead, d_model):
    f32, bf16 = jnp.float32, jnp.bfloat16
    n = x_ref.shape[0]
    dp = lane_mask_ref.shape[-1]            # padded model width (128)
    nlayer = wqkv_ref.shape[0]
    dh = d_model // nhead
    scale = 1.0 / float(dh) ** 0.5
    inv_d = 1.0 / float(d_model)
    lane_mask = lane_mask_ref[...]          # (1, dp): 1.0 on real lanes, 0.0 on padding

    def layer_norm(v, g, b):
        # v is zero on padding lanes; statistics use the real d_model lanes only.
        mu = jnp.sum(v, axis=-1, keepdims=True) * inv_d
        vc = v - mu
        vcm = vc * lane_mask
        var = jnp.sum(vcm * vcm, axis=-1, keepdims=True) * inv_d
        # g, b are zero on padding lanes -> output padding lanes stay exactly 0.
        return vc * jax.lax.rsqrt(var + _LN_EPS) * g + b

    # ------------- GAT conv + ELU + input LayerNorm (dropout = identity in eval) -------------
    h0 = jnp.dot(x_ref[...].astype(bf16), gat_w_ref[...],
                 preferred_element_type=f32)                                  # (n, dp)
    # dest term: s_dst[i] = h0[i] . a_dst   (VPU multiply + lane reduce)
    s_dst = jnp.sum(h0 * gat_adst_ref[...], axis=-1, keepdims=True)           # (n, 1)
    # source term directly as an (n, n) matrix, no transpose:
    # e_src[i, j] = a_src . h0[j]  (every row identical)
    a_src_b = jnp.broadcast_to(gat_asrc_ref[...], (n, dp)).astype(bf16)
    e_src = jax.lax.dot_general(a_src_b, h0.astype(bf16),
                                (((1,), (1,)), ((), ())),
                                preferred_element_type=f32)                   # (n, n)
    e = s_dst + e_src
    e = jnp.where(e > 0, e, 0.2 * e)                                          # LeakyReLU(0.2)
    adj_f = adj_ref[...].astype(f32)
    # NOTE: a fully masked row (no self-loop in adj) would yield a uniform softmax row.
    e = jnp.where(adj_f > 0, e, -1e30)
    e = e - jnp.max(e, axis=-1, keepdims=True)
    p = jnp.exp(e)
    inv = pl.reciprocal(jnp.sum(p, axis=-1, keepdims=True), approx=True)
    hg = jnp.dot(p.astype(bf16), h0.astype(bf16),
                 preferred_element_type=f32) * inv + gat_b_ref[...]           # normalize after P@V
    hg = jnp.where(hg > 0, hg, jnp.exp(jnp.minimum(hg, 0.0)) - 1.0)           # overflow-safe ELU
    h = layer_norm(hg, nin_g_ref[...], nin_b_ref[...])

    # ------------- nlayer post-norm transformer encoder layers (relu FFN, no key mask) -------
    for l in range(nlayer):                 # static unroll: nlayer is small & compile-time
        hb = h.astype(bf16)
        qkv = jnp.dot(hb, wqkv_ref[l], preferred_element_type=f32) + bqkv_ref[l]  # (n, 3*nhead*dp)
        wo_l = wo_ref[l]                    # (nhead*dp, dp) bf16
        attn = bo_ref[l]                    # out-proj bias, added once
        for hd in range(nhead):             # each head owns a 128-lane slab -> lane-dense slices
            q = (qkv[:, hd * dp:(hd + 1) * dp] * scale).astype(bf16)
            k = qkv[:, (nhead + hd) * dp:(nhead + hd + 1) * dp].astype(bf16)
            v = qkv[:, (2 * nhead + hd) * dp:(2 * nhead + hd + 1) * dp].astype(bf16)
            s = jax.lax.dot_general(q, k, (((1,), (1,)), ((), ())),
                                    preferred_element_type=f32)               # (n, n) = q @ k^T
            s = s - jnp.max(s, axis=-1, keepdims=True)
            ps = jnp.exp(s)
            inv_l = pl.reciprocal(jnp.sum(ps, axis=-1, keepdims=True), approx=True)
            oh = jnp.dot(ps.astype(bf16), v, preferred_element_type=f32) * inv_l  # post-normalized
            # accumulate the output projection per head (no head concat relayout)
            attn = attn + jnp.dot(oh.astype(bf16), wo_l[hd * dp:(hd + 1) * dp, :],
                                  preferred_element_type=f32)
        h = layer_norm(h + attn, ln1_g_ref[l], ln1_b_ref[l])
        ff = jnp.dot(h.astype(bf16), ff1_w_ref[l], preferred_element_type=f32) + ff1_b_ref[l]
        ff = jnp.maximum(ff, 0.0)                                             # relu
        ff = jnp.dot(ff.astype(bf16), ff2_w_ref[l], preferred_element_type=f32) + ff2_b_ref[l]
        h = layer_norm(h + ff, ln2_g_ref[l], ln2_b_ref[l])

    # ------------- final encoder norm + classifier (lane-dense 128-wide store) ---------------
    hf = layer_norm(h, enc_g_ref[...], enc_b_ref[...])
    logits = jnp.dot(hf.astype(bf16), out_w_ref[...],
                     preferred_element_type=f32) + out_b_ref[...]
    o_ref[...] = logits.astype(o_ref.dtype)


def gat_transformer_forward(x, adj, params, *, nhead, d_model, num_classes):
    n, f_in = x.shape
    dp = params["norm_in_g"].shape[-1]
    cp = params["out_w"].shape[-1]
    dffp = params["ff1_w"].shape[-1]
    nlayer = params["wqkv"].shape[0]

    operands = (
        x, adj,
        params["gat_w"], params["gat_a_src"], params["gat_a_dst"], params["gat_b"],
        params["norm_in_g"], params["norm_in_b"], params["lane_mask"],
        params["wqkv"], params["bqkv"], params["wo"], params["bo"],
        params["ln1_g"], params["ln1_b"],
        params["ff1_w"], params["ff1_b"], params["ff2_w"], params["ff2_b"],
        params["ln2_g"], params["ln2_b"],
        params["enc_norm_g"], params["enc_norm_b"],
        params["out_w"], params["out_b"],
    )

    # rough roofline hint for the XLA scheduler
    flops = int(
        2 * n * f_in * dp + 4 * n * n * dp                         # GAT: proj, e_src, aggregation
        + nlayer * (2 * n * dp * 3 * nhead * dp                    # qkv projection
                    + nhead * (4 * n * n * dp + 2 * n * dp * dp)   # scores, p@v, out projection
                    + 4 * n * dp * dffp)                           # ffn
        + 2 * n * dp * cp)                                         # classifier
    transcendentals = int(n * n + n * dp + nlayer * (nhead * n * n + 2 * n) + 2 * n)
    bytes_accessed = int(sum(a.size * a.dtype.itemsize for a in operands) + n * cp * 4)

    vmem_spec = pl.BlockSpec(memory_space=pltpu.MemorySpace.VMEM)   # whole array, VMEM resident
    logits = pl.pallas_call(
        functools.partial(_fused_gat_transformer_kernel, nhead=nhead, d_model=d_model),
        out_shape=jax.ShapeDtypeStruct((n, cp), jnp.float32),
        in_specs=[vmem_spec] * len(operands),
        out_specs=vmem_spec,
        compiler_params=pltpu.CompilerParams(vmem_limit_bytes=32 * 1024 * 1024),
        cost_estimate=pl.CostEstimate(flops=flops,
                                      transcendentals=transcendentals,
                                      bytes_accessed=bytes_accessed),
    )(*operands)
    return logits[:, :num_classes]


# ----------------------------- parameter construction -----------------------------

def init_params(key, f_in, d_model, nhead, dim_ff, nlayer, num_classes,
                d_pad=_D_PAD, c_pad=_C_PAD):
    assert d_model % nhead == 0 and d_model <= d_pad and num_classes <= c_pad
    dh = d_model // nhead
    dff_pad = max(128, ((dim_ff + 127) // 128) * 128)

    def nrm(k, shape, std=0.1):
        return std * jax.random.normal(k, shape, dtype=jnp.float32)

    def pad2(a, rows, cols):
        return jnp.zeros((rows, cols), jnp.float32).at[:a.shape[0], :a.shape[1]].set(a)

    keys = iter(jax.random.split(key, 6 + 8 * nlayer))

    gat_w = pad2(nrm(next(keys), (f_in, d_model)), f_in, d_pad).astype(jnp.bfloat16)
    gat_a_src = pad2(nrm(next(keys), (1, d_model)), 1, d_pad)
    gat_a_dst = pad2(nrm(next(keys), (1, d_model)), 1, d_pad)
    gat_b = pad2(nrm(next(keys), (1, d_model)), 1, d_pad)
    out_w = pad2(nrm(next(keys), (d_model, num_classes)), d_pad, c_pad).astype(jnp.bfloat16)
    out_b = pad2(nrm(next(keys), (1, num_classes)), 1, c_pad)

    ln_g = pad2(jnp.ones((1, d_model), jnp.float32), 1, d_pad)   # gamma: 1 real lanes, 0 padding
    ln_b = jnp.zeros((1, d_pad), jnp.float32)
    lane_mask = pad2(jnp.ones((1, d_model), jnp.float32), 1, d_pad)

    wqkv, bqkv, wo, bo = [], [], [], []
    f1w, f1b, f2w, f2b = [], [], [], []
    for _ in range(nlayer):
        in_w = nrm(next(keys), (d_model, 3 * d_model))   # packed [Wq | Wk | Wv]
        in_b = nrm(next(keys), (1, 3 * d_model))
        op_w = nrm(next(keys), (d_model, d_model))
        op_b = nrm(next(keys), (1, d_model))
        # re-layout: each head's q/k/v occupies its own 128-lane slab (zero padding)
        wq = jnp.zeros((d_pad, 3 * nhead * d_pad), jnp.float32)
        bq = jnp.zeros((1, 3 * nhead * d_pad), jnp.float32)
        for t in range(3):                               # 0:q 1:k 2:v
            for hd in range(nhead):
                c0 = t * d_model + hd * dh
                dst = (t * nhead + hd) * d_pad
                wq = wq.at[:d_model, dst:dst + dh].set(in_w[:, c0:c0 + dh])
                bq = bq.at[:, dst:dst + dh].set(in_b[:, c0:c0 + dh])
        wqkv.append(wq.astype(jnp.bfloat16))
        bqkv.append(bq)
        # output projection, per-head 128-row slabs (accumulated in the kernel)
        ow = jnp.zeros((nhead * d_pad, d_pad), jnp.float32)
        for hd in range(nhead):
            ow = ow.at[hd * d_pad:hd * d_pad + dh, :d_model].set(op_w[hd * dh:(hd + 1) * dh, :])
        wo.append(ow.astype(jnp.bfloat16))
        bo.append(pad2(op_b, 1, d_pad))
        f1w.append(pad2(nrm(next(keys), (d_model, dim_ff)), d_pad, dff_pad).astype(jnp.bfloat16))
        f1b.append(pad2(nrm(next(keys), (1, dim_ff)), 1, dff_pad))
        f2w.append(pad2(nrm(next(keys), (dim_ff, d_model)), dff_pad, d_pad).astype(jnp.bfloat16))
        f2b.append(pad2(nrm(next(keys), (1, d_model)), 1, d_pad))

    return {
        "gat_w": gat_w, "gat_a_src": gat_a_src, "gat_a_dst": gat_a_dst, "gat_b": gat_b,
        "norm_in_g": ln_g, "norm_in_b": ln_b, "lane_mask": lane_mask,
        "enc_norm_g": ln_g, "enc_norm_b": ln_b,
        "out_w": out_w, "out_b": out_b,
        "wqkv": jnp.stack(wqkv), "bqkv": jnp.stack(bqkv),
        "wo": jnp.stack(wo), "bo": jnp.stack(bo),
        "ln1_g": jnp.broadcast_to(ln_g, (nlayer, 1, d_pad)),
        "ln1_b": jnp.broadcast_to(ln_b, (nlayer, 1, d_pad)),
        "ln2_g": jnp.broadcast_to(ln_g, (nlayer, 1, d_pad)),
        "ln2_b": jnp.broadcast_to(ln_b, (nlayer, 1, d_pad)),
        "ff1_w": jnp.stack(f1w), "ff1_b": jnp.stack(f1b),
        "ff2_w": jnp.stack(f2w), "ff2_b": jnp.stack(f2b),
    }


if __name__ == "__main__":
    # small shapes consistent with the module's forward
    N, F_IN = 16, 8
    D_MODEL = 32              # config['gat_out_dim'], JK='last' -> d_model = 32
    NHEAD = 2                 # config['trans_head']
    DIM_FF = 2 * D_MODEL      # config['trans_expand'] = 2
    NLAYER = 2                # config['trans_nlayer']
    NUM_CLASSES = 4           # dataset.num_classes

    key = jax.random.PRNGKey(0)
    k_x, k_adj, k_p = jax.random.split(key, 3)

    x = jax.random.normal(k_x, (N, F_IN), dtype=jnp.float32)
    # deterministic sparse adjacency with self-loops, stored as int8
    adj = jax.random.uniform(k_adj, (N, N)) < 0.3
    adj = jnp.logical_or(adj, jnp.eye(N, dtype=bool)).astype(jnp.int8)

    params = init_params(k_p, F_IN, D_MODEL, NHEAD, DIM_FF, NLAYER, NUM_CLASSES)

    fwd = jax.jit(functools.partial(gat_transformer_forward,
                                    nhead=NHEAD, d_model=D_MODEL,
                                    num_classes=NUM_CLASSES))
    out = jax.block_until_ready(fwd(x, adj, params))
    assert out.shape == (N, NUM_CLASSES)
    print("KERNEL_OK")
</pallas_src>

<mosaic_0001>
module attributes {stable_mosaic.version = 11 : i64} {
  func.func @_fused_gat_transformer_kernel(%arg0: memref<16x8xf32, #tpu.memory_space<vmem>>, %arg1: memref<16x16xi8, #tpu.memory_space<vmem>>, %arg2: memref<8x128xbf16, #tpu.memory_space<vmem>>, %arg3: memref<1x128xf32, #tpu.memory_space<vmem>>, %arg4: memref<1x128xf32, #tpu.memory_space<vmem>>, %arg5: memref<1x128xf32, #tpu.memory_space<vmem>>, %arg6: memref<1x128xf32, #tpu.memory_space<vmem>>, %arg7: memref<1x128xf32, #tpu.memory_space<vmem>>, %arg8: memref<1x128xf32, #tpu.memory_space<vmem>>, %arg9: memref<2x128x768xbf16, #tpu.memory_space<vmem>>, %arg10: memref<2x1x768xf32, #tpu.memory_space<vmem>>, %arg11: memref<2x256x128xbf16, #tpu.memory_space<vmem>>, %arg12: memref<2x1x128xf32, #tpu.memory_space<vmem>>, %arg13: memref<2x1x128xf32, #tpu.memory_space<vmem>>, %arg14: memref<2x1x128xf32, #tpu.memory_space<vmem>>, %arg15: memref<2x128x128xbf16, #tpu.memory_space<vmem>>, %arg16: memref<2x1x128xf32, #tpu.memory_space<vmem>>, %arg17: memref<2x128x128xbf16, #tpu.memory_space<vmem>>, %arg18: memref<2x1x128xf32, #tpu.memory_space<vmem>>, %arg19: memref<2x1x128xf32, #tpu.memory_space<vmem>>, %arg20: memref<2x1x128xf32, #tpu.memory_space<vmem>>, %arg21: memref<1x128xf32, #tpu.memory_space<vmem>>, %arg22: memref<1x128xf32, #tpu.memory_space<vmem>>, %arg23: memref<128x128xbf16, #tpu.memory_space<vmem>>, %arg24: memref<1x128xf32, #tpu.memory_space<vmem>>, %arg25: memref<16x128xf32, #tpu.memory_space<vmem>>) attributes {dimension_semantics = [], scalar_prefetch = 0 : i64, scratch_operands = 0 : i64, tpu.core_type = #tpu.core_type<tc>} {
    %c0 = arith.constant 0 : index
    %c0_0 = arith.constant 0 : index
    %0 = vector.load %arg8[%c0, %c0_0] : memref<1x128xf32, #tpu.memory_space<vmem>>, vector<1x128xf32>
    %c0_1 = arith.constant 0 : index
    %c0_2 = arith.constant 0 : index
    %1 = vector.load %arg0[%c0_1, %c0_2] : memref<16x8xf32, #tpu.memory_space<vmem>>, vector<16x8xf32>
    %2 = arith.truncf %1 : vector<16x8xf32> to vector<16x8xbf16>
    %c0_3 = arith.constant 0 : index
    %c0_4 = arith.constant 0 : index
    %3 = vector.load %arg2[%c0_3, %c0_4] : memref<8x128xbf16, #tpu.memory_space<vmem>>, vector<8x128xbf16>
    %cst = arith.constant dense<0.000000e+00> : vector<16x128xf32>
    %4 = tpu.matmul %2, %3, %cst {dimension_numbers = #tpu.dot_dimension_numbers<[1], [0], [0], [1], [0, 0, 1, 1], [], []>} : vector<16x8xbf16>, vector<8x128xbf16>, vector<16x128xf32> -> vector<16x128xf32>
    %c0_5 = arith.constant 0 : index
    %c0_6 = arith.constant 0 : index
    %5 = vector.load %arg4[%c0_5, %c0_6] : memref<1x128xf32, #tpu.memory_space<vmem>>, vector<1x128xf32>
    %6 = vector.broadcast %5 : vector<1x128xf32> to vector<16x128xf32>
    %7 = arith.mulf %4, %6 : vector<16x128xf32>
    %cst_7 = arith.constant dense<0.000000e+00> : vector<16xf32>
    %8 = vector.multi_reduction <add>, %7, %cst_7 [1] : vector<16x128xf32> to vector<16xf32>
    %9 = vector.shape_cast %8 : vector<16xf32> to vector<16x1xf32>
    %c0_8 = arith.constant 0 : index
    %c0_9 = arith.constant 0 : index
    %10 = vector.load %arg3[%c0_8, %c0_9] : memref<1x128xf32, #tpu.memory_space<vmem>>, vector<1x128xf32>
    %11 = vector.shape_cast %10 : vector<1x128xf32> to vector<1x128xf32>
    %12 = vector.broadcast %11 : vector<1x128xf32> to vector<16x128xf32>
    %13 = arith.truncf %12 : vector<16x128xf32> to vector<16x128xbf16>
    %14 = arith.truncf %4 : vector<16x128xf32> to vector<16x128xbf16>
    %cst_10 = arith.constant dense<0.000000e+00> : vector<16x16xf32>
    %15 = tpu.matmul %13, %14, %cst_10 {dimension_numbers = #tpu.dot_dimension_numbers<[1], [1], [0], [0], [0, 0, 1, 0], [], []>} : vector<16x128xbf16>, vector<16x128xbf16>, vector<16x16xf32> -> vector<16x16xf32>
    %16 = vector.broadcast %9 : vector<16x1xf32> to vector<16x16xf32>
    %17 = arith.addf %16, %15 : vector<16x16xf32>
    %cst_11 = arith.constant 0.000000e+00 : f32
    %18 = vector.broadcast %cst_11 : f32 to vector<16x16xf32>
    %19 = arith.cmpf ogt, %17, %18 : vector<16x16xf32>
    %cst_12 = arith.constant 2.000000e-01 : f32
    %20 = vector.broadcast %cst_12 : f32 to vector<16x16xf32>
    %21 = arith.mulf %20, %17 : vector<16x16xf32>
    %22 = arith.select %19, %17, %21 : vector<16x16xi1>, vector<16x16xf32>
    %c0_13 = arith.constant 0 : index
    %c0_14 = arith.constant 0 : index
    %23 = vector.load %arg1[%c0_13, %c0_14] : memref<16x16xi8, #tpu.memory_space<vmem>>, vector<16x16xi8>
    %24 = arith.sitofp %23 : vector<16x16xi8> to vector<16x16xf32>
    %cst_15 = arith.constant 0.000000e+00 : f32
    %25 = vector.broadcast %cst_15 : f32 to vector<16x16xf32>
    %26 = arith.cmpf ogt, %24, %25 : vector<16x16xf32>
    %cst_16 = arith.constant -1.000000e+30 : f32
    %27 = vector.broadcast %cst_16 : f32 to vector<16x16xf32>
    %28 = arith.select %26, %22, %27 : vector<16x16xi1>, vector<16x16xf32>
    %cst_17 = arith.constant dense<0xFF800000> : vector<16xf32>
    %29 = vector.multi_reduction <maximumf>, %28, %cst_17 [1] : vector<16x16xf32> to vector<16xf32>
    %30 = vector.shape_cast %29 : vector<16xf32> to vector<16x1xf32>
    %31 = vector.broadcast %30 : vector<16x1xf32> to vector<16x16xf32>
    %32 = arith.subf %28, %31 : vector<16x16xf32>
    %33 = math.exp %32 : vector<16x16xf32>
    %cst_18 = arith.constant dense<0.000000e+00> : vector<16xf32>
    %34 = vector.multi_reduction <add>, %33, %cst_18 [1] : vector<16x16xf32> to vector<16xf32>
    %35 = vector.shape_cast %34 : vector<16xf32> to vector<16x1xf32>
    %36 = tpu.reciprocal %35 {approx = true} : vector<16x1xf32> -> vector<16x1xf32>
    %37 = arith.truncf %33 : vector<16x16xf32> to vector<16x16xbf16>
    %38 = arith.truncf %4 : vector<16x128xf32> to vector<16x128xbf16>
    %cst_19 = arith.constant dense<0.000000e+00> : vector<16x128xf32>
    %39 = tpu.matmul %37, %38, %cst_19 {dimension_numbers = #tpu.dot_dimension_numbers<[1], [0], [0], [1], [0, 0, 1, 1], [], []>} : vector<16x16xbf16>, vector<16x128xbf16>, vector<16x128xf32> -> vector<16x128xf32>
    %40 = vector.broadcast %36 : vector<16x1xf32> to vector<16x128xf32>
    %41 = arith.mulf %39, %40 : vector<16x128xf32>
    %c0_20 = arith.constant 0 : index
    %c0_21 = arith.constant 0 : index
    %42 = vector.load %arg5[%c0_20, %c0_21] : memref<1x128xf32, #tpu.memory_space<vmem>>, vector<1x128xf32>
    %43 = vector.broadcast %42 : vector<1x128xf32> to vector<16x128xf32>
    %44 = arith.addf %41, %43 : vector<16x128xf32>
    %cst_22 = arith.constant 0.000000e+00 : f32
    %45 = vector.broadcast %cst_22 : f32 to vector<16x128xf32>
    %46 = arith.cmpf ogt, %44, %45 : vector<16x128xf32>
    %cst_23 = arith.constant 0.000000e+00 : f32
    %47 = vector.broadcast %cst_23 : f32 to vector<16x128xf32>
    %48 = arith.minimumf %44, %47 : vector<16x128xf32>
    %49 = math.exp %48 : vector<16x128xf32>
    %cst_24 = arith.constant 1.000000e+00 : f32
    %50 = vector.broadcast %cst_24 : f32 to vector<16x128xf32>
    %51 = arith.subf %49, %50 : vector<16x128xf32>
    %52 = arith.select %46, %44, %51 : vector<16x128xi1>, vector<16x128xf32>
    %c0_25 = arith.constant 0 : index
    %c0_26 = arith.constant 0 : index
    %53 = vector.load %arg6[%c0_25, %c0_26] : memref<1x128xf32, #tpu.memory_space<vmem>>, vector<1x128xf32>
    %c0_27 = arith.constant 0 : index
    %c0_28 = arith.constant 0 : index
    %54 = vector.load %arg7[%c0_27, %c0_28] : memref<1x128xf32, #tpu.memory_space<vmem>>, vector<1x128xf32>
    %cst_29 = arith.constant dense<0.000000e+00> : vector<16xf32>
    %55 = vector.multi_reduction <add>, %52, %cst_29 [1] : vector<16x128xf32> to vector<16xf32>
    %56 = vector.shape_cast %55 : vector<16xf32> to vector<16x1xf32>
    %cst_30 = arith.constant 3.125000e-02 : f32
    %57 = vector.broadcast %cst_30 : f32 to vector<16x1xf32>
    %58 = arith.mulf %56, %57 : vector<16x1xf32>
    %59 = vector.broadcast %58 : vector<16x1xf32> to vector<16x128xf32>
    %60 = arith.subf %52, %59 : vector<16x128xf32>
    %61 = vector.broadcast %0 : vector<1x128xf32> to vector<16x128xf32>
    %62 = arith.mulf %60, %61 : vector<16x128xf32>
    %63 = arith.mulf %62, %62 : vector<16x128xf32>
    %cst_31 = arith.constant dense<0.000000e+00> : vector<16xf32>
    %64 = vector.multi_reduction <add>, %63, %cst_31 [1] : vector<16x128xf32> to vector<16xf32>
    %65 = vector.shape_cast %64 : vector<16xf32> to vector<16x1xf32>
    %cst_32 = arith.constant 3.125000e-02 : f32
    %66 = vector.broadcast %cst_32 : f32 to vector<16x1xf32>
    %67 = arith.mulf %65, %66 : vector<16x1xf32>
    %cst_33 = arith.constant 9.99999974E-6 : f32
    %68 = vector.broadcast %cst_33 : f32 to vector<16x1xf32>
    %69 = arith.addf %67, %68 : vector<16x1xf32>
    %70 = math.rsqrt %69 : vector<16x1xf32>
    %71 = vector.broadcast %70 : vector<16x1xf32> to vector<16x128xf32>
    %72 = arith.mulf %60, %71 : vector<16x128xf32>
    %73 = vector.broadcast %53 : vector<1x128xf32> to vector<16x128xf32>
    %74 = arith.mulf %72, %73 : vector<16x128xf32>
    %75 = vector.broadcast %54 : vector<1x128xf32> to vector<16x128xf32>
    %76 = arith.addf %74, %75 : vector<16x128xf32>
    %77 = arith.truncf %76 : vector<16x128xf32> to vector<16x128xbf16>
    %c0_34 = arith.constant 0 : index
    %c0_35 = arith.constant 0 : index
    %c0_36 = arith.constant 0 : index
    %78 = vector.load %arg9[%c0_34, %c0_35, %c0_36] : memref<2x128x768xbf16, #tpu.memory_space<vmem>>, vector<1x128x768xbf16>
    %79 = vector.shape_cast %78 : vector<1x128x768xbf16> to vector<128x768xbf16>
    %cst_37 = arith.constant dense<0.000000e+00> : vector<16x768xf32>
    %80 = tpu.matmul %77, %79, %cst_37 {dimension_numbers = #tpu.dot_dimension_numbers<[1], [0], [0], [1], [0, 0, 1, 1], [], []>} : vector<16x128xbf16>, vector<128x768xbf16>, vector<16x768xf32> -> vector<16x768xf32>
    %c0_38 = arith.constant 0 : index
    %c0_39 = arith.constant 0 : index
    %c0_40 = arith.constant 0 : index
    %81 = vector.load %arg10[%c0_38, %c0_39, %c0_40] : memref<2x1x768xf32, #tpu.memory_space<vmem>>, vector<1x1x768xf32>
    %82 = vector.shape_cast %81 : vector<1x1x768xf32> to vector<1x768xf32>
    %83 = vector.broadcast %82 : vector<1x768xf32> to vector<16x768xf32>
    %84 = arith.addf %80, %83 : vector<16x768xf32>
    %c0_41 = arith.constant 0 : index
    %c0_42 = arith.constant 0 : index
    %c0_43 = arith.constant 0 : index
    %85 = vector.load %arg11[%c0_41, %c0_42, %c0_43] : memref<2x256x128xbf16, #tpu.memory_space<vmem>>, vector<1x256x128xbf16>
    %86 = vector.shape_cast %85 : vector<1x256x128xbf16> to vector<256x128xbf16>
    %c0_44 = arith.constant 0 : index
    %c0_45 = arith.constant 0 : index
    %c0_46 = arith.constant 0 : index
    %87 = vector.load %arg12[%c0_44, %c0_45, %c0_46] : memref<2x1x128xf32, #tpu.memory_space<vmem>>, vector<1x1x128xf32>
    %88 = vector.shape_cast %87 : vector<1x1x128xf32> to vector<1x128xf32>
    %89 = vector.extract_strided_slice %84 {offsets = [0, 0], sizes = [16, 128], strides = [1, 1]} : vector<16x768xf32> to vector<16x128xf32>
    %cst_47 = arith.constant 2.500000e-01 : f32
    %90 = vector.broadcast %cst_47 : f32 to vector<16x128xf32>
    %91 = arith.mulf %89, %90 : vector<16x128xf32>
    %92 = arith.truncf %91 : vector<16x128xf32> to vector<16x128xbf16>
    %93 = vector.extract_strided_slice %84 {offsets = [0, 256], sizes = [16, 128], strides = [1, 1]} : vector<16x768xf32> to vector<16x128xf32>
    %94 = arith.truncf %93 : vector<16x128xf32> to vector<16x128xbf16>
    %95 = vector.extract_strided_slice %84 {offsets = [0, 512], sizes = [16, 128], strides = [1, 1]} : vector<16x768xf32> to vector<16x128xf32>
    %96 = arith.truncf %95 : vector<16x128xf32> to vector<16x128xbf16>
    %cst_48 = arith.constant dense<0.000000e+00> : vector<16x16xf32>
    %97 = tpu.matmul %92, %94, %cst_48 {dimension_numbers = #tpu.dot_dimension_numbers<[1], [1], [0], [0], [0, 0, 1, 0], [], []>} : vector<16x128xbf16>, vector<16x128xbf16>, vector<16x16xf32> -> vector<16x16xf32>
    %cst_49 = arith.constant dense<0xFF800000> : vector<16xf32>
    %98 = vector.multi_reduction <maximumf>, %97, %cst_49 [1] : vector<16x16xf32> to vector<16xf32>
    %99 = vector.shape_cast %98 : vector<16xf32> to vector<16x1xf32>
    %100 = vector.broadcast %99 : vector<16x1xf32> to vector<16x16xf32>
    %101 = arith.subf %97, %100 : vector<16x16xf32>
    %102 = math.exp %101 : vector<16x16xf32>
    %cst_50 = arith.constant dense<0.000000e+00> : vector<16xf32>
    %103 = vector.multi_reduction <add>, %102, %cst_50 [1] : vector<16x16xf32> to vector<16xf32>
    %104 = vector.shape_cast %103 : vector<16xf32> to vector<16x1xf32>
    %105 = tpu.reciprocal %104 {approx = true} : vector<16x1xf32> -> vector<16x1xf32>
    %106 = arith.truncf %102 : vector<16x16xf32> to vector<16x16xbf16>
    %cst_51 = arith.constant dense<0.000000e+00> : vector<16x128xf32>
    %107 = tpu.matmul %106, %96, %cst_51 {dimension_numbers = #tpu.dot_dimension_numbers<[1], [0], [0], [1], [0, 0, 1, 1], [], []>} : vector<16x16xbf16>, vector<16x128xbf16>, vector<16x128xf32> -> vector<16x128xf32>
    %108 = vector.broadcast %105 : vector<16x1xf32> to vector<16x128xf32>
    %109 = arith.mulf %107, %108 : vector<16x128xf32>
    %110 = arith.truncf %109 : vector<16x128xf32> to vector<16x128xbf16>
    %111 = vector.extract_strided_slice %86 {offsets = [0, 0], sizes = [128, 128], strides = [1, 1]} : vector<256x128xbf16> to vector<128x128xbf16>
    %cst_52 = arith.constant dense<0.000000e+00> : vector<16x128xf32>
    %112 = tpu.matmul %110, %111, %cst_52 {dimension_numbers = #tpu.dot_dimension_numbers<[1], [0], [0], [1], [0, 0, 1, 1], [], []>} : vector<16x128xbf16>, vector<128x128xbf16>, vector<16x128xf32> -> vector<16x128xf32>
    %113 = vector.broadcast %88 : vector<1x128xf32> to vector<16x128xf32>
    %114 = arith.addf %113, %112 : vector<16x128xf32>
    %115 = vector.extract_strided_slice %84 {offsets = [0, 128], sizes = [16, 128], strides = [1, 1]} : vector<16x768xf32> to vector<16x128xf32>
    %cst_53 = arith.constant 2.500000e-01 : f32
    %116 = vector.broadcast %cst_53 : f32 to vector<16x128xf32>
    %117 = arith.mulf %115, %116 : vector<16x128xf32>
    %118 = arith.truncf %117 : vector<16x128xf32> to vector<16x128xbf16>
    %119 = vector.extract_strided_slice %84 {offsets = [0, 384], sizes = [16, 128], strides = [1, 1]} : vector<16x768xf32> to vector<16x128xf32>
    %120 = arith.truncf %119 : vector<16x128xf32> to vector<16x128xbf16>
    %121 = vector.extract_strided_slice %84 {offsets = [0, 640], sizes = [16, 128], strides = [1, 1]} : vector<16x768xf32> to vector<16x128xf32>
    %122 = arith.truncf %121 : vector<16x128xf32> to vector<16x128xbf16>
    %cst_54 = arith.constant dense<0.000000e+00> : vector<16x16xf32>
    %123 = tpu.matmul %118, %120, %cst_54 {dimension_numbers = #tpu.dot_dimension_numbers<[1], [1], [0], [0], [0, 0, 1, 0], [], []>} : vector<16x128xbf16>, vector<16x128xbf16>, vector<16x16xf32> -> vector<16x16xf32>
    %cst_55 = arith.constant dense<0xFF800000> : vector<16xf32>
    %124 = vector.multi_reduction <maximumf>, %123, %cst_55 [1] : vector<16x16xf32> to vector<16xf32>
    %125 = vector.shape_cast %124 : vector<16xf32> to vector<16x1xf32>
    %126 = vector.broadcast %125 : vector<16x1xf32> to vector<16x16xf32>
    %127 = arith.subf %123, %126 : vector<16x16xf32>
    %128 = math.exp %127 : vector<16x16xf32>
    %cst_56 = arith.constant dense<0.000000e+00> : vector<16xf32>
    %129 = vector.multi_reduction <add>, %128, %cst_56 [1] : vector<16x16xf32> to vector<16xf32>
    %130 = vector.shape_cast %129 : vector<16xf32> to vector<16x1xf32>
    %131 = tpu.reciprocal %130 {approx = true} : vector<16x1xf32> -> vector<16x1xf32>
    %132 = arith.truncf %128 : vector<16x16xf32> to vector<16x16xbf16>
    %cst_57 = arith.constant dense<0.000000e+00> : vector<16x128xf32>
    %133 = tpu.matmul %132, %122, %cst_57 {dimension_numbers = #tpu.dot_dimension_numbers<[1], [0], [0], [1], [0, 0, 1, 1], [], []>} : vector<16x16xbf16>, vector<16x128xbf16>, vector<16x128xf32> -> vector<16x128xf32>
    %134 = vector.broadcast %131 : vector<16x1xf32> to vector<16x128xf32>
    %135 = arith.mulf %133, %134 : vector<16x128xf32>
    %136 = arith.truncf %135 : vector<16x128xf32> to vector<16x128xbf16>
    %137 = vector.extract_strided_slice %86 {offsets = [128, 0], sizes = [128, 128], strides = [1, 1]} : vector<256x128xbf16> to vector<128x128xbf16>
    %cst_58 = arith.constant dense<0.000000e+00> : vector<16x128xf32>
    %138 = tpu.matmul %136, %137, %cst_58 {dimension_numbers = #tpu.dot_dimension_numbers<[1], [0], [0], [1], [0, 0, 1, 1], [], []>} : vector<16x128xbf16>, vector<128x128xbf16>, vector<16x128xf32> -> vector<16x128xf32>
    %139 = arith.addf %114, %138 : vector<16x128xf32>
    %140 = arith.addf %76, %139 : vector<16x128xf32>
    %c0_59 = arith.constant 0 : index
    %c0_60 = arith.constant 0 : index
    %c0_61 = arith.constant 0 : index
    %141 = vector.load %arg13[%c0_59, %c0_60, %c0_61] : memref<2x1x128xf32, #tpu.memory_space<vmem>>, vector<1x1x128xf32>
    %142 = vector.shape_cast %141 : vector<1x1x128xf32> to vector<1x128xf32>
    %c0_62 = arith.constant 0 : index
    %c0_63 = arith.constant 0 : index
    %c0_64 = arith.constant 0 : index
    %143 = vector.load %arg14[%c0_62, %c0_63, %c0_64] : memref<2x1x128xf32, #tpu.memory_space<vmem>>, vector<1x1x128xf32>
    %144 = vector.shape_cast %143 : vector<1x1x128xf32> to vector<1x128xf32>
    %cst_65 = arith.constant dense<0.000000e+00> : vector<16xf32>
    %145 = vector.multi_reduction <add>, %140, %cst_65 [1] : vector<16x128xf32> to vector<16xf32>
    %146 = vector.shape_cast %145 : vector<16xf32> to vector<16x1xf32>
    %cst_66 = arith.constant 3.125000e-02 : f32
    %147 = vector.broadcast %cst_66 : f32 to vector<16x1xf32>
    %148 = arith.mulf %146, %147 : vector<16x1xf32>
    %149 = vector.broadcast %148 : vector<16x1xf32> to vector<16x128xf32>
    %150 = arith.subf %140, %149 : vector<16x128xf32>
    %151 = vector.broadcast %0 : vector<1x128xf32> to vector<16x128xf32>
    %152 = arith.mulf %150, %151 : vector<16x128xf32>
    %153 = arith.mulf %152, %152 : vector<16x128xf32>
    %cst_67 = arith.constant dense<0.000000e+00> : vector<16xf32>
    %154 = vector.multi_reduction <add>, %153, %cst_67 [1] : vector<16x128xf32> to vector<16xf32>
    %155 = vector.shape_cast %154 : vector<16xf32> to vector<16x1xf32>
    %cst_68 = arith.constant 3.125000e-02 : f32
    %156 = vector.broadcast %cst_68 : f32 to vector<16x1xf32>
    %157 = arith.mulf %155, %156 : vector<16x1xf32>
    %cst_69 = arith.constant 9.99999974E-6 : f32
    %158 = vector.broadcast %cst_69 : f32 to vector<16x1xf32>
    %159 = arith.addf %157, %158 : vector<16x1xf32>
    %160 = math.rsqrt %159 : vector<16x1xf32>
    %161 = vector.broadcast %160 : vector<16x1xf32> to vector<16x128xf32>
    %162 = arith.mulf %150, %161 : vector<16x128xf32>
    %163 = vector.broadcast %142 : vector<1x128xf32> to vector<16x128xf32>
    %164 = arith.mulf %162, %163 : vector<16x128xf32>
    %165 = vector.broadcast %144 : vector<1x128xf32> to vector<16x128xf32>
    %166 = arith.addf %164, %165 : vector<16x128xf32>
    %167 = arith.truncf %166 : vector<16x128xf32> to vector<16x128xbf16>
    %c0_70 = arith.constant 0 : index
    %c0_71 = arith.constant 0 : index
    %c0_72 = arith.constant 0 : index
    %168 = vector.load %arg15[%c0_70, %c0_71, %c0_72] : memref<2x128x128xbf16, #tpu.memory_space<vmem>>, vector<1x128x128xbf16>
    %169 = vector.shape_cast %168 : vector<1x128x128xbf16> to vector<128x128xbf16>
    %cst_73 = arith.constant dense<0.000000e+00> : vector<16x128xf32>
    %170 = tpu.matmul %167, %169, %cst_73 {dimension_numbers = #tpu.dot_dimension_numbers<[1], [0], [0], [1], [0, 0, 1, 1], [], []>} : vector<16x128xbf16>, vector<128x128xbf16>, vector<16x128xf32> -> vector<16x128xf32>
    %c0_74 = arith.constant 0 : index
    %c0_75 = arith.constant 0 : index
    %c0_76 = arith.constant 0 : index
    %171 = vector.load %arg16[%c0_74, %c0_75, %c0_76] : memref<2x1x128xf32, #tpu.memory_space<vmem>>, vector<1x1x128xf32>
    %172 = vector.shape_cast %171 : vector<1x1x128xf32> to vector<1x128xf32>
    %173 = vector.broadcast %172 : vector<1x128xf32> to vector<16x128xf32>
    %174 = arith.addf %170, %173 : vector<16x128xf32>
    %cst_77 = arith.constant 0.000000e+00 : f32
    %175 = vector.broadcast %cst_77 : f32 to vector<16x128xf32>
    %176 = arith.maximumf %174, %175 : vector<16x128xf32>
    %177 = arith.truncf %176 : vector<16x128xf32> to vector<16x128xbf16>
    %c0_78 = arith.constant 0 : index
    %c0_79 = arith.constant 0 : index
    %c0_80 = arith.constant 0 : index
    %178 = vector.load %arg17[%c0_78, %c0_79, %c0_80] : memref<2x128x128xbf16, #tpu.memory_space<vmem>>, vector<1x128x128xbf16>
    %179 = vector.shape_cast %178 : vector<1x128x128xbf16> to vector<128x128xbf16>
    %cst_81 = arith.constant dense<0.000000e+00> : vector<16x128xf32>
    %180 = tpu.matmul %177, %179, %cst_81 {dimension_numbers = #tpu.dot_dimension_numbers<[1], [0], [0], [1], [0, 0, 1, 1], [], []>} : vector<16x128xbf16>, vector<128x128xbf16>, vector<16x128xf32> -> vector<16x128xf32>
    %c0_82 = arith.constant 0 : index
    %c0_83 = arith.constant 0 : index
    %c0_84 = arith.constant 0 : index
    %181 = vector.load %arg18[%c0_82, %c0_83, %c0_84] : memref<2x1x128xf32, #tpu.memory_space<vmem>>, vector<1x1x128xf32>
    %182 = vector.shape_cast %181 : vector<1x1x128xf32> to vector<1x128xf32>
    %183 = vector.broadcast %182 : vector<1x128xf32> to vector<16x128xf32>
    %184 = arith.addf %180, %183 : vector<16x128xf32>
    %185 = arith.addf %166, %184 : vector<16x128xf32>
    %c0_85 = arith.constant 0 : index
    %c0_86 = arith.constant 0 : index
    %c0_87 = arith.constant 0 : index
    %186 = vector.load %arg19[%c0_85, %c0_86, %c0_87] : memref<2x1x128xf32, #tpu.memory_space<vmem>>, vector<1x1x128xf32>
    %187 = vector.shape_cast %186 : vector<1x1x128xf32> to vector<1x128xf32>
    %c0_88 = arith.constant 0 : index
    %c0_89 = arith.constant 0 : index
    %c0_90 = arith.constant 0 : index
    %188 = vector.load %arg20[%c0_88, %c0_89, %c0_90] : memref<2x1x128xf32, #tpu.memory_space<vmem>>, vector<1x1x128xf32>
    %189 = vector.shape_cast %188 : vector<1x1x128xf32> to vector<1x128xf32>
    %cst_91 = arith.constant dense<0.000000e+00> : vector<16xf32>
    %190 = vector.multi_reduction <add>, %185, %cst_91 [1] : vector<16x128xf32> to vector<16xf32>
    %191 = vector.shape_cast %190 : vector<16xf32> to vector<16x1xf32>
    %cst_92 = arith.constant 3.125000e-02 : f32
    %192 = vector.broadcast %cst_92 : f32 to vector<16x1xf32>
    %193 = arith.mulf %191, %192 : vector<16x1xf32>
    %194 = vector.broadcast %193 : vector<16x1xf32> to vector<16x128xf32>
    %195 = arith.subf %185, %194 : vector<16x128xf32>
    %196 = vector.broadcast %0 : vector<1x128xf32> to vector<16x128xf32>
    %197 = arith.mulf %195, %196 : vector<16x128xf32>
    %198 = arith.mulf %197, %197 : vector<16x128xf32>
    %cst_93 = arith.constant dense<0.000000e+00> : vector<16xf32>
    %199 = vector.multi_reduction <add>, %198, %cst_93 [1] : vector<16x128xf32> to vector<16xf32>
    %200 = vector.shape_cast %199 : vector<16xf32> to vector<16x1xf32>
    %cst_94 = arith.constant 3.125000e-02 : f32
    %201 = vector.broadcast %cst_94 : f32 to vector<16x1xf32>
    %202 = arith.mulf %200, %201 : vector<16x1xf32>
    %cst_95 = arith.constant 9.99999974E-6 : f32
    %203 = vector.broadcast %cst_95 : f32 to vector<16x1xf32>
    %204 = arith.addf %202, %203 : vector<16x1xf32>
    %205 = math.rsqrt %204 : vector<16x1xf32>
    %206 = vector.broadcast %205 : vector<16x1xf32> to vector<16x128xf32>
    %207 = arith.mulf %195, %206 : vector<16x128xf32>
    %208 = vector.broadcast %187 : vector<1x128xf32> to vector<16x128xf32>
    %209 = arith.mulf %207, %208 : vector<16x128xf32>
    %210 = vector.broadcast %189 : vector<1x128xf32> to vector<16x128xf32>
    %211 = arith.addf %209, %210 : vector<16x128xf32>
    %212 = arith.truncf %211 : vector<16x128xf32> to vector<16x128xbf16>
    %c1 = arith.constant 1 : index
    %c0_96 = arith.constant 0 : index
    %c0_97 = arith.constant 0 : index
    %213 = vector.load %arg9[%c1, %c0_96, %c0_97] : memref<2x128x768xbf16, #tpu.memory_space<vmem>>, vector<1x128x768xbf16>
    %214 = vector.shape_cast %213 : vector<1x128x768xbf16> to vector<128x768xbf16>
    %cst_98 = arith.constant dense<0.000000e+00> : vector<16x768xf32>
    %215 = tpu.matmul %212, %214, %cst_98 {dimension_numbers = #tpu.dot_dimension_numbers<[1], [0], [0], [1], [0, 0, 1, 1], [], []>} : vector<16x128xbf16>, vector<128x768xbf16>, vector<16x768xf32> -> vector<16x768xf32>
    %c1_99 = arith.constant 1 : index
    %c0_100 = arith.constant 0 : index
    %c0_101 = arith.constant 0 : index
    %216 = vector.load %arg10[%c1_99, %c0_100, %c0_101] : memref<2x1x768xf32, #tpu.memory_space<vmem>>, vector<1x1x768xf32>
    %217 = vector.shape_cast %216 : vector<1x1x768xf32> to vector<1x768xf32>
    %218 = vector.broadcast %217 : vector<1x768xf32> to vector<16x768xf32>
    %219 = arith.addf %215, %218 : vector<16x768xf32>
    %c1_102 = arith.constant 1 : index
    %c0_103 = arith.constant 0 : index
    %c0_104 = arith.constant 0 : index
    %220 = vector.load %arg11[%c1_102, %c0_103, %c0_104] : memref<2x256x128xbf16, #tpu.memory_space<vmem>>, vector<1x256x128xbf16>
    %221 = vector.shape_cast %220 : vector<1x256x128xbf16> to vector<256x128xbf16>
    %c1_105 = arith.constant 1 : index
    %c0_106 = arith.constant 0 : index
    %c0_107 = arith.constant 0 : index
    %222 = vector.load %arg12[%c1_105, %c0_106, %c0_107] : memref<2x1x128xf32, #tpu.memory_space<vmem>>, vector<1x1x128xf32>
    %223 = vector.shape_cast %222 : vector<1x1x128xf32> to vector<1x128xf32>
    %224 = vector.extract_strided_slice %219 {offsets = [0, 0], sizes = [16, 128], strides = [1, 1]} : vector<16x768xf32> to vector<16x128xf32>
    %cst_108 = arith.constant 2.500000e-01 : f32
    %225 = vector.broadcast %cst_108 : f32 to vector<16x128xf32>
    %226 = arith.mulf %224, %225 : vector<16x128xf32>
    %227 = arith.truncf %226 : vector<16x128xf32> to vector<16x128xbf16>
    %228 = vector.extract_strided_slice %219 {offsets = [0, 256], sizes = [16, 128], strides = [1, 1]} : vector<16x768xf32> to vector<16x128xf32>
    %229 = arith.truncf %228 : vector<16x128xf32> to vector<16x128xbf16>
    %230 = vector.extract_strided_slice %219 {offsets = [0, 512], sizes = [16, 128], strides = [1, 1]} : vector<16x768xf32> to vector<16x128xf32>
    %231 = arith.truncf %230 : vector<16x128xf32> to vector<16x128xbf16>
    %cst_109 = arith.constant dense<0.000000e+00> : vector<16x16xf32>
    %232 = tpu.matmul %227, %229, %cst_109 {dimension_numbers = #tpu.dot_dimension_numbers<[1], [1], [0], [0], [0, 0, 1, 0], [], []>} : vector<16x128xbf16>, vector<16x128xbf16>, vector<16x16xf32> -> vector<16x16xf32>
    %cst_110 = arith.constant dense<0xFF800000> : vector<16xf32>
    %233 = vector.multi_reduction <maximumf>, %232, %cst_110 [1] : vector<16x16xf32> to vector<16xf32>
    %234 = vector.shape_cast %233 : vector<16xf32> to vector<16x1xf32>
    %235 = vector.broadcast %234 : vector<16x1xf32> to vector<16x16xf32>
    %236 = arith.subf %232, %235 : vector<16x16xf32>
    %237 = math.exp %236 : vector<16x16xf32>
    %cst_111 = arith.constant dense<0.000000e+00> : vector<16xf32>
    %238 = vector.multi_reduction <add>, %237, %cst_111 [1] : vector<16x16xf32> to vector<16xf32>
    %239 = vector.shape_cast %238 : vector<16xf32> to vector<16x1xf32>
    %240 = tpu.reciprocal %239 {approx = true} : vector<16x1xf32> -> vector<16x1xf32>
    %241 = arith.truncf %237 : vector<16x16xf32> to vector<16x16xbf16>
    %cst_112 = arith.constant dense<0.000000e+00> : vector<16x128xf32>
    %242 = tpu.matmul %241, %231, %cst_112 {dimension_numbers = #tpu.dot_dimension_numbers<[1], [0], [0], [1], [0, 0, 1, 1], [], []>} : vector<16x16xbf16>, vector<16x128xbf16>, vector<16x128xf32> -> vector<16x128xf32>
    %243 = vector.broadcast %240 : vector<16x1xf32> to vector<16x128xf32>
    %244 = arith.mulf %242, %243 : vector<16x128xf32>
    %245 = arith.truncf %244 : vector<16x128xf32> to vector<16x128xbf16>
    %246 = vector.extract_strided_slice %221 {offsets = [0, 0], sizes = [128, 128], strides = [1, 1]} : vector<256x128xbf16> to vector<128x128xbf16>
    %cst_113 = arith.constant dense<0.000000e+00> : vector<16x128xf32>
    %247 = tpu.matmul %245, %246, %cst_113 {dimension_numbers = #tpu.dot_dimension_numbers<[1], [0], [0], [1], [0, 0, 1, 1], [], []>} : vector<16x128xbf16>, vector<128x128xbf16>, vector<16x128xf32> -> vector<16x128xf32>
    %248 = vector.broadcast %223 : vector<1x128xf32> to vector<16x128xf32>
    %249 = arith.addf %248, %247 : vector<16x128xf32>
    %250 = vector.extract_strided_slice %219 {offsets = [0, 128], sizes = [16, 128], strides = [1, 1]} : vector<16x768xf32> to vector<16x128xf32>
    %cst_114 = arith.constant 2.500000e-01 : f32
    %251 = vector.broadcast %cst_114 : f32 to vector<16x128xf32>
    %252 = arith.mulf %250, %251 : vector<16x128xf32>
    %253 = arith.truncf %252 : vector<16x128xf32> to vector<16x128xbf16>
    %254 = vector.extract_strided_slice %219 {offsets = [0, 384], sizes = [16, 128], strides = [1, 1]} : vector<16x768xf32> to vector<16x128xf32>
    %255 = arith.truncf %254 : vector<16x128xf32> to vector<16x128xbf16>
    %256 = vector.extract_strided_slice %219 {offsets = [0, 640], sizes = [16, 128], strides = [1, 1]} : vector<16x768xf32> to vector<16x128xf32>
    %257 = arith.truncf %256 : vector<16x128xf32> to vector<16x128xbf16>
    %cst_115 = arith.constant dense<0.000000e+00> : vector<16x16xf32>
    %258 = tpu.matmul %253, %255, %cst_115 {dimension_numbers = #tpu.dot_dimension_numbers<[1], [1], [0], [0], [0, 0, 1, 0], [], []>} : vector<16x128xbf16>, vector<16x128xbf16>, vector<16x16xf32> -> vector<16x16xf32>
    %cst_116 = arith.constant dense<0xFF800000> : vector<16xf32>
    %259 = vector.multi_reduction <maximumf>, %258, %cst_116 [1] : vector<16x16xf32> to vector<16xf32>
    %260 = vector.shape_cast %259 : vector<16xf32> to vector<16x1xf32>
    %261 = vector.broadcast %260 : vector<16x1xf32> to vector<16x16xf32>
    %262 = arith.subf %258, %261 : vector<16x16xf32>
    %263 = math.exp %262 : vector<16x16xf32>
    %cst_117 = arith.constant dense<0.000000e+00> : vector<16xf32>
    %264 = vector.multi_reduction <add>, %263, %cst_117 [1] : vector<16x16xf32> to vector<16xf32>
    %265 = vector.shape_cast %264 : vector<16xf32> to vector<16x1xf32>
    %266 = tpu.reciprocal %265 {approx = true} : vector<16x1xf32> -> vector<16x1xf32>
    %267 = arith.truncf %263 : vector<16x16xf32> to vector<16x16xbf16>
    %cst_118 = arith.constant dense<0.000000e+00> : vector<16x128xf32>
    %268 = tpu.matmul %267, %257, %cst_118 {dimension_numbers = #tpu.dot_dimension_numbers<[1], [0], [0], [1], [0, 0, 1, 1], [], []>} : vector<16x16xbf16>, vector<16x128xbf16>, vector<16x128xf32> -> vector<16x128xf32>
    %269 = vector.broadcast %266 : vector<16x1xf32> to vector<16x128xf32>
    %270 = arith.mulf %268, %269 : vector<16x128xf32>
    %271 = arith.truncf %270 : vector<16x128xf32> to vector<16x128xbf16>
    %272 = vector.extract_strided_slice %221 {offsets = [128, 0], sizes = [128, 128], strides = [1, 1]} : vector<256x128xbf16> to vector<128x128xbf16>
    %cst_119 = arith.constant dense<0.000000e+00> : vector<16x128xf32>
    %273 = tpu.matmul %271, %272, %cst_119 {dimension_numbers = #tpu.dot_dimension_numbers<[1], [0], [0], [1], [0, 0, 1, 1], [], []>} : vector<16x128xbf16>, vector<128x128xbf16>, vector<16x128xf32> -> vector<16x128xf32>
    %274 = arith.addf %249, %273 : vector<16x128xf32>
    %275 = arith.addf %211, %274 : vector<16x128xf32>
    %c1_120 = arith.constant 1 : index
    %c0_121 = arith.constant 0 : index
    %c0_122 = arith.constant 0 : index
    %276 = vector.load %arg13[%c1_120, %c0_121, %c0_122] : memref<2x1x128xf32, #tpu.memory_space<vmem>>, vector<1x1x128xf32>
    %277 = vector.shape_cast %276 : vector<1x1x128xf32> to vector<1x128xf32>
    %c1_123 = arith.constant 1 : index
    %c0_124 = arith.constant 0 : index
    %c0_125 = arith.constant 0 : index
    %278 = vector.load %arg14[%c1_123, %c0_124, %c0_125] : memref<2x1x128xf32, #tpu.memory_space<vmem>>, vector<1x1x128xf32>
    %279 = vector.shape_cast %278 : vector<1x1x128xf32> to vector<1x128xf32>
    %cst_126 = arith.constant dense<0.000000e+00> : vector<16xf32>
    %280 = vector.multi_reduction <add>, %275, %cst_126 [1] : vector<16x128xf32> to vector<16xf32>
    %281 = vector.shape_cast %280 : vector<16xf32> to vector<16x1xf32>
    %cst_127 = arith.constant 3.125000e-02 : f32
    %282 = vector.broadcast %cst_127 : f32 to vector<16x1xf32>
    %283 = arith.mulf %281, %282 : vector<16x1xf32>
    %284 = vector.broadcast %283 : vector<16x1xf32> to vector<16x128xf32>
    %285 = arith.subf %275, %284 : vector<16x128xf32>
    %286 = vector.broadcast %0 : vector<1x128xf32> to vector<16x128xf32>
    %287 = arith.mulf %285, %286 : vector<16x128xf32>
    %288 = arith.mulf %287, %287 : vector<16x128xf32>
    %cst_128 = arith.constant dense<0.000000e+00> : vector<16xf32>
    %289 = vector.multi_reduction <add>, %288, %cst_128 [1] : vector<16x128xf32> to vector<16xf32>
    %290 = vector.shape_cast %289 : vector<16xf32> to vector<16x1xf32>
    %cst_129 = arith.constant 3.125000e-02 : f32
    %291 = vector.broadcast %cst_129 : f32 to vector<16x1xf32>
    %292 = arith.mulf %290, %291 : vector<16x1xf32>
    %cst_130 = arith.constant 9.99999974E-6 : f32
    %293 = vector.broadcast %cst_130 : f32 to vector<16x1xf32>
    %294 = arith.addf %292, %293 : vector<16x1xf32>
    %295 = math.rsqrt %294 : vector<16x1xf32>
    %296 = vector.broadcast %295 : vector<16x1xf32> to vector<16x128xf32>
    %297 = arith.mulf %285, %296 : vector<16x128xf32>
    %298 = vector.broadcast %277 : vector<1x128xf32> to vector<16x128xf32>
    %299 = arith.mulf %297, %298 : vector<16x128xf32>
    %300 = vector.broadcast %279 : vector<1x128xf32> to vector<16x128xf32>
    %301 = arith.addf %299, %300 : vector<16x128xf32>
    %302 = arith.truncf %301 : vector<16x128xf32> to vector<16x128xbf16>
    %c1_131 = arith.constant 1 : index
    %c0_132 = arith.constant 0 : index
    %c0_133 = arith.constant 0 : index
    %303 = vector.load %arg15[%c1_131, %c0_132, %c0_133] : memref<2x128x128xbf16, #tpu.memory_space<vmem>>, vector<1x128x128xbf16>
    %304 = vector.shape_cast %303 : vector<1x128x128xbf16> to vector<128x128xbf16>
    %cst_134 = arith.constant dense<0.000000e+00> : vector<16x128xf32>
    %305 = tpu.matmul %302, %304, %cst_134 {dimension_numbers = #tpu.dot_dimension_numbers<[1], [0], [0], [1], [0, 0, 1, 1], [], []>} : vector<16x128xbf16>, vector<128x128xbf16>, vector<16x128xf32> -> vector<16x128xf32>
    %c1_135 = arith.constant 1 : index
    %c0_136 = arith.constant 0 : index
    %c0_137 = arith.constant 0 : index
    %306 = vector.load %arg16[%c1_135, %c0_136, %c0_137] : memref<2x1x128xf32, #tpu.memory_space<vmem>>, vector<1x1x128xf32>
    %307 = vector.shape_cast %306 : vector<1x1x128xf32> to vector<1x128xf32>
    %308 = vector.broadcast %307 : vector<1x128xf32> to vector<16x128xf32>
    %309 = arith.addf %305, %308 : vector<16x128xf32>
    %cst_138 = arith.constant 0.000000e+00 : f32
    %310 = vector.broadcast %cst_138 : f32 to vector<16x128xf32>
    %311 = arith.maximumf %309, %310 : vector<16x128xf32>
    %312 = arith.truncf %311 : vector<16x128xf32> to vector<16x128xbf16>
    %c1_139 = arith.constant 1 : index
    %c0_140 = arith.constant 0 : index
    %c0_141 = arith.constant 0 : index
    %313 = vector.load %arg17[%c1_139, %c0_140, %c0_141] : memref<2x128x128xbf16, #tpu.memory_space<vmem>>, vector<1x128x128xbf16>
    %314 = vector.shape_cast %313 : vector<1x128x128xbf16> to vector<128x128xbf16>
    %cst_142 = arith.constant dense<0.000000e+00> : vector<16x128xf32>
    %315 = tpu.matmul %312, %314, %cst_142 {dimension_numbers = #tpu.dot_dimension_numbers<[1], [0], [0], [1], [0, 0, 1, 1], [], []>} : vector<16x128xbf16>, vector<128x128xbf16>, vector<16x128xf32> -> vector<16x128xf32>
    %c1_143 = arith.constant 1 : index
    %c0_144 = arith.constant 0 : index
    %c0_145 = arith.constant 0 : index
    %316 = vector.load %arg18[%c1_143, %c0_144, %c0_145] : memref<2x1x128xf32, #tpu.memory_space<vmem>>, vector<1x1x128xf32>
    %317 = vector.shape_cast %316 : vector<1x1x128xf32> to vector<1x128xf32>
    %318 = vector.broadcast %317 : vector<1x128xf32> to vector<16x128xf32>
    %319 = arith.addf %315, %318 : vector<16x128xf32>
    %320 = arith.addf %301, %319 : vector<16x128xf32>
    %c1_146 = arith.constant 1 : index
    %c0_147 = arith.constant 0 : index
    %c0_148 = arith.constant 0 : index
    %321 = vector.load %arg19[%c1_146, %c0_147, %c0_148] : memref<2x1x128xf32, #tpu.memory_space<vmem>>, vector<1x1x128xf32>
    %322 = vector.shape_cast %321 : vector<1x1x128xf32> to vector<1x128xf32>
    %c1_149 = arith.constant 1 : index
    %c0_150 = arith.constant 0 : index
    %c0_151 = arith.constant 0 : index
    %323 = vector.load %arg20[%c1_149, %c0_150, %c0_151] : memref<2x1x128xf32, #tpu.memory_space<vmem>>, vector<1x1x128xf32>
    %324 = vector.shape_cast %323 : vector<1x1x128xf32> to vector<1x128xf32>
    %cst_152 = arith.constant dense<0.000000e+00> : vector<16xf32>
    %325 = vector.multi_reduction <add>, %320, %cst_152 [1] : vector<16x128xf32> to vector<16xf32>
    %326 = vector.shape_cast %325 : vector<16xf32> to vector<16x1xf32>
    %cst_153 = arith.constant 3.125000e-02 : f32
    %327 = vector.broadcast %cst_153 : f32 to vector<16x1xf32>
    %328 = arith.mulf %326, %327 : vector<16x1xf32>
    %329 = vector.broadcast %328 : vector<16x1xf32> to vector<16x128xf32>
    %330 = arith.subf %320, %329 : vector<16x128xf32>
    %331 = vector.broadcast %0 : vector<1x128xf32> to vector<16x128xf32>
    %332 = arith.mulf %330, %331 : vector<16x128xf32>
    %333 = arith.mulf %332, %332 : vector<16x128xf32>
    %cst_154 = arith.constant dense<0.000000e+00> : vector<16xf32>
    %334 = vector.multi_reduction <add>, %333, %cst_154 [1] : vector<16x128xf32> to vector<16xf32>
    %335 = vector.shape_cast %334 : vector<16xf32> to vector<16x1xf32>
    %cst_155 = arith.constant 3.125000e-02 : f32
    %336 = vector.broadcast %cst_155 : f32 to vector<16x1xf32>
    %337 = arith.mulf %335, %336 : vector<16x1xf32>
    %cst_156 = arith.constant 9.99999974E-6 : f32
    %338 = vector.broadcast %cst_156 : f32 to vector<16x1xf32>
    %339 = arith.addf %337, %338 : vector<16x1xf32>
    %340 = math.rsqrt %339 : vector<16x1xf32>
    %341 = vector.broadcast %340 : vector<16x1xf32> to vector<16x128xf32>
    %342 = arith.mulf %330, %341 : vector<16x128xf32>
    %343 = vector.broadcast %322 : vector<1x128xf32> to vector<16x128xf32>
    %344 = arith.mulf %342, %343 : vector<16x128xf32>
    %345 = vector.broadcast %324 : vector<1x128xf32> to vector<16x128xf32>
    %346 = arith.addf %344, %345 : vector<16x128xf32>
    %c0_157 = arith.constant 0 : index
    %c0_158 = arith.constant 0 : index
    %347 = vector.load %arg21[%c0_157, %c0_158] : memref<1x128xf32, #tpu.memory_space<vmem>>, vector<1x128xf32>
    %c0_159 = arith.constant 0 : index
    %c0_160 = arith.constant 0 : index
    %348 = vector.load %arg22[%c0_159, %c0_160] : memref<1x128xf32, #tpu.memory_space<vmem>>, vector<1x128xf32>
    %cst_161 = arith.constant dense<0.000000e+00> : vector<16xf32>
    %349 = vector.multi_reduction <add>, %346, %cst_161 [1] : vector<16x128xf32> to vector<16xf32>
    %350 = vector.shape_cast %349 : vector<16xf32> to vector<16x1xf32>
    %cst_162 = arith.constant 3.125000e-02 : f32
    %351 = vector.broadcast %cst_162 : f32 to vector<16x1xf32>
    %352 = arith.mulf %350, %351 : vector<16x1xf32>
    %353 = vector.broadcast %352 : vector<16x1xf32> to vector<16x128xf32>
    %354 = arith.subf %346, %353 : vector<16x128xf32>
    %355 = vector.broadcast %0 : vector<1x128xf32> to vector<16x128xf32>
    %356 = arith.mulf %354, %355 : vector<16x128xf32>
    %357 = arith.mulf %356, %356 : vector<16x128xf32>
    %cst_163 = arith.constant dense<0.000000e+00> : vector<16xf32>
    %358 = vector.multi_reduction <add>, %357, %cst_163 [1] : vector<16x128xf32> to vector<16xf32>
    %359 = vector.shape_cast %358 : vector<16xf32> to vector<16x1xf32>
    %cst_164 = arith.constant 3.125000e-02 : f32
    %360 = vector.broadcast %cst_164 : f32 to vector<16x1xf32>
    %361 = arith.mulf %359, %360 : vector<16x1xf32>
    %cst_165 = arith.constant 9.99999974E-6 : f32
    %362 = vector.broadcast %cst_165 : f32 to vector<16x1xf32>
    %363 = arith.addf %361, %362 : vector<16x1xf32>
    %364 = math.rsqrt %363 : vector<16x1xf32>
    %365 = vector.broadcast %364 : vector<16x1xf32> to vector<16x128xf32>
    %366 = arith.mulf %354, %365 : vector<16x128xf32>
    %367 = vector.broadcast %347 : vector<1x128xf32> to vector<16x128xf32>
    %368 = arith.mulf %366, %367 : vector<16x128xf32>
    %369 = vector.broadcast %348 : vector<1x128xf32> to vector<16x128xf32>
    %370 = arith.addf %368, %369 : vector<16x128xf32>
    %371 = arith.truncf %370 : vector<16x128xf32> to vector<16x128xbf16>
    %c0_166 = arith.constant 0 : index
    %c0_167 = arith.constant 0 : index
    %372 = vector.load %arg23[%c0_166, %c0_167] : memref<128x128xbf16, #tpu.memory_space<vmem>>, vector<128x128xbf16>
    %cst_168 = arith.constant dense<0.000000e+00> : vector<16x128xf32>
    %373 = tpu.matmul %371, %372, %cst_168 {dimension_numbers = #tpu.dot_dimension_numbers<[1], [0], [0], [1], [0, 0, 1, 1], [], []>} : vector<16x128xbf16>, vector<128x128xbf16>, vector<16x128xf32> -> vector<16x128xf32>
    %c0_169 = arith.constant 0 : index
    %c0_170 = arith.constant 0 : index
    %374 = vector.load %arg24[%c0_169, %c0_170] : memref<1x128xf32, #tpu.memory_space<vmem>>, vector<1x128xf32>
    %375 = vector.broadcast %374 : vector<1x128xf32> to vector<16x128xf32>
    %376 = arith.addf %373, %375 : vector<16x128xf32>
    %c0_171 = arith.constant 0 : index
    %c0_172 = arith.constant 0 : index
    %377 = vector.load %arg25[%c0_171, %c0_172] : memref<16x128xf32, #tpu.memory_space<vmem>>, vector<16x128xf32>
    tpu.vector_store %arg25[%c0_171, %c0_172], %376 {strides = array<i32>} : memref<16x128xf32, #tpu.memory_space<vmem>>, vector<16x128xf32>,
    return
  }
}

</mosaic_0001>

<llo_original>
// kernel: gat_transformer_forward.1
$region0: #{gat_transformer_forward.1}
  #allocation0 [shape = 'u32[]', space=smem, size = 0x4, offset = 0x4, fixed_abs, tag = 'smem constant byte address 0x4 - core index']
  #allocation1 [shape = 'u32[144,128]{1,0:T(1,128)}', space=vmem, size = 0x12000, scoped, tag = 'internal scratch']
  %s0 = inlined_call_operand.vmem [shape: f32[16,8], index: 0, kind: input, shape index: {}]
  %s1 = inlined_call_operand.vmem [shape: s8[16,16], index: 1, kind: input, shape index: {}]
  %s2 = inlined_call_operand.vmem [shape: bf16[8,128], index: 2, kind: input, shape index: {}]
  %s3 = inlined_call_operand.vmem [shape: f32[1,128], index: 3, kind: input, shape index: {}]
  %s4 = inlined_call_operand.vmem [shape: f32[1,128], index: 4, kind: input, shape index: {}]
  %s5 = inlined_call_operand.vmem [shape: f32[1,128], index: 5, kind: input, shape index: {}]
  %s6 = inlined_call_operand.vmem [shape: f32[1,128], index: 6, kind: input, shape index: {}]
  %s7 = inlined_call_operand.vmem [shape: f32[1,128], index: 7, kind: input, shape index: {}]
  %s8 = inlined_call_operand.vmem [shape: f32[1,128], index: 8, kind: input, shape index: {}]
  %s9 = inlined_call_operand.hbm [shape: bf16[2,128,768], index: 9, kind: input, shape index: {}]
  %s10 = inlined_call_operand.vmem [shape: f32[2,1,768], index: 10, kind: input, shape index: {}]
  %s11 = inlined_call_operand.hbm [shape: bf16[2,256,128], index: 11, kind: input, shape index: {}]
  %s12 = inlined_call_operand.vmem [shape: f32[2,1,128], index: 12, kind: input, shape index: {}]
  %s13 = inlined_call_operand.vmem [shape: f32[2,1,128], index: 13, kind: input, shape index: {}]
  %s14 = inlined_call_operand.vmem [shape: f32[2,1,128], index: 14, kind: input, shape index: {}]
  %s15 = inlined_call_operand.hbm [shape: bf16[2,128,128], index: 15, kind: input, shape index: {}]
  %s16 = inlined_call_operand.vmem [shape: f32[2,1,128], index: 16, kind: input, shape index: {}]
  %s17 = inlined_call_operand.hbm [shape: bf16[2,128,128], index: 17, kind: input, shape index: {}]
  %s18 = inlined_call_operand.vmem [shape: f32[2,1,128], index: 18, kind: input, shape index: {}]
  %s19 = inlined_call_operand.vmem [shape: f32[2,1,128], index: 19, kind: input, shape index: {}]
  %s20 = inlined_call_operand.vmem [shape: f32[2,1,128], index: 20, kind: input, shape index: {}]
  %s21 = inlined_call_operand.vmem [shape: f32[1,128], index: 21, kind: input, shape index: {}]
  %s22 = inlined_call_operand.hbm [shape: f32[1,128], index: 22, kind: input, shape index: {}]
  %s23 = inlined_call_operand.vmem [shape: bf16[128,128], index: 23, kind: input, shape index: {}]
  %s24 = inlined_call_operand.vmem [shape: f32[1,128], index: 24, kind: input, shape index: {}]
  %s25 = inlined_call_operand.vmem [shape: f32[16,128], index: 25, kind: output, shape index: {}]
  %s26 = sld [smem:[#allocation0]]
  $region130: #{gat_transformer_forward.1} parent=0
    _
  %s28 = ssub.s32 1, %s26
  %s29 = scalar_select 0, %s28, %s26
  $region1: #{gat_transformer_forward.1} parent=0
    #allocation2 [shape = 'u8[393216]{0}', space=vmem, size = 0x60000, scoped, tag = 'input window, operand 9, single buffered']
    #allocation3 [shape = 's32[1]{0}', space=sflag, size = 0x4, scoped, tag = 'scoped memory for gat_transformer_forward.1']
    #allocation4 [shape = 'u8[131072]{0}', space=vmem, size = 0x20000, scoped, tag = 'input window, operand 11, single buffered']
    #allocation5 [shape = 's32[1]{0}', space=sflag, size = 0x4, scoped, tag = 'scoped memory for gat_transformer_forward.1']
    #allocation6 [shape = 'u8[65536]{0}', space=vmem, size = 0x10000, scoped, tag = 'input window, operand 15, single buffered']
    #allocation7 [shape = 'u8[65536]{0}', space=vmem, size = 0x10000, scoped, tag = 'input window, operand 17, single buffered']
    #allocation8 [shape = 's32[1]{0}', space=sflag, size = 0x4, scoped, tag = 'scoped memory for gat_transformer_forward.1']
    #allocation9 [shape = 'u8[512]{0}', space=vmem, size = 0x400, scoped, tag = 'input window, operand 22, single buffered']
    %30 = vsyncpa [#allocation3], 0
    %31 = vsyncpa [#allocation5], 0
    %32 = vsyncpa [#allocation8], 0
    // Predicated region
    $region2: #{gat_transformer_forward.1} parent=1 // pred_check
      _
    $region3: #{gat_transformer_forward.1} parent=1 // pred_check_branch
      %34 = sbr.rel (0) target = $region5
    $region4: #{gat_transformer_forward.1} parent=1 // pred_region
      _
    $region5: #{gat_transformer_forward.1} parent=1 // pred_fallthru
      _
    // Predicated region
    $region6: #{gat_transformer_forward.1} parent=1 // pred_check
      _
    $region7: #{gat_transformer_forward.1} parent=1 // pred_check_branch
      %36 = sbr.rel (0) target = $region9
    $region8: #{gat_transformer_forward.1} parent=1 // pred_region
      _
    $region9: #{gat_transformer_forward.1} parent=1 // pred_fallthru
      _
    // Predicated region
    $region10: #{gat_transformer_forward.1} parent=1 // pred_check
      _
    $region11: #{gat_transformer_forward.1} parent=1 // pred_check_branch
      %38 = sbr.rel (0) target = $region13
    $region12: #{gat_transformer_forward.1} parent=1 // pred_region
      _
    $region13: #{gat_transformer_forward.1} parent=1 // pred_fallthru
      _
    // Predicated region
    $region14: #{gat_transformer_forward.1} parent=1 // pred_check
      _
    $region15: #{gat_transformer_forward.1} parent=1 // pred_check_branch
      %40 = sbr.rel (0) target = $region17
    $region16: #{gat_transformer_forward.1} parent=1 // pred_region
      _
    $region17: #{gat_transformer_forward.1} parent=1 // pred_fallthru
      _
    // Predicated region
    $region18: #{gat_transformer_forward.1} parent=1 // pred_check
      _
    $region19: #{gat_transformer_forward.1} parent=1 // pred_check_branch
      %42 = sbr.rel (0) target = $region21
    $region20: #{gat_transformer_forward.1} parent=1 // pred_region
      _
    $region21: #{gat_transformer_forward.1} parent=1 // pred_fallthru
      _
    // Predicated region
    $region22: #{gat_transformer_forward.1} parent=1 // pred_check
      _
    $region23: #{gat_transformer_forward.1} parent=1 // pred_check_branch
      %44 = sbr.rel (0) target = $region25
    $region24: #{gat_transformer_forward.1} parent=1 // pred_region
      _
    $region25: #{gat_transformer_forward.1} parent=1 // pred_fallthru
      _
    // Predicated region
    $region26: #{gat_transformer_forward.1} parent=1 // pred_check
      _
    $region27: #{gat_transformer_forward.1} parent=1 // pred_check_branch
      %46 = sbr.rel (0) target = $region29
    $region28: #{gat_transformer_forward.1} parent=1 // pred_region
      _
    $region29: #{gat_transformer_forward.1} parent=1 // pred_fallthru
      _
    // Predicated region
    $region30: #{gat_transformer_forward.1} parent=1 // pred_check
      _
    $region31: #{gat_transformer_forward.1} parent=1 // pred_check_branch
      %48 = sbr.rel (0) target = $region33
    $region32: #{gat_transformer_forward.1} parent=1 // pred_region
      _
    $region33: #{gat_transformer_forward.1} parent=1 // pred_fallthru
      _
    // Predicated region
    $region34: #{gat_transformer_forward.1} parent=1 // pred_check
      _
    $region35: #{gat_transformer_forward.1} parent=1 // pred_check_branch
      %50 = sbr.rel (0) target = $region37
    $region36: #{gat_transformer_forward.1} parent=1 // pred_region
      _
    $region37: #{gat_transformer_forward.1} parent=1 // pred_fallthru
      _
    // Predicated region
    $region38: #{gat_transformer_forward.1} parent=1 // pred_check
      _
    $region39: #{gat_transformer_forward.1} parent=1 // pred_check_branch
      %52 = sbr.rel (0) target = $region41
    $region40: #{gat_transformer_forward.1} parent=1 // pred_region
      %s54 = ssub.s32 12288, 12288
      %55 = vsyncadd [#allocation3], %s54
      %s56 = sshll.u32 [#allocation2], 4
      %s57 = int_to_ptr.vmem [resolvable:$true] %s56
      %62 = dma.hbm_to_vmem [thread:$0]  %s9, 12288, %s57, [#allocation3], 384, 384, 24
    $region41: #{gat_transformer_forward.1} parent=1 // pred_fallthru
      _
    // Predicated region
    $region42: #{gat_transformer_forward.1} parent=1 // pred_check
      _
    $region43: #{gat_transformer_forward.1} parent=1 // pred_check_branch
      %64 = sbr.rel (0) target = $region45
    $region44: #{gat_transformer_forward.1} parent=1 // pred_region
      _
    $region45: #{gat_transformer_forward.1} parent=1 // pred_fallthru
      _
    // Predicated region
    $region46: #{gat_transformer_forward.1} parent=1 // pred_check
      _
    $region47: #{gat_transformer_forward.1} parent=1 // pred_check_branch
      %66 = sbr.rel (0) target = $region49
    $region48: #{gat_transformer_forward.1} parent=1 // pred_region
      %s68 = ssub.s32 4096, 4096
      %69 = vsyncadd [#allocation5], %s68
      %s70 = sshll.u32 [#allocation4], 4
      %s71 = int_to_ptr.vmem [resolvable:$true] %s70
      %76 = dma.hbm_to_vmem [thread:$0]  %s11, 4096, %s71, [#allocation5], 64, 64, 4
    $region49: #{gat_transformer_forward.1} parent=1 // pred_fallthru
      _
    // Predicated region
    $region50: #{gat_transformer_forward.1} parent=1 // pred_check
      _
    $region51: #{gat_transformer_forward.1} parent=1 // pred_check_branch
      %78 = sbr.rel (0) target = $region53
    $region52: #{gat_transformer_forward.1} parent=1 // pred_region
      _
    $region53: #{gat_transformer_forward.1} parent=1 // pred_fallthru
      _
    // Predicated region
    $region54: #{gat_transformer_forward.1} parent=1 // pred_check
      _
    $region55: #{gat_transformer_forward.1} parent=1 // pred_check_branch
      %80 = sbr.rel (0) target = $region57
    $region56: #{gat_transformer_forward.1} parent=1 // pred_region
      _
    $region57: #{gat_transformer_forward.1} parent=1 // pred_fallthru
      _
    // Predicated region
    $region58: #{gat_transformer_forward.1} parent=1 // pred_check
      _
    $region59: #{gat_transformer_forward.1} parent=1 // pred_check_branch
      %82 = sbr.rel (0) target = $region61
    $region60: #{gat_transformer_forward.1} parent=1 // pred_region
      _
    $region61: #{gat_transformer_forward.1} parent=1 // pred_fallthru
      _
    // Predicated region
    $region62: #{gat_transformer_forward.1} parent=1 // pred_check
      _
    $region63: #{gat_transformer_forward.1} parent=1 // pred_check_branch
      %84 = sbr.rel (0) target = $region65
    $region64: #{gat_transformer_forward.1} parent=1 // pred_region
      %s86 = ssub.s32 2048, 2048
      %87 = vsyncadd [#allocation5], %s86
      %s88 = sshll.u32 [#allocation6], 4
      %s89 = int_to_ptr.vmem [resolvable:$true] %s88
      %94 = dma.hbm_to_vmem [thread:$0]  %s15, 2048, %s89, [#allocation5], 64, 64, 4
    $region65: #{gat_transformer_forward.1} parent=1 // pred_fallthru
      _
    // Predicated region
    $region66: #{gat_transformer_forward.1} parent=1 // pred_check
      _
    $region67: #{gat_transformer_forward.1} parent=1 // pred_check_branch
      %96 = sbr.rel (0) target = $region69
    $region68: #{gat_transformer_forward.1} parent=1 // pred_region
      _
    $region69: #{gat_transformer_forward.1} parent=1 // pred_fallthru
      _
    // Predicated region
    $region70: #{gat_transformer_forward.1} parent=1 // pred_check
      _
    $region71: #{gat_transformer_forward.1} parent=1 // pred_check_branch
      %98 = sbr.rel (0) target = $region73
    $region72: #{gat_transformer_forward.1} parent=1 // pred_region
      %s100 = ssub.s32 2048, 2048
      %101 = vsyncadd [#allocation8], %s100
      %s102 = sshll.u32 [#allocation7], 4
      %s103 = int_to_ptr.vmem [resolvable:$true] %s102
      %108 = dma.hbm_to_vmem [thread:$0]  %s17, 2048, %s103, [#allocation8], 64, 64, 4
    $region73: #{gat_transformer_forward.1} parent=1 // pred_fallthru
      _
    // Predicated region
    $region74: #{gat_transformer_forward.1} parent=1 // pred_check
      _
    $region75: #{gat_transformer_forward.1} parent=1 // pred_check_branch
      %110 = sbr.rel (0) target = $region77
    $region76: #{gat_transformer_forward.1} parent=1 // pred_region
      _
    $region77: #{gat_transformer_forward.1} parent=1 // pred_fallthru
      _
    // Predicated region
    $region78: #{gat_transformer_forward.1} parent=1 // pred_check
      _
    $region79: #{gat_transformer_forward.1} parent=1 // pred_check_branch
      %112 = sbr.rel (0) target = $region81
    $region80: #{gat_transformer_forward.1} parent=1 // pred_region
      _
    $region81: #{gat_transformer_forward.1} parent=1 // pred_fallthru
      _
    // Predicated region
    $region82: #{gat_transformer_forward.1} parent=1 // pred_check
      _
    $region83: #{gat_transformer_forward.1} parent=1 // pred_check_branch
      %114 = sbr.rel (0) target = $region85
    $region84: #{gat_transformer_forward.1} parent=1 // pred_region
      _
    $region85: #{gat_transformer_forward.1} parent=1 // pred_fallthru
      _
    // Predicated region
    $region86: #{gat_transformer_forward.1} parent=1 // pred_check
      _
    $region87: #{gat_transformer_forward.1} parent=1 // pred_check_branch
      %116 = sbr.rel (0) target = $region89
    $region88: #{gat_transformer_forward.1} parent=1 // pred_region
      _
    $region89: #{gat_transformer_forward.1} parent=1 // pred_fallthru
      _
    // Predicated region
    $region90: #{gat_transformer_forward.1} parent=1 // pred_check
      _
    $region91: #{gat_transformer_forward.1} parent=1 // pred_check_branch
      %118 = sbr.rel (0) target = $region93
    $region92: #{gat_transformer_forward.1} parent=1 // pred_region
      %s120 = ssub.s32 16, 16
      %121 = vsyncadd [#allocation8], %s120
      %s123 = sshll.u32 [#allocation9], 4
      %s124 = int_to_ptr.vmem [resolvable:$true] %s123
      %126 = dma.hbm_to_vmem [thread:$0]  %s22, 16, %s124, [#allocation8]
    $region93: #{gat_transformer_forward.1} parent=1 // pred_fallthru
      _
    // Predicated region
    $region94: #{gat_transformer_forward.1} parent=1 // pred_check
      _
    $region95: #{gat_transformer_forward.1} parent=1 // pred_check_branch
      %128 = sbr.rel (0) target = $region97
    $region96: #{gat_transformer_forward.1} parent=1 // pred_region
      _
    $region97: #{gat_transformer_forward.1} parent=1 // pred_fallthru
      _
    // Predicated region
    $region98: #{gat_transformer_forward.1} parent=1 // pred_check
      _
    $region99: #{gat_transformer_forward.1} parent=1 // pred_check_branch
      %130 = sbr.rel (0) target = $region101
    $region100: #{gat_transformer_forward.1} parent=1 // pred_region
      _
    $region101: #{gat_transformer_forward.1} parent=1 // pred_fallthru
      _
    // Predicated region
    $region102: #{gat_transformer_forward.1} parent=1 // pred_check
      _
    $region103: #{gat_transformer_forward.1} parent=1 // pred_check_branch
      %132 = sbr.rel (0) target = $region105
    $region104: #{gat_transformer_forward.1} parent=1 // pred_region
      %133 = dma.done [#allocation3], 12288
    $region105: #{gat_transformer_forward.1} parent=1 // pred_fallthru
      _
    // Predicated region
    $region106: #{gat_transformer_forward.1} parent=1 // pred_check
      _
    $region107: #{gat_transformer_forward.1} parent=1 // pred_check_branch
      %135 = sbr.rel (0) target = $region109
    $region108: #{gat_transformer_forward.1} parent=1 // pred_region
      %136 = dma.done [#allocation5], 4096
    $region109: #{gat_transformer_forward.1} parent=1 // pred_fallthru
      _
    // Predicated region
    $region110: #{gat_transformer_forward.1} parent=1 // pred_check
      _
    $region111: #{gat_transformer_forward.1} parent=1 // pred_check_branch
      %138 = sbr.rel (0) target = $region113
    $region112: #{gat_transformer_forward.1} parent=1 // pred_region
      %139 = dma.done [#allocation5], 2048
    $region113: #{gat_transformer_forward.1} parent=1 // pred_fallthru
      _
    // Predicated region
    $region114: #{gat_transformer_forward.1} parent=1 // pred_check
      _
    $region115: #{gat_transformer_forward.1} parent=1 // pred_check_branch
      %141 = sbr.rel (0) target = $region117
    $region116: #{gat_transformer_forward.1} parent=1 // pred_region
      %142 = dma.done [#allocation8], 2048
    $region117: #{gat_transformer_forward.1} parent=1 // pred_fallthru
      _
    // Predicated region
    $region118: #{gat_transformer_forward.1} parent=1 // pred_check
      _
    $region119: #{gat_transformer_forward.1} parent=1 // pred_check_branch
      %144 = sbr.rel (0) target = $region121
    $region120: #{gat_transformer_forward.1} parent=1 // pred_region
      %145 = dma.done [#allocation8], 16
    $region121: #{gat_transformer_forward.1} parent=1 // pred_fallthru
      _
    %v147 = vld [vmem:[%s8] sm:$0x1]
    %v148 = vld [vmem:[%s0] sm:$0xff]
    %v149 = vld [vmem:[%s0 + $0x8] sm:$0xff]
    %v150 = vpack.c.bf16 %v149, %v148
    %v151 = vld [vmem:[%s2] sm:$0xf]
    %vm152 = vcmask 64512
    %v154 = vsel %vm152, %v150, 0
    %vm156 = vcmask 1043456
    %v158 = vsel %vm156, %v151, 0
    %160 = vmatprep.subr.bf16.mxu0 0
    %161 = vmatpush1.bf16.msra.mxu0 %v158
    %162 = vmatprep.subr.bf16.mxu0 0
    %163 = vmatpush1.bf16.msra.mxu0 0
    %164 = vmatprep.subr.bf16.mxu0 0
    %165 = vmatpush1.bf16.msra.mxu0 0
    %166 = vmatprep.subr.bf16.mxu0 0
    %167 = vmatpush1.bf16.msra.mxu0 0
    %168 = vmatprep.subr.bf16.mxu0 0
    %169 = vmatpush1.bf16.msra.mxu0 0
    %170 = vmatprep.subr.bf16.mxu0 0
    %171 = vmatpush1.bf16.msra.mxu0 0
    %172 = vmatprep.subr.bf16.mxu0 0
    %173 = vmatpush1.bf16.msra.mxu0 0
    %174 = vmatprep.subr.bf16.mxu0 0
    %175 = vmatpush1.bf16.msra.mxu0 0
    %176 = vmatprep.subr.bf16.mxu0 0
    %177 = vmatpush1.bf16.msra.mxu0 0
    %178 = vmatprep.subr.bf16.mxu0 0
    %179 = vmatpush1.bf16.msra.mxu0 0
    %180 = vmatprep.subr.bf16.mxu0 0
    %181 = vmatpush1.bf16.msra.mxu0 0
    %182 = vmatprep.subr.bf16.mxu0 0
    %183 = vmatpush1.bf16.msra.mxu0 0
    %184 = vmatprep.subr.bf16.mxu0 0
    %185 = vmatpush1.bf16.msra.mxu0 0
    %186 = vmatprep.subr.bf16.mxu0 0
    %187 = vmatpush1.bf16.msra.mxu0 0
    %188 = vmatprep.subr.bf16.mxu0 0
    %189 = vmatpush1.bf16.msra.mxu0 0
    %190 = vmatprep.subr.bf16.mxu0 0
    %191 = vmatpush1.bf16.msra.mxu0 0
    %192 = vmatprep.mubr.bf16.mxu0 0
    %193 = vmatmul.mubr.bf16.gmra.mrb[0].mxu0 %v154
    %v194 = vpop.f32.mrb[0].mxu0
    %v195 = vadd.f32 0.0, %v194
    %v196 = vpop.f32.mrb[0].mxu0
    %v197 = vpop.f32.mrb[0].mxu0
    %v198 = vadd.f32 0.0, %v197
    %v199 = vpop.f32.mrb[0].mxu0
    %200 = vdwg.mxu0
    %v201 = vld [vmem:[%s4] sm:$0x1]
    %v203 = vlaneseq
    %v204 = vshrl.u32 %v203, 7
    %v205 = vsub.s32 0, %v204
    %v206 = vrot.slane %v201, %v205
    %v208 = vmul.f32 %v195, %v206
    %v209 = vmul.f32 %v198, %v206
    %210 = vadd.xlane.f32.xlu0 %v208
    %v211 = vpop.xlane.xlu0 %210
    %212 = vadd.xlane.f32.xlu0 %v209
    %v213 = vpop.xlane.xlu0 %212
    %v214 = vld [vmem:[%s3] sm:$0x1]
    %v216 = vlaneseq
    %v217 = vshrl.u32 %v216, 7
    %v218 = vsub.s32 0, %v217
    %v219 = vrot.slane %v214, %v218
    %v221 = vpack.c.bf16 %v219, %v219
    %v222 = vpack.c.bf16 %v198, %v195
    %223 = vmatprep.subr.bf16.mxu0 0
    %224 = vmatpush1.bf16.xpose.msra.mxu0 %v222
    %225 = vmatprep.subr.bf16.mxu0 0
    %226 = vmatpush1.bf16.xpose.msra.mxu0 0
    %227 = vmatprep.subr.bf16.mxu0 0
    %228 = vmatpush1.bf16.xpose.msra.mxu0 0
    %229 = vmatprep.subr.bf16.mxu0 0
    %230 = vmatpush1.bf16.xpose.msra.mxu0 0
    %231 = vmatprep.subr.bf16.mxu0 0
    %232 = vmatpush1.bf16.xpose.msra.mxu0 0
    %233 = vmatprep.subr.bf16.mxu0 0
    %234 = vmatpush1.bf16.xpose.msra.mxu0 0
    %235 = vmatprep.subr.bf16.mxu0 0
    %236 = vmatpush1.bf16.xpose.msra.mxu0 0
    %237 = vmatprep.subr.bf16.mxu0 0
    %238 = vmatpush1.bf16.xpose.msra.mxu0 0
    %239 = vmatprep.subr.bf16.mxu0 0
    %240 = vmatpush1.bf16.xpose.msra.mxu0 0
    %241 = vmatprep.subr.bf16.mxu0 0
    %242 = vmatpush1.bf16.xpose.msra.mxu0 0
    %243 = vmatprep.subr.bf16.mxu0 0
    %244 = vmatpush1.bf16.xpose.msra.mxu0 0
    %245 = vmatprep.subr.bf16.mxu0 0
    %246 = vmatpush1.bf16.xpose.msra.mxu0 0
    %247 = vmatprep.subr.bf16.mxu0 0
    %248 = vmatpush1.bf16.xpose.msra.mxu0 0
    %249 = vmatprep.subr.bf16.mxu0 0
    %250 = vmatpush1.bf16.xpose.msra.mxu0 0
    %251 = vmatprep.subr.bf16.mxu0 0
    %252 = vmatpush1.bf16.xpose.msra.mxu0 0
    %253 = vmatprep.subr.bf16.mxu0 0
    %254 = vmatpush1.bf16.xpose.msra.mxu0 0
    %255 = vmatprep.mubr.bf16.mxu0 0
    %256 = vmatmul.mubr.bf16.gmra.mrb[0].mxu0 %v221
    %v257 = vpop.f32.mrb[0].mxu0
    %v258 = vadd.f32 0.0, %v257
    %v259 = vpop.f32.mrb[0].mxu0
    %v260 = vpop.f32.mrb[0].mxu0
    %v261 = vadd.f32 0.0, %v260
    %v262 = vpop.f32.mrb[0].mxu0
    %263 = vdwg.mxu0
    %v264 = vadd.f32 %v211, %v258
    %v265 = vadd.f32 %v213, %v261
    %vm266 = vcmp.gt.f32.partialorder %v264, 0.0
    %vm267 = vcmp.gt.f32.partialorder %v265, 0.0
    %v268 = vmul.f32 %v264, 0.2
    %v269 = vmul.f32 %v265, 0.2
    %v270 = vsel %vm266, %v264, %v268
    %v271 = vsel %vm267, %v265, %v269
    %v272 = vld [vmem:[%s1] sm:$0x3]
    %v273 = vld [vmem:[%s1 + $0x2] sm:$0x3]
    %v274 = vunpack.c.0.s8 %v272
    %v275 = vunpack.c.0.s8 %v273
    %v276 = vcvt.s32.f32 %v274
    %v277 = vcvt.s32.f32 %v275
    %vm278 = vcmp.gt.f32.partialorder %v276, 0.0
    %vm279 = vcmp.gt.f32.partialorder %v277, 0.0
    %v280 = vsel %vm278, %v270, -1e+30
    %v281 = vsel %vm279, %v271, -1e+30
    %vm282 = vcmask 130048
    %v283 = vsel %vm282, %v280, -inf
    %284 = vmax.xlane.f32.xlu0 %v283
    %v285 = vpop.xlane.xlu0 %284
    %v286 = vsel %vm282, %v281, -inf
    %287 = vmax.xlane.f32.xlu0 %v286
    %v288 = vpop.xlane.xlu0 %287
    %v289 = vsub.f32 %v280, %v285
    %v290 = vsub.f32 %v281, %v288
    %v291 = vmul.f32 %v289, 1.442695
    %v292 = vpow.pop %v291
    %v293 = vmul.f32 %v290, 1.442695
    %v294 = vpow.pop %v293
    %v295 = vsel %vm282, %v292, 0.0
    %296 = vadd.xlane.f32.xlu0 %v295
    %v297 = vpop.xlane.xlu0 %296
    %v298 = vsel %vm282, %v294, 0.0
    %299 = vadd.xlane.f32.xlu0 %v298
    %v300 = vpop.xlane.xlu0 %299
    %v301 = vrcp.pop %v297
    %v302 = vrcp.pop %v300
    %v303 = vpack.c.bf16 %v294, %v292
    %v305 = vsel %vm282, %v303, 0
    %307 = vmatprep.subr.bf16.mxu0 0
    %308 = vmatpush1.bf16.msra.mxu0 %v222
    %309 = vmatprep.subr.bf16.mxu0 0
    %310 = vmatpush1.bf16.msra.mxu0 0
    %311 = vmatprep.subr.bf16.mxu0 0
    %312 = vmatpush1.bf16.msra.mxu0 0
    %313 = vmatprep.subr.bf16.mxu0 0
    %314 = vmatpush1.bf16.msra.mxu0 0
    %315 = vmatprep.subr.bf16.mxu0 0
    %316 = vmatpush1.bf16.msra.mxu0 0
    %317 = vmatprep.subr.bf16.mxu0 0
    %318 = vmatpush1.bf16.msra.mxu0 0
    %319 = vmatprep.subr.bf16.mxu0 0
    %320 = vmatpush1.bf16.msra.mxu0 0
    %321 = vmatprep.subr.bf16.mxu0 0
    %322 = vmatpush1.bf16.msra.mxu0 0
    %323 = vmatprep.subr.bf16.mxu0 0
    %324 = vmatpush1.bf16.msra.mxu0 0
    %325 = vmatprep.subr.bf16.mxu0 0
    %326 = vmatpush1.bf16.msra.mxu0 0
    %327 = vmatprep.subr.bf16.mxu0 0
    %328 = vmatpush1.bf16.msra.mxu0 0
    %329 = vmatprep.subr.bf16.mxu0 0
    %330 = vmatpush1.bf16.msra.mxu0 0
    %331 = vmatprep.subr.bf16.mxu0 0
    %332 = vmatpush1.bf16.msra.mxu0 0
    %333 = vmatprep.subr.bf16.mxu0 0
    %334 = vmatpush1.bf16.msra.mxu0 0
    %335 = vmatprep.subr.bf16.mxu0 0
    %336 = vmatpush1.bf16.msra.mxu0 0
    %337 = vmatprep.subr.bf16.mxu0 0
    %338 = vmatpush1.bf16.msra.mxu0 0
    %339 = vmatprep.mubr.bf16.mxu0 0
    %340 = vmatmul.mubr.bf16.gmra.mrb[0].mxu0 %v305
    %v341 = vpop.f32.mrb[0].mxu0
    %v342 = vadd.f32 0.0, %v341
    %v343 = vpop.f32.mrb[0].mxu0
    %v344 = vpop.f32.mrb[0].mxu0
    %v345 = vadd.f32 0.0, %v344
    %v346 = vpop.f32.mrb[0].mxu0
    %347 = vdwg.mxu0
    %v348 = vmul.f32 %v342, %v301
    %v349 = vmul.f32 %v345, %v302
    %v350 = vld [vmem:[%s5] sm:$0x1]
    %v352 = vlaneseq
    %v353 = vshrl.u32 %v352, 7
    %v354 = vsub.s32 0, %v353
    %v355 = vrot.slane %v350, %v354
    %v357 = vadd.f32 %v348, %v355
    %v358 = vadd.f32 %v349, %v355
    %vm359 = vcmp.gt.f32.partialorder %v357, 0.0
    %vm360 = vcmp.gt.f32.partialorder %v358, 0.0
    %v361 = vmin.f32 %v357, 0.0
    %v362 = vmin.f32 %v358, 0.0
    %v363 = vmul.f32 %v361, 1.442695
    %v364 = vpow.pop %v363
    %v365 = vmul.f32 %v362, 1.442695
    %v366 = vpow.pop %v365
    %v367 = vsub.f32 %v364, 1.0
    %v368 = vsub.f32 %v366, 1.0
    %v369 = vsel %vm359, %v357, %v367
    %v370 = vsel %vm360, %v358, %v368
    %v371 = vld [vmem:[%s6] sm:$0x1]
    %v372 = vld [vmem:[%s7] sm:$0x1]
    %373 = vadd.xlane.f32.xlu0 %v369
    %v374 = vpop.xlane.xlu0 %373
    %375 = vadd.xlane.f32.xlu0 %v370
    %v376 = vpop.xlane.xlu0 %375
    %v377 = vmul.f32 %v374, 0.03125
    %v378 = vmul.f32 %v376, 0.03125
    %v379 = vsub.f32 %v369, %v377
    %v380 = vsub.f32 %v370, %v378
    %v382 = vlaneseq
    %v383 = vshrl.u32 %v382, 7
    %v384 = vsub.s32 0, %v383
    %v385 = vrot.slane %v147, %v384
    %v387 = vmul.f32 %v379, %v385
    %v388 = vmul.f32 %v380, %v385
    %v389 = vmul.f32 %v387, %v387
    %v390 = vmul.f32 %v388, %v388
    %391 = vadd.xlane.f32.xlu0 %v389
    %v392 = vpop.xlane.xlu0 %391
    %393 = vadd.xlane.f32.xlu0 %v390
    %v394 = vpop.xlane.xlu0 %393
    %v395 = vmul.f32 %v392, 0.03125
    %v396 = vmul.f32 %v394, 0.03125
    %v397 = vadd.f32 %v395, 1e-05
    %v398 = vadd.f32 %v396, 1e-05
    %v399 = vrsqrt.pop %v397
    %v400 = vrsqrt.pop %v398
    %v401 = vmul.f32 %v379, %v399
    %v402 = vmul.f32 %v380, %v400
    %v404 = vlaneseq
    %v405 = vshrl.u32 %v404, 7
    %v406 = vsub.s32 0, %v405
    %v407 = vrot.slane %v371, %v406
    %v409 = vmul.f32 %v401, %v407
    %v410 = vmul.f32 %v402, %v407
    %v412 = vlaneseq
    %v413 = vshrl.u32 %v412, 7
    %v414 = vsub.s32 0, %v413
    %v415 = vrot.slane %v372, %v414
    %v417 = vadd.f32 %v409, %v415
    %v418 = vadd.f32 %v410, %v415
    %v419 = vpack.c.bf16 %v418, %v417
    %v420 = vld [vmem:[#allocation2] sm:$0xff]
    %v421 = vld [vmem:[#allocation2 + $0x8] sm:$0xff]
    %v422 = vld [vmem:[#allocation2 + $0x10] sm:$0xff]
    %v423 = vld [vmem:[#allocation2 + $0x18] sm:$0xff]
    %v424 = vld [vmem:[#allocation2 + $0x20] sm:$0xff]
    %v425 = vld [vmem:[#allocation2 + $0x28] sm:$0xff]
    %v426 = vld [vmem:[#allocation2 + $0x30] sm:$0xff]
    %v427 = vld [vmem:[#allocation2 + $0x38] sm:$0xff]
    %v428 = vld [vmem:[#allocation2 + $0x40] sm:$0xff]
    %v429 = vld [vmem:[#allocation2 + $0x48] sm:$0xff]
    %v430 = vld [vmem:[#allocation2 + $0x50] sm:$0xff]
    %v431 = vld [vmem:[#allocation2 + $0x58] sm:$0xff]
    %v432 = vld [vmem:[#allocation2 + $0x60] sm:$0xff]
    %v433 = vld [vmem:[#allocation2 + $0x68] sm:$0xff]
    %v434 = vld [vmem:[#allocation2 + $0x70] sm:$0xff]
    %v435 = vld [vmem:[#allocation2 + $0x78] sm:$0xff]
    %v436 = vld [vmem:[#allocation2 + $0x80] sm:$0xff]
    %v437 = vld [vmem:[#allocation2 + $0x88] sm:$0xff]
    %v438 = vld [vmem:[#allocation2 + $0x90] sm:$0xff]
    %v439 = vld [vmem:[#allocation2 + $0x98] sm:$0xff]
    %v440 = vld [vmem:[#allocation2 + $0xa0] sm:$0xff]
    %v441 = vld [vmem:[#allocation2 + $0xa8] sm:$0xff]
    %v442 = vld [vmem:[#allocation2 + $0xb0] sm:$0xff]
    %v443 = vld [vmem:[#allocation2 + $0xb8] sm:$0xff]
    %v444 = vld [vmem:[#allocation2 + $0xc0] sm:$0xff]
    %v445 = vld [vmem:[#allocation2 + $0xc8] sm:$0xff]
    %v446 = vld [vmem:[#allocation2 + $0xd0] sm:$0xff]
    %v447 = vld [vmem:[#allocation2 + $0xd8] sm:$0xff]
    %v448 = vld [vmem:[#allocation2 + $0xe0] sm:$0xff]
    %v449 = vld [vmem:[#allocation2 + $0xe8] sm:$0xff]
    %v450 = vld [vmem:[#allocation2 + $0xf0] sm:$0xff]
    %v451 = vld [vmem:[#allocation2 + $0xf8] sm:$0xff]
    %v452 = vld [vmem:[#allocation2 + $0x100] sm:$0xff]
    %v453 = vld [vmem:[#allocation2 + $0x108] sm:$0xff]
    %v454 = vld [vmem:[#allocation2 + $0x110] sm:$0xff]
    %v455 = vld [vmem:[#allocation2 + $0x118] sm:$0xff]
    %v456 = vld [vmem:[#allocation2 + $0x120] sm:$0xff]
    %v457 = vld [vmem:[#allocation2 + $0x128] sm:$0xff]
    %v458 = vld [vmem:[#allocation2 + $0x130] sm:$0xff]
    %v459 = vld [vmem:[#allocation2 + $0x138] sm:$0xff]
    %v460 = vld [vmem:[#allocation2 + $0x140] sm:$0xff]
    %v461 = vld [vmem:[#allocation2 + $0x148] sm:$0xff]
    %v462 = vld [vmem:[#allocation2 + $0x150] sm:$0xff]
    %v463 = vld [vmem:[#allocation2 + $0x158] sm:$0xff]
    %v464 = vld [vmem:[#allocation2 + $0x160] sm:$0xff]
    %v465 = vld [vmem:[#allocation2 + $0x168] sm:$0xff]
    %v466 = vld [vmem:[#allocation2 + $0x170] sm:$0xff]
    %v467 = vld [vmem:[#allocation2 + $0x178] sm:$0xff]
    %v468 = vld [vmem:[%s10] sm:$0x3f]
    %v470 = vlaneseq
    %v471 = vshrl.u32 %v470, 7
    %v472 = vsub.s32 0, %v471
    %v473 = vrot.slane %v468, %v472
    %v474 = vlaneseq
    %v475 = vshrl.u32 %v474, 7
    %v476 = vsub.s32 1, %v475
    %v477 = vrot.slane %v468, %v476
    %v478 = vlaneseq
    %v479 = vshrl.u32 %v478, 7
    %v480 = vsub.s32 2, %v479
    %v481 = vrot.slane %v468, %v480
    %v482 = vlaneseq
    %v483 = vshrl.u32 %v482, 7
    %v484 = vsub.s32 3, %v483
    %v485 = vrot.slane %v468, %v484
    %v486 = vlaneseq
    %v487 = vshrl.u32 %v486, 7
    %v488 = vsub.s32 4, %v487
    %v489 = vrot.slane %v468, %v488
    %v490 = vlaneseq
    %v491 = vshrl.u32 %v490, 7
    %v492 = vsub.s32 5, %v491
    %v493 = vrot.slane %v468, %v492
    %v548 = vunpack.c.l.b16 %v420
    %v549 = vunpack.c.h.b16 %v420
    %v550 = vunpack.c.l.b16 %v421
    %v551 = vunpack.c.h.b16 %v421
    %v552 = vunpack.c.l.b16 %v422
    %v553 = vunpack.c.h.b16 %v422
    %v554 = vunpack.c.l.b16 %v423
    %v555 = vunpack.c.h.b16 %v423
    %v556 = vunpack.c.l.b16 %v424
    %v557 = vunpack.c.h.b16 %v424
    %v558 = vunpack.c.l.b16 %v425
    %v559 = vunpack.c.h.b16 %v425
    %v560 = vunpack.c.l.b16 %v426
    %v561 = vunpack.c.h.b16 %v426
    %v562 = vunpack.c.l.b16 %v427
    %v563 = vunpack.c.h.b16 %v427
    %v564 = vunpack.c.l.b16 %v428
    %v565 = vunpack.c.h.b16 %v428
    %v566 = vunpack.c.l.b16 %v429
    %v567 = vunpack.c.h.b16 %v429
    %v568 = vunpack.c.l.b16 %v430
    %v569 = vunpack.c.h.b16 %v430
    %v570 = vunpack.c.l.b16 %v431
    %v571 = vunpack.c.h.b16 %v431
    %v572 = vunpack.c.l.b16 %v432
    %v573 = vunpack.c.h.b16 %v432
    %v574 = vunpack.c.l.b16 %v433
    %v575 = vunpack.c.h.b16 %v433
    %v576 = vunpack.c.l.b16 %v434
    %v577 = vunpack.c.h.b16 %v434
    %v578 = vunpack.c.l.b16 %v435
    %v579 = vunpack.c.h.b16 %v435
    %v580 = vunpack.c.l.b16 %v436
    %v581 = vunpack.c.h.b16 %v436
    %v582 = vunpack.c.l.b16 %v437
    %v583 = vunpack.c.h.b16 %v437
    %v584 = vunpack.c.l.b16 %v438
    %v585 = vunpack.c.h.b16 %v438
    %v586 = vunpack.c.l.b16 %v439
    %v587 = vunpack.c.h.b16 %v439
    %v588 = vunpack.c.l.b16 %v440
    %v589 = vunpack.c.h.b16 %v440
    %v590 = vunpack.c.l.b16 %v441
    %v591 = vunpack.c.h.b16 %v441
    %v592 = vunpack.c.l.b16 %v442
    %v593 = vunpack.c.h.b16 %v442
    %v594 = vunpack.c.l.b16 %v443
    %v595 = vunpack.c.h.b16 %v443
    %v596 = vunpack.c.l.b16 %v444
    %v597 = vunpack.c.h.b16 %v444
    %v598 = vunpack.c.l.b16 %v445
    %v599 = vunpack.c.h.b16 %v445
    %v600 = vunpack.c.l.b16 %v446
    %v601 = vunpack.c.h.b16 %v446
    %v602 = vunpack.c.l.b16 %v447
    %v603 = vunpack.c.h.b16 %v447
    %v604 = vunpack.c.l.b16 %v448
    %v605 = vunpack.c.h.b16 %v448
    %v606 = vunpack.c.l.b16 %v449
    %v607 = vunpack.c.h.b16 %v449
    %v608 = vunpack.c.l.b16 %v450
    %v609 = vunpack.c.h.b16 %v450
    %v610 = vunpack.c.l.b16 %v451
    %v611 = vunpack.c.h.b16 %v451
    %v612 = vunpack.c.l.b16 %v452
    %v613 = vunpack.c.h.b16 %v452
    %v614 = vunpack.c.l.b16 %v453
    %v615 = vunpack.c.h.b16 %v453
    %v616 = vunpack.c.l.b16 %v454
    %v617 = vunpack.c.h.b16 %v454
    %v618 = vunpack.c.l.b16 %v455
    %v619 = vunpack.c.h.b16 %v455
    %v620 = vunpack.c.l.b16 %v456
    %v621 = vunpack.c.h.b16 %v456
    %v622 = vunpack.c.l.b16 %v457
    %v623 = vunpack.c.h.b16 %v457
    %v624 = vunpack.c.l.b16 %v458
    %v625 = vunpack.c.h.b16 %v458
    %v626 = vunpack.c.l.b16 %v459
    %v627 = vunpack.c.h.b16 %v459
    %v628 = vunpack.c.l.b16 %v460
    %v629 = vunpack.c.h.b16 %v460
    %v630 = vunpack.c.l.b16 %v461
    %v631 = vunpack.c.h.b16 %v461
    %v632 = vunpack.c.l.b16 %v462
    %v633 = vunpack.c.h.b16 %v462
    %v634 = vunpack.c.l.b16 %v463
    %v635 = vunpack.c.h.b16 %v463
    %v636 = vunpack.c.l.b16 %v464
    %v637 = vunpack.c.h.b16 %v464
    %v638 = vunpack.c.l.b16 %v465
    %v639 = vunpack.c.h.b16 %v465
    %v640 = vunpack.c.l.b16 %v466
    %v641 = vunpack.c.h.b16 %v466
    %v642 = vunpack.c.l.b16 %v467
    %v643 = vunpack.c.h.b16 %v467
    %v644 = vpack.c.b16 %v554, %v548
    %v645 = vpack.c.b16 %v555, %v549
    %v646 = vpack.c.b16 %v556, %v550
    %v647 = vpack.c.b16 %v557, %v551
    %v648 = vpack.c.b16 %v558, %v552
    %v649 = vpack.c.b16 %v559, %v553
    %v650 = vpack.c.b16 %v566, %v560
    %v651 = vpack.c.b16 %v567, %v561
    %v652 = vpack.c.b16 %v568, %v562
    %v653 = vpack.c.b16 %v569, %v563
    %v654 = vpack.c.b16 %v570, %v564
    %v655 = vpack.c.b16 %v571, %v565
    %v656 = vpack.c.b16 %v578, %v572
    %v657 = vpack.c.b16 %v579, %v573
    %v658 = vpack.c.b16 %v580, %v574
    %v659 = vpack.c.b16 %v581, %v575
    %v660 = vpack.c.b16 %v582, %v576
    %v661 = vpack.c.b16 %v583, %v577
    %v662 = vpack.c.b16 %v590, %v584
    %v663 = vpack.c.b16 %v591, %v585
    %v664 = vpack.c.b16 %v592, %v586
    %v665 = vpack.c.b16 %v593, %v587
    %v666 = vpack.c.b16 %v594, %v588
    %v667 = vpack.c.b16 %v595, %v589
    %v668 = vpack.c.b16 %v602, %v596
    %v669 = vpack.c.b16 %v603, %v597
    %v670 = vpack.c.b16 %v604, %v598
    %v671 = vpack.c.b16 %v605, %v599
    %v672 = vpack.c.b16 %v606, %v600
    %v673 = vpack.c.b16 %v607, %v601
    %v674 = vpack.c.b16 %v614, %v608
    %v675 = vpack.c.b16 %v615, %v609
    %v676 = vpack.c.b16 %v616, %v610
    %v677 = vpack.c.b16 %v617, %v611
    %v678 = vpack.c.b16 %v618, %v612
    %v679 = vpack.c.b16 %v619, %v613
    %v680 = vpack.c.b16 %v626, %v620
    %v681 = vpack.c.b16 %v627, %v621
    %v682 = vpack.c.b16 %v628, %v622
    %v683 = vpack.c.b16 %v629, %v623
    %v684 = vpack.c.b16 %v630, %v624
    %v685 = vpack.c.b16 %v631, %v625
    %v686 = vpack.c.b16 %v638, %v632
    %v687 = vpack.c.b16 %v639, %v633
    %v688 = vpack.c.b16 %v640, %v634
    %v689 = vpack.c.b16 %v641, %v635
    %v690 = vpack.c.b16 %v642, %v636
    %v691 = vpack.c.b16 %v643, %v637
    %740 = vmatprep.subr.bf16.mxu0 %v645
    %741 = vmatpush1.bf16.msra.mxu0 %v644
    %742 = vmatprep.subr.bf16.mxu0 %v651
    %743 = vmatpush1.bf16.msra.mxu0 %v650
    %744 = vmatprep.subr.bf16.mxu0 %v657
    %745 = vmatpush1.bf16.msra.mxu0 %v656
    %746 = vmatprep.subr.bf16.mxu0 %v663
    %747 = vmatpush1.bf16.msra.mxu0 %v662
    %748 = vmatprep.subr.bf16.mxu0 %v669
    %749 = vmatpush1.bf16.msra.mxu0 %v668
    %750 = vmatprep.subr.bf16.mxu0 %v675
    %751 = vmatpush1.bf16.msra.mxu0 %v674
    %752 = vmatprep.subr.bf16.mxu0 %v681
    %753 = vmatpush1.bf16.msra.mxu0 %v680
    %754 = vmatprep.subr.bf16.mxu0 %v687
    %755 = vmatpush1.bf16.msra.mxu0 %v686
    %756 = vmatprep.subr.bf16.mxu0 0
    %757 = vmatpush1.bf16.msra.mxu0 0
    %758 = vmatprep.subr.bf16.mxu0 0
    %759 = vmatpush1.bf16.msra.mxu0 0
    %760 = vmatprep.subr.bf16.mxu0 0
    %761 = vmatpush1.bf16.msra.mxu0 0
    %762 = vmatprep.subr.bf16.mxu0 0
    %763 = vmatpush1.bf16.msra.mxu0 0
    %764 = vmatprep.subr.bf16.mxu0 0
    %765 = vmatpush1.bf16.msra.mxu0 0
    %766 = vmatprep.subr.bf16.mxu0 0
    %767 = vmatpush1.bf16.msra.mxu0 0
    %768 = vmatprep.subr.bf16.mxu0 0
    %769 = vmatpush1.bf16.msra.mxu0 0
    %770 = vmatprep.subr.bf16.mxu0 0
    %771 = vmatpush1.bf16.msra.mxu0 0
    %772 = vmatprep.mubr.bf16.mxu0 0
    %773 = vmatmul.mubr.bf16.gmra.mrb[0].mxu0 %v419
    %v774 = vpop.f32.mrb[0].mxu0
    %v775 = vadd.f32 %v473, %v774
    %v776 = vpop.f32.mrb[0].mxu0
    %v777 = vadd.f32 %v477, %v776
    %v778 = vpop.f32.mrb[0].mxu0
    %v779 = vadd.f32 %v473, %v778
    %v780 = vpop.f32.mrb[0].mxu0
    %v781 = vadd.f32 %v477, %v780
    %782 = vdwg.mxu0
    %783 = vmatprep.subr.bf16.mxu0 %v647
    %784 = vmatpush1.bf16.msra.mxu0 %v646
    %785 = vmatprep.subr.bf16.mxu0 %v653
    %786 = vmatpush1.bf16.msra.mxu0 %v652
    %787 = vmatprep.subr.bf16.mxu0 %v659
    %788 = vmatpush1.bf16.msra.mxu0 %v658
    %789 = vmatprep.subr.bf16.mxu0 %v665
    %790 = vmatpush1.bf16.msra.mxu0 %v664
    %791 = vmatprep.subr.bf16.mxu0 %v671
    %792 = vmatpush1.bf16.msra.mxu0 %v670
    %793 = vmatprep.subr.bf16.mxu0 %v677
    %794 = vmatpush1.bf16.msra.mxu0 %v676
    %795 = vmatprep.subr.bf16.mxu0 %v683
    %796 = vmatpush1.bf16.msra.mxu0 %v682
    %797 = vmatprep.subr.bf16.mxu0 %v689
    %798 = vmatpush1.bf16.msra.mxu0 %v688
    %799 = vmatprep.subr.bf16.mxu0 0
    %800 = vmatpush1.bf16.msra.mxu0 0
    %801 = vmatprep.subr.bf16.mxu0 0
    %802 = vmatpush1.bf16.msra.mxu0 0
    %803 = vmatprep.subr.bf16.mxu0 0
    %804 = vmatpush1.bf16.msra.mxu0 0
    %805 = vmatprep.subr.bf16.mxu0 0
    %806 = vmatpush1.bf16.msra.mxu0 0
    %807 = vmatprep.subr.bf16.mxu0 0
    %808 = vmatpush1.bf16.msra.mxu0 0
    %809 = vmatprep.subr.bf16.mxu0 0
    %810 = vmatpush1.bf16.msra.mxu0 0
    %811 = vmatprep.subr.bf16.mxu0 0
    %812 = vmatpush1.bf16.msra.mxu0 0
    %813 = vmatprep.subr.bf16.mxu0 0
    %814 = vmatpush1.bf16.msra.mxu0 0
    %815 = vmatprep.mubr.bf16.mxu0 0
    %816 = vmatmul.mubr.bf16.gmra.mrb[0].mxu0 %v419
    %v817 = vpop.f32.mrb[0].mxu0
    %v818 = vadd.f32 %v481, %v817
    %v819 = vpop.f32.mrb[0].mxu0
    %v820 = vadd.f32 %v485, %v819
    %v821 = vpop.f32.mrb[0].mxu0
    %v822 = vadd.f32 %v481, %v821
    %v823 = vpop.f32.mrb[0].mxu0
    %v824 = vadd.f32 %v485, %v823
    %825 = vdwg.mxu0
    %826 = vmatprep.subr.bf16.mxu0 %v649
    %827 = vmatpush1.bf16.msra.mxu0 %v648
    %828 = vmatprep.subr.bf16.mxu0 %v655
    %829 = vmatpush1.bf16.msra.mxu0 %v654
    %830 = vmatprep.subr.bf16.mxu0 %v661
    %831 = vmatpush1.bf16.msra.mxu0 %v660
    %832 = vmatprep.subr.bf16.mxu0 %v667
    %833 = vmatpush1.bf16.msra.mxu0 %v666
    %834 = vmatprep.subr.bf16.mxu0 %v673
    %835 = vmatpush1.bf16.msra.mxu0 %v672
    %836 = vmatprep.subr.bf16.mxu0 %v679
    %837 = vmatpush1.bf16.msra.mxu0 %v678
    %838 = vmatprep.subr.bf16.mxu0 %v685
    %839 = vmatpush1.bf16.msra.mxu0 %v684
    %840 = vmatprep.subr.bf16.mxu0 %v691
    %841 = vmatpush1.bf16.msra.mxu0 %v690
    %842 = vmatprep.subr.bf16.mxu0 0
    %843 = vmatpush1.bf16.msra.mxu0 0
    %844 = vmatprep.subr.bf16.mxu0 0
    %845 = vmatpush1.bf16.msra.mxu0 0
    %846 = vmatprep.subr.bf16.mxu0 0
    %847 = vmatpush1.bf16.msra.mxu0 0
    %848 = vmatprep.subr.bf16.mxu0 0
    %849 = vmatpush1.bf16.msra.mxu0 0
    %850 = vmatprep.subr.bf16.mxu0 0
    %851 = vmatpush1.bf16.msra.mxu0 0
    %852 = vmatprep.subr.bf16.mxu0 0
    %853 = vmatpush1.bf16.msra.mxu0 0
    %854 = vmatprep.subr.bf16.mxu0 0
    %855 = vmatpush1.bf16.msra.mxu0 0
    %856 = vmatprep.subr.bf16.mxu0 0
    %857 = vmatpush1.bf16.msra.mxu0 0
    %858 = vmatprep.mubr.bf16.mxu0 0
    %859 = vmatmul.mubr.bf16.gmra.mrb[0].mxu0 %v419
    %v860 = vpop.f32.mrb[0].mxu0
    %v861 = vadd.f32 %v489, %v860
    %v862 = vpop.f32.mrb[0].mxu0
    %v863 = vadd.f32 %v493, %v862
    %v864 = vpop.f32.mrb[0].mxu0
    %v865 = vadd.f32 %v489, %v864
    %v866 = vpop.f32.mrb[0].mxu0
    %v867 = vadd.f32 %v493, %v866
    %868 = vdwg.mxu0
    %v869 = vld [vmem:[#allocation4] sm:$0xf]
    %v870 = vld [vmem:[#allocation4 + $0x4] sm:$0xf]
    %v871 = vld [vmem:[#allocation4 + $0x8] sm:$0xf]
    %v872 = vld [vmem:[#allocation4 + $0xc] sm:$0xf]
    %v873 = vld [vmem:[#allocation4 + $0x10] sm:$0xf]
    %v874 = vld [vmem:[#allocation4 + $0x14] sm:$0xf]
    %v875 = vld [vmem:[#allocation4 + $0x18] sm:$0xf]
    %v876 = vld [vmem:[#allocation4 + $0x1c] sm:$0xf]
    %v877 = vld [vmem:[#allocation4 + $0x20] sm:$0xf]
    %v878 = vld [vmem:[#allocation4 + $0x24] sm:$0xf]
    %v879 = vld [vmem:[#allocation4 + $0x28] sm:$0xf]
    %v880 = vld [vmem:[#allocation4 + $0x2c] sm:$0xf]
    %v881 = vld [vmem:[#allocation4 + $0x30] sm:$0xf]
    %v882 = vld [vmem:[#allocation4 + $0x34] sm:$0xf]
    %v883 = vld [vmem:[#allocation4 + $0x38] sm:$0xf]
    %v884 = vld [vmem:[#allocation4 + $0x3c] sm:$0xf]
    %v885 = vld [vmem:[#allocation4 + $0x40] sm:$0xf]
    %v886 = vld [vmem:[#allocation4 + $0x44] sm:$0xf]
    %v887 = vld [vmem:[#allocation4 + $0x48] sm:$0xf]
    %v888 = vld [vmem:[#allocation4 + $0x4c] sm:$0xf]
    %v889 = vld [vmem:[#allocation4 + $0x50] sm:$0xf]
    %v890 = vld [vmem:[#allocation4 + $0x54] sm:$0xf]
    %v891 = vld [vmem:[#allocation4 + $0x58] sm:$0xf]
    %v892 = vld [vmem:[#allocation4 + $0x5c] sm:$0xf]
    %v893 = vld [vmem:[#allocation4 + $0x60] sm:$0xf]
    %v894 = vld [vmem:[#allocation4 + $0x64] sm:$0xf]
    %v895 = vld [vmem:[#allocation4 + $0x68] sm:$0xf]
    %v896 = vld [vmem:[#allocation4 + $0x6c] sm:$0xf]
    %v897 = vld [vmem:[#allocation4 + $0x70] sm:$0xf]
    %v898 = vld [vmem:[#allocation4 + $0x74] sm:$0xf]
    %v899 = vld [vmem:[#allocation4 + $0x78] sm:$0xf]
    %v900 = vld [vmem:[#allocation4 + $0x7c] sm:$0xf]
    %v901 = vld [vmem:[%s12] sm:$0x1]
    %v902 = vmul.f32 %v775, 0.25
    %v903 = vmul.f32 %v779, 0.25
    %v904 = vpack.c.bf16 %v903, %v902
    %v905 = vpack.c.bf16 %v822, %v818
    %v906 = vpack.c.bf16 %v865, %v861
    %907 = vmatprep.subr.bf16.mxu0 0
    %908 = vmatpush1.bf16.xpose.msra.mxu0 %v905
    %909 = vmatprep.subr.bf16.mxu0 0
    %910 = vmatpush1.bf16.xpose.msra.mxu0 0
    %911 = vmatprep.subr.bf16.mxu0 0
    %912 = vmatpush1.bf16.xpose.msra.mxu0 0
    %913 = vmatprep.subr.bf16.mxu0 0
    %914 = vmatpush1.bf16.xpose.msra.mxu0 0
    %915 = vmatprep.subr.bf16.mxu0 0
    %916 = vmatpush1.bf16.xpose.msra.mxu0 0
    %917 = vmatprep.subr.bf16.mxu0 0
    %918 = vmatpush1.bf16.xpose.msra.mxu0 0
    %919 = vmatprep.subr.bf16.mxu0 0
    %920 = vmatpush1.bf16.xpose.msra.mxu0 0
    %921 = vmatprep.subr.bf16.mxu0 0
    %922 = vmatpush1.bf16.xpose.msra.mxu0 0
    %923 = vmatprep.subr.bf16.mxu0 0
    %924 = vmatpush1.bf16.xpose.msra.mxu0 0
    %925 = vmatprep.subr.bf16.mxu0 0
    %926 = vmatpush1.bf16.xpose.msra.mxu0 0
    %927 = vmatprep.subr.bf16.mxu0 0
    %928 = vmatpush1.bf16.xpose.msra.mxu0 0
    %929 = vmatprep.subr.bf16.mxu0 0
    %930 = vmatpush1.bf16.xpose.msra.mxu0 0
    %931 = vmatprep.subr.bf16.mxu0 0
    %932 = vmatpush1.bf16.xpose.msra.mxu0 0
    %933 = vmatprep.subr.bf16.mxu0 0
    %934 = vmatpush1.bf16.xpose.msra.mxu0 0
    %935 = vmatprep.subr.bf16.mxu0 0
    %936 = vmatpush1.bf16.xpose.msra.mxu0 0
    %937 = vmatprep.subr.bf16.mxu0 0
    %938 = vmatpush1.bf16.xpose.msra.mxu0 0
    %939 = vmatprep.mubr.bf16.mxu0 0
    %940 = vmatmul.mubr.bf16.gmra.mrb[0].mxu0 %v904
    %v941 = vpop.f32.mrb[0].mxu0
    %v942 = vadd.f32 0.0, %v941
    %v943 = vpop.f32.mrb[0].mxu0
    %v944 = vpop.f32.mrb[0].mxu0
    %v945 = vadd.f32 0.0, %v944
    %v946 = vpop.f32.mrb[0].mxu0
    %947 = vdwg.mxu0
    %v948 = vsel %vm282, %v942, -inf
    %949 = vmax.xlane.f32.xlu0 %v948
    %v950 = vpop.xlane.xlu0 %949
    %v951 = vsel %vm282, %v945, -inf
    %952 = vmax.xlane.f32.xlu0 %v951
    %v953 = vpop.xlane.xlu0 %952
    %v954 = vsub.f32 %v942, %v950
    %v955 = vsub.f32 %v945, %v953
    %v956 = vmul.f32 %v954, 1.442695
    %v957 = vpow.pop %v956
    %v958 = vmul.f32 %v955, 1.442695
    %v959 = vpow.pop %v958
    %v960 = vsel %vm282, %v957, 0.0
    %961 = vadd.xlane.f32.xlu0 %v960
    %v962 = vpop.xlane.xlu0 %961
    %v963 = vsel %vm282, %v959, 0.0
    %964 = vadd.xlane.f32.xlu0 %v963
    %v965 = vpop.xlane.xlu0 %964
    %v966 = vrcp.pop %v962
    %v967 = vrcp.pop %v965
    %v968 = vpack.c.bf16 %v959, %v957
    %v970 = vsel %vm282, %v968, 0
    %972 = vmatprep.subr.bf16.mxu0 0
    %973 = vmatpush1.bf16.msra.mxu0 %v906
    %974 = vmatprep.subr.bf16.mxu0 0
    %975 = vmatpush1.bf16.msra.mxu0 0
    %976 = vmatprep.subr.bf16.mxu0 0
    %977 = vmatpush1.bf16.msra.mxu0 0
    %978 = vmatprep.subr.bf16.mxu0 0
    %979 = vmatpush1.bf16.msra.mxu0 0
    %980 = vmatprep.subr.bf16.mxu0 0
    %981 = vmatpush1.bf16.msra.mxu0 0
    %982 = vmatprep.subr.bf16.mxu0 0
    %983 = vmatpush1.bf16.msra.mxu0 0
    %984 = vmatprep.subr.bf16.mxu0 0
    %985 = vmatpush1.bf16.msra.mxu0 0
    %986 = vmatprep.subr.bf16.mxu0 0
    %987 = vmatpush1.bf16.msra.mxu0 0
    %988 = vmatprep.subr.bf16.mxu0 0
    %989 = vmatpush1.bf16.msra.mxu0 0
    %990 = vmatprep.subr.bf16.mxu0 0
    %991 = vmatpush1.bf16.msra.mxu0 0
    %992 = vmatprep.subr.bf16.mxu0 0
    %993 = vmatpush1.bf16.msra.mxu0 0
    %994 = vmatprep.subr.bf16.mxu0 0
    %995 = vmatpush1.bf16.msra.mxu0 0
    %996 = vmatprep.subr.bf16.mxu0 0
    %997 = vmatpush1.bf16.msra.mxu0 0
    %998 = vmatprep.subr.bf16.mxu0 0
    %999 = vmatpush1.bf16.msra.mxu0 0
    %1000 = vmatprep.subr.bf16.mxu0 0
    %1001 = vmatpush1.bf16.msra.mxu0 0
    %1002 = vmatprep.subr.bf16.mxu0 0
    %1003 = vmatpush1.bf16.msra.mxu0 0
    %1004 = vmatprep.mubr.bf16.mxu0 0
    %1005 = vmatmul.mubr.bf16.gmra.mrb[0].mxu0 %v970
    %v1006 = vpop.f32.mrb[0].mxu0
    %v1007 = vadd.f32 0.0, %v1006
    %v1008 = vpop.f32.mrb[0].mxu0
    %v1009 = vpop.f32.mrb[0].mxu0
    %v1010 = vadd.f32 0.0, %v1009
    %v1011 = vpop.f32.mrb[0].mxu0
    %1012 = vdwg.mxu0
    %v1013 = vmul.f32 %v1007, %v966
    %v1014 = vmul.f32 %v1010, %v967
    %v1015 = vpack.c.bf16 %v1014, %v1013
    %v1032 = vunpack.c.l.b16 %v869
    %v1033 = vunpack.c.l.b16 %v870
    %v1034 = vunpack.c.l.b16 %v871
    %v1035 = vunpack.c.l.b16 %v872
    %v1036 = vunpack.c.l.b16 %v873
    %v1037 = vunpack.c.l.b16 %v874
    %v1038 = vunpack.c.l.b16 %v875
    %v1039 = vunpack.c.l.b16 %v876
    %v1040 = vunpack.c.l.b16 %v877
    %v1041 = vunpack.c.l.b16 %v878
    %v1042 = vunpack.c.l.b16 %v879
    %v1043 = vunpack.c.l.b16 %v880
    %v1044 = vunpack.c.l.b16 %v881
    %v1045 = vunpack.c.l.b16 %v882
    %v1046 = vunpack.c.l.b16 %v883
    %v1047 = vunpack.c.l.b16 %v884
    %v1048 = vpack.c.b16 %v1033, %v1032
    %v1049 = vpack.c.b16 %v1035, %v1034
    %v1050 = vpack.c.b16 %v1037, %v1036
    %v1051 = vpack.c.b16 %v1039, %v1038
    %v1052 = vpack.c.b16 %v1041, %v1040
    %v1053 = vpack.c.b16 %v1043, %v1042
    %v1054 = vpack.c.b16 %v1045, %v1044
    %v1055 = vpack.c.b16 %v1047, %v1046
    %1064 = vmatprep.subr.bf16.mxu0 0
    %1065 = vmatpush1.bf16.msra.mxu0 %v1048
    %1066 = vmatprep.subr.bf16.mxu0 0
    %1067 = vmatpush1.bf16.msra.mxu0 %v1049
    %1068 = vmatprep.subr.bf16.mxu0 0
    %1069 = vmatpush1.bf16.msra.mxu0 %v1050
    %1070 = vmatprep.subr.bf16.mxu0 0
    %1071 = vmatpush1.bf16.msra.mxu0 %v1051
    %1072 = vmatprep.subr.bf16.mxu0 0
    %1073 = vmatpush1.bf16.msra.mxu0 %v1052
    %1074 = vmatprep.subr.bf16.mxu0 0
    %1075 = vmatpush1.bf16.msra.mxu0 %v1053
    %1076 = vmatprep.subr.bf16.mxu0 0
    %1077 = vmatpush1.bf16.msra.mxu0 %v1054
    %1078 = vmatprep.subr.bf16.mxu0 0
    %1079 = vmatpush1.bf16.msra.mxu0 %v1055
    %1080 = vmatprep.subr.bf16.mxu0 0
    %1081 = vmatpush1.bf16.msra.mxu0 0
    %1082 = vmatprep.subr.bf16.mxu0 0
    %1083 = vmatpush1.bf16.msra.mxu0 0
    %1084 = vmatprep.subr.bf16.mxu0 0
    %1085 = vmatpush1.bf16.msra.mxu0 0
    %1086 = vmatprep.subr.bf16.mxu0 0
    %1087 = vmatpush1.bf16.msra.mxu0 0
    %1088 = vmatprep.subr.bf16.mxu0 0
    %1089 = vmatpush1.bf16.msra.mxu0 0
    %1090 = vmatprep.subr.bf16.mxu0 0
    %1091 = vmatpush1.bf16.msra.mxu0 0
    %1092 = vmatprep.subr.bf16.mxu0 0
    %1093 = vmatpush1.bf16.msra.mxu0 0
    %1094 = vmatprep.subr.bf16.mxu0 0
    %1095 = vmatpush1.bf16.msra.mxu0 0
    %1096 = vmatprep.mubr.bf16.mxu0 0
    %1097 = vmatmul.mubr.bf16.gmra.mrb[0].mxu0 %v1015
    %v1098 = vpop.f32.mrb[0].mxu0
    %v1099 = vadd.f32 0.0, %v1098
    %v1100 = vpop.f32.mrb[0].mxu0
    %v1101 = vpop.f32.mrb[0].mxu0
    %v1102 = vadd.f32 0.0, %v1101
    %v1103 = vpop.f32.mrb[0].mxu0
    %1104 = vdwg.mxu0
    %v1106 = vlaneseq
    %v1107 = vshrl.u32 %v1106, 7
    %v1108 = vsub.s32 0, %v1107
    %v1109 = vrot.slane %v901, %v1108
    %v1111 = vadd.f32 %v1109, %v1099
    %v1112 = vadd.f32 %v1109, %v1102
    %v1113 = vmul.f32 %v777, 0.25
    %v1114 = vmul.f32 %v781, 0.25
    %v1115 = vpack.c.bf16 %v1114, %v1113
    %v1116 = vpack.c.bf16 %v824, %v820
    %v1117 = vpack.c.bf16 %v867, %v863
    %1118 = vmatprep.subr.bf16.mxu0 0
    %1119 = vmatpush1.bf16.xpose.msra.mxu0 %v1116
    %1120 = vmatprep.subr.bf16.mxu0 0
    %1121 = vmatpush1.bf16.xpose.msra.mxu0 0
    %1122 = vmatprep.subr.bf16.mxu0 0
    %1123 = vmatpush1.bf16.xpose.msra.mxu0 0
    %1124 = vmatprep.subr.bf16.mxu0 0
    %1125 = vmatpush1.bf16.xpose.msra.mxu0 0
    %1126 = vmatprep.subr.bf16.mxu0 0
    %1127 = vmatpush1.bf16.xpose.msra.mxu0 0
    %1128 = vmatprep.subr.bf16.mxu0 0
    %1129 = vmatpush1.bf16.xpose.msra.mxu0 0
    %1130 = vmatprep.subr.bf16.mxu0 0
    %1131 = vmatpush1.bf16.xpose.msra.mxu0 0
    %1132 = vmatprep.subr.bf16.mxu0 0
    %1133 = vmatpush1.bf16.xpose.msra.mxu0 0
    %1134 = vmatprep.subr.bf16.mxu0 0
    %1135 = vmatpush1.bf16.xpose.msra.mxu0 0
    %1136 = vmatprep.subr.bf16.mxu0 0
    %1137 = vmatpush1.bf16.xpose.msra.mxu0 0
    %1138 = vmatprep.subr.bf16.mxu0 0
    %1139 = vmatpush1.bf16.xpose.msra.mxu0 0
    %1140 = vmatprep.subr.bf16.mxu0 0
    %1141 = vmatpush1.bf16.xpose.msra.mxu0 0
    %1142 = vmatprep.subr.bf16.mxu0 0
    %1143 = vmatpush1.bf16.xpose.msra.mxu0 0
    %1144 = vmatprep.subr.bf16.mxu0 0
    %1145 = vmatpush1.bf16.xpose.msra.mxu0 0
    %1146 = vmatprep.subr.bf16.mxu0 0
    %1147 = vmatpush1.bf16.xpose.msra.mxu0 0
    %1148 = vmatprep.subr.bf16.mxu0 0
    %1149 = vmatpush1.bf16.xpose.msra.mxu0 0
    %1150 = vmatprep.mubr.bf16.mxu0 0
    %1151 = vmatmul.mubr.bf16.gmra.mrb[0].mxu0 %v1115
    %v1152 = vpop.f32.mrb[0].mxu0
    %v1153 = vadd.f32 0.0, %v1152
    %v1154 = vpop.f32.mrb[0].mxu0
    %v1155 = vpop.f32.mrb[0].mxu0
    %v1156 = vadd.f32 0.0, %v1155
    %v1157 = vpop.f32.mrb[0].mxu0
    %1158 = vdwg.mxu0
    %v1159 = vsel %vm282, %v1153, -inf
    %1160 = vmax.xlane.f32.xlu0 %v1159
    %v1161 = vpop.xlane.xlu0 %1160
    %v1162 = vsel %vm282, %v1156, -inf
    %1163 = vmax.xlane.f32.xlu0 %v1162
    %v1164 = vpop.xlane.xlu0 %1163
    %v1165 = vsub.f32 %v1153, %v1161
    %v1166 = vsub.f32 %v1156, %v1164
    %v1167 = vmul.f32 %v1165, 1.442695
    %v1168 = vpow.pop %v1167
    %v1169 = vmul.f32 %v1166, 1.442695
    %v1170 = vpow.pop %v1169
    %v1171 = vsel %vm282, %v1168, 0.0
    %1172 = vadd.xlane.f32.xlu0 %v1171
    %v1173 = vpop.xlane.xlu0 %1172
    %v1174 = vsel %vm282, %v1170, 0.0
    %1175 = vadd.xlane.f32.xlu0 %v1174
    %v1176 = vpop.xlane.xlu0 %1175
    %v1177 = vrcp.pop %v1173
    %v1178 = vrcp.pop %v1176
    %v1179 = vpack.c.bf16 %v1170, %v1168
    %v1181 = vsel %vm282, %v1179, 0
    %1183 = vmatprep.subr.bf16.mxu0 0
    %1184 = vmatpush1.bf16.msra.mxu0 %v1117
    %1185 = vmatprep.subr.bf16.mxu0 0
    %1186 = vmatpush1.bf16.msra.mxu0 0
    %1187 = vmatprep.subr.bf16.mxu0 0
    %1188 = vmatpush1.bf16.msra.mxu0 0
    %1189 = vmatprep.subr.bf16.mxu0 0
    %1190 = vmatpush1.bf16.msra.mxu0 0
    %1191 = vmatprep.subr.bf16.mxu0 0
    %1192 = vmatpush1.bf16.msra.mxu0 0
    %1193 = vmatprep.subr.bf16.mxu0 0
    %1194 = vmatpush1.bf16.msra.mxu0 0
    %1195 = vmatprep.subr.bf16.mxu0 0
    %1196 = vmatpush1.bf16.msra.mxu0 0
    %1197 = vmatprep.subr.bf16.mxu0 0
    %1198 = vmatpush1.bf16.msra.mxu0 0
    %1199 = vmatprep.subr.bf16.mxu0 0
    %1200 = vmatpush1.bf16.msra.mxu0 0
    %1201 = vmatprep.subr.bf16.mxu0 0
    %1202 = vmatpush1.bf16.msra.mxu0 0
    %1203 = vmatprep.subr.bf16.mxu0 0
    %1204 = vmatpush1.bf16.msra.mxu0 0
    %1205 = vmatprep.subr.bf16.mxu0 0
    %1206 = vmatpush1.bf16.msra.mxu0 0
    %1207 = vmatprep.subr.bf16.mxu0 0
    %1208 = vmatpush1.bf16.msra.mxu0 0
    %1209 = vmatprep.subr.bf16.mxu0 0
    %1210 = vmatpush1.bf16.msra.mxu0 0
    %1211 = vmatprep.subr.bf16.mxu0 0
    %1212 = vmatpush1.bf16.msra.mxu0 0
    %1213 = vmatprep.subr.bf16.mxu0 0
    %1214 = vmatpush1.bf16.msra.mxu0 0
    %1215 = vmatprep.mubr.bf16.mxu0 0
    %1216 = vmatmul.mubr.bf16.gmra.mrb[0].mxu0 %v1181
    %v1217 = vpop.f32.mrb[0].mxu0
    %v1218 = vadd.f32 0.0, %v1217
    %v1219 = vpop.f32.mrb[0].mxu0
    %v1220 = vpop.f32.mrb[0].mxu0
    %v1221 = vadd.f32 0.0, %v1220
    %v1222 = vpop.f32.mrb[0].mxu0
    %1223 = vdwg.mxu0
    %v1224 = vmul.f32 %v1218, %v1177
    %v1225 = vmul.f32 %v1221, %v1178
    %v1226 = vpack.c.bf16 %v1225, %v1224
    %v1243 = vunpack.c.l.b16 %v885
    %v1244 = vunpack.c.l.b16 %v886
    %v1245 = vunpack.c.l.b16 %v887
    %v1246 = vunpack.c.l.b16 %v888
    %v1247 = vunpack.c.l.b16 %v889
    %v1248 = vunpack.c.l.b16 %v890
    %v1249 = vunpack.c.l.b16 %v891
    %v1250 = vunpack.c.l.b16 %v892
    %v1251 = vunpack.c.l.b16 %v893
    %v1252 = vunpack.c.l.b16 %v894
    %v1253 = vunpack.c.l.b16 %v895
    %v1254 = vunpack.c.l.b16 %v896
    %v1255 = vunpack.c.l.b16 %v897
    %v1256 = vunpack.c.l.b16 %v898
    %v1257 = vunpack.c.l.b16 %v899
    %v1258 = vunpack.c.l.b16 %v900
    %v1259 = vpack.c.b16 %v1244, %v1243
    %v1260 = vpack.c.b16 %v1246, %v1245
    %v1261 = vpack.c.b16 %v1248, %v1247
    %v1262 = vpack.c.b16 %v1250, %v1249
    %v1263 = vpack.c.b16 %v1252, %v1251
    %v1264 = vpack.c.b16 %v1254, %v1253
    %v1265 = vpack.c.b16 %v1256, %v1255
    %v1266 = vpack.c.b16 %v1258, %v1257
    %1275 = vmatprep.subr.bf16.mxu0 0
    %1276 = vmatpush1.bf16.msra.mxu0 %v1259
    %1277 = vmatprep.subr.bf16.mxu0 0
    %1278 = vmatpush1.bf16.msra.mxu0 %v1260
    %1279 = vmatprep.subr.bf16.mxu0 0
    %1280 = vmatpush1.bf16.msra.mxu0 %v1261
    %1281 = vmatprep.subr.bf16.mxu0 0
    %1282 = vmatpush1.bf16.msra.mxu0 %v1262
    %1283 = vmatprep.subr.bf16.mxu0 0
    %1284 = vmatpush1.bf16.msra.mxu0 %v1263
    %1285 = vmatprep.subr.bf16.mxu0 0
    %1286 = vmatpush1.bf16.msra.mxu0 %v1264
    %1287 = vmatprep.subr.bf16.mxu0 0
    %1288 = vmatpush1.bf16.msra.mxu0 %v1265
    %1289 = vmatprep.subr.bf16.mxu0 0
    %1290 = vmatpush1.bf16.msra.mxu0 %v1266
    %1291 = vmatprep.subr.bf16.mxu0 0
    %1292 = vmatpush1.bf16.msra.mxu0 0
    %1293 = vmatprep.subr.bf16.mxu0 0
    %1294 = vmatpush1.bf16.msra.mxu0 0
    %1295 = vmatprep.subr.bf16.mxu0 0
    %1296 = vmatpush1.bf16.msra.mxu0 0
    %1297 = vmatprep.subr.bf16.mxu0 0
    %1298 = vmatpush1.bf16.msra.mxu0 0
    %1299 = vmatprep.subr.bf16.mxu0 0
    %1300 = vmatpush1.bf16.msra.mxu0 0
    %1301 = vmatprep.subr.bf16.mxu0 0
    %1302 = vmatpush1.bf16.msra.mxu0 0
    %1303 = vmatprep.subr.bf16.mxu0 0
    %1304 = vmatpush1.bf16.msra.mxu0 0
    %1305 = vmatprep.subr.bf16.mxu0 0
    %1306 = vmatpush1.bf16.msra.mxu0 0
    %1307 = vmatprep.mubr.bf16.mxu0 0
    %1308 = vmatmul.mubr.bf16.gmra.mrb[0].mxu0 %v1226
    %v1309 = vpop.f32.mrb[0].mxu0
    %v1310 = vadd.f32 0.0, %v1309
    %v1311 = vpop.f32.mrb[0].mxu0
    %v1312 = vpop.f32.mrb[0].mxu0
    %v1313 = vadd.f32 0.0, %v1312
    %v1314 = vpop.f32.mrb[0].mxu0
    %1315 = vdwg.mxu0
    %v1316 = vadd.f32 %v1111, %v1310
    %v1317 = vadd.f32 %v1112, %v1313
    %v1318 = vadd.f32 %v417, %v1316
    %v1319 = vadd.f32 %v418, %v1317
    %v1320 = vld [vmem:[%s13] sm:$0x1]
    %v1321 = vld [vmem:[%s14] sm:$0x1]
    %1322 = vadd.xlane.f32.xlu0 %v1318
    %v1323 = vpop.xlane.xlu0 %1322
    %1324 = vadd.xlane.f32.xlu0 %v1319
    %v1325 = vpop.xlane.xlu0 %1324
    %v1326 = vmul.f32 %v1323, 0.03125
    %v1327 = vmul.f32 %v1325, 0.03125
    %v1328 = vsub.f32 %v1318, %v1326
    %v1329 = vsub.f32 %v1319, %v1327
    %v1330 = vmul.f32 %v1328, %v385
    %v1331 = vmul.f32 %v1329, %v385
    %v1332 = vmul.f32 %v1330, %v1330
    %v1333 = vmul.f32 %v1331, %v1331
    %1334 = vadd.xlane.f32.xlu0 %v1332
    %v1335 = vpop.xlane.xlu0 %1334
    %1336 = vadd.xlane.f32.xlu0 %v1333
    %v1337 = vpop.xlane.xlu0 %1336
    %v1338 = vmul.f32 %v1335, 0.03125
    %v1339 = vmul.f32 %v1337, 0.03125
    %v1340 = vadd.f32 %v1338, 1e-05
    %v1341 = vadd.f32 %v1339, 1e-05
    %v1342 = vrsqrt.pop %v1340
    %v1343 = vrsqrt.pop %v1341
    %v1344 = vmul.f32 %v1328, %v1342
    %v1345 = vmul.f32 %v1329, %v1343
    %v1347 = vlaneseq
    %v1348 = vshrl.u32 %v1347, 7
    %v1349 = vsub.s32 0, %v1348
    %v1350 = vrot.slane %v1320, %v1349
    %v1352 = vmul.f32 %v1344, %v1350
    %v1353 = vmul.f32 %v1345, %v1350
    %v1355 = vlaneseq
    %v1356 = vshrl.u32 %v1355, 7
    %v1357 = vsub.s32 0, %v1356
    %v1358 = vrot.slane %v1321, %v1357
    %v1360 = vadd.f32 %v1352, %v1358
    %v1361 = vadd.f32 %v1353, %v1358
    %v1362 = vpack.c.bf16 %v1361, %v1360
    %v1363 = vld [vmem:[#allocation6] sm:$0xf]
    %v1364 = vld [vmem:[#allocation6 + $0x4] sm:$0xf]
    %v1365 = vld [vmem:[#allocation6 + $0x8] sm:$0xf]
    %v1366 = vld [vmem:[#allocation6 + $0xc] sm:$0xf]
    %v1367 = vld [vmem:[#allocation6 + $0x10] sm:$0xf]
    %v1368 = vld [vmem:[#allocation6 + $0x14] sm:$0xf]
    %v1369 = vld [vmem:[#allocation6 + $0x18] sm:$0xf]
    %v1370 = vld [vmem:[#allocation6 + $0x1c] sm:$0xf]
    %v1371 = vld [vmem:[#allocation6 + $0x20] sm:$0xf]
    %v1372 = vld [vmem:[#allocation6 + $0x24] sm:$0xf]
    %v1373 = vld [vmem:[#allocation6 + $0x28] sm:$0xf]
    %v1374 = vld [vmem:[#allocation6 + $0x2c] sm:$0xf]
    %v1375 = vld [vmem:[#allocation6 + $0x30] sm:$0xf]
    %v1376 = vld [vmem:[#allocation6 + $0x34] sm:$0xf]
    %v1377 = vld [vmem:[#allocation6 + $0x38] sm:$0xf]
    %v1378 = vld [vmem:[#allocation6 + $0x3c] sm:$0xf]
    %v1379 = vld [vmem:[%s16] sm:$0x1]
    %v1381 = vlaneseq
    %v1382 = vshrl.u32 %v1381, 7
    %v1383 = vsub.s32 0, %v1382
    %v1384 = vrot.slane %v1379, %v1383
    %v1402 = vunpack.c.l.b16 %v1363
    %v1403 = vunpack.c.l.b16 %v1364
    %v1404 = vunpack.c.l.b16 %v1365
    %v1405 = vunpack.c.l.b16 %v1366
    %v1406 = vunpack.c.l.b16 %v1367
    %v1407 = vunpack.c.l.b16 %v1368
    %v1408 = vunpack.c.l.b16 %v1369
    %v1409 = vunpack.c.l.b16 %v1370
    %v1410 = vunpack.c.l.b16 %v1371
    %v1411 = vunpack.c.l.b16 %v1372
    %v1412 = vunpack.c.l.b16 %v1373
    %v1413 = vunpack.c.l.b16 %v1374
    %v1414 = vunpack.c.l.b16 %v1375
    %v1415 = vunpack.c.l.b16 %v1376
    %v1416 = vunpack.c.l.b16 %v1377
    %v1417 = vunpack.c.l.b16 %v1378
    %v1418 = vpack.c.b16 %v1403, %v1402
    %v1419 = vpack.c.b16 %v1405, %v1404
    %v1420 = vpack.c.b16 %v1407, %v1406
    %v1421 = vpack.c.b16 %v1409, %v1408
    %v1422 = vpack.c.b16 %v1411, %v1410
    %v1423 = vpack.c.b16 %v1413, %v1412
    %v1424 = vpack.c.b16 %v1415, %v1414
    %v1425 = vpack.c.b16 %v1417, %v1416
    %1434 = vmatprep.subr.bf16.mxu0 0
    %1435 = vmatpush1.bf16.msra.mxu0 %v1418
    %1436 = vmatprep.subr.bf16.mxu0 0
    %1437 = vmatpush1.bf16.msra.mxu0 %v1419
    %1438 = vmatprep.subr.bf16.mxu0 0
    %1439 = vmatpush1.bf16.msra.mxu0 %v1420
    %1440 = vmatprep.subr.bf16.mxu0 0
    %1441 = vmatpush1.bf16.msra.mxu0 %v1421
    %1442 = vmatprep.subr.bf16.mxu0 0
    %1443 = vmatpush1.bf16.msra.mxu0 %v1422
    %1444 = vmatprep.subr.bf16.mxu0 0
    %1445 = vmatpush1.bf16.msra.mxu0 %v1423
    %1446 = vmatprep.subr.bf16.mxu0 0
    %1447 = vmatpush1.bf16.msra.mxu0 %v1424
    %1448 = vmatprep.subr.bf16.mxu0 0
    %1449 = vmatpush1.bf16.msra.mxu0 %v1425
    %1450 = vmatprep.subr.bf16.mxu0 0
    %1451 = vmatpush1.bf16.msra.mxu0 0
    %1452 = vmatprep.subr.bf16.mxu0 0
    %1453 = vmatpush1.bf16.msra.mxu0 0
    %1454 = vmatprep.subr.bf16.mxu0 0
    %1455 = vmatpush1.bf16.msra.mxu0 0
    %1456 = vmatprep.subr.bf16.mxu0 0
    %1457 = vmatpush1.bf16.msra.mxu0 0
    %1458 = vmatprep.subr.bf16.mxu0 0
    %1459 = vmatpush1.bf16.msra.mxu0 0
    %1460 = vmatprep.subr.bf16.mxu0 0
    %1461 = vmatpush1.bf16.msra.mxu0 0
    %1462 = vmatprep.subr.bf16.mxu0 0
    %1463 = vmatpush1.bf16.msra.mxu0 0
    %1464 = vmatprep.subr.bf16.mxu0 0
    %1465 = vmatpush1.bf16.msra.mxu0 0
    %1466 = vmatprep.mubr.bf16.mxu0 0
    %1467 = vmatmul.mubr.bf16.gmra.mrb[0].mxu0 %v1362
    %v1468 = vpop.f32.mrb[0].mxu0
    %v1469 = vadd.f32 %v1384, %v1468
    %v1470 = vpop.f32.mrb[0].mxu0
    %v1471 = vpop.f32.mrb[0].mxu0
    %v1472 = vadd.f32 %v1384, %v1471
    %v1473 = vpop.f32.mrb[0].mxu0
    %1474 = vdwg.mxu0
    %v1475 = vmax.f32 %v1469, 0.0
    %v1476 = vmax.f32 %v1472, 0.0
    %v1477 = vpack.c.bf16 %v1476, %v1475
    %v1478 = vld [vmem:[#allocation7] sm:$0xf]
    %v1479 = vld [vmem:[#allocation7 + $0x4] sm:$0xf]
    %v1480 = vld [vmem:[#allocation7 + $0x8] sm:$0xf]
    %v1481 = vld [vmem:[#allocation7 + $0xc] sm:$0xf]
    %v1482 = vld [vmem:[#allocation7 + $0x10] sm:$0xf]
    %v1483 = vld [vmem:[#allocation7 + $0x14] sm:$0xf]
    %v1484 = vld [vmem:[#allocation7 + $0x18] sm:$0xf]
    %v1485 = vld [vmem:[#allocation7 + $0x1c] sm:$0xf]
    %v1486 = vld [vmem:[#allocation7 + $0x20] sm:$0xf]
    %v1487 = vld [vmem:[#allocation7 + $0x24] sm:$0xf]
    %v1488 = vld [vmem:[#allocation7 + $0x28] sm:$0xf]
    %v1489 = vld [vmem:[#allocation7 + $0x2c] sm:$0xf]
    %v1490 = vld [vmem:[#allocation7 + $0x30] sm:$0xf]
    %v1491 = vld [vmem:[#allocation7 + $0x34] sm:$0xf]
    %v1492 = vld [vmem:[#allocation7 + $0x38] sm:$0xf]
    %v1493 = vld [vmem:[#allocation7 + $0x3c] sm:$0xf]
    %v1494 = vld [vmem:[%s18] sm:$0x1]
    %v1496 = vlaneseq
    %v1497 = vshrl.u32 %v1496, 7
    %v1498 = vsub.s32 0, %v1497
    %v1499 = vrot.slane %v1494, %v1498
    %v1517 = vunpack.c.l.b16 %v1478
    %v1518 = vunpack.c.l.b16 %v1479
    %v1519 = vunpack.c.l.b16 %v1480
    %v1520 = vunpack.c.l.b16 %v1481
    %v1521 = vunpack.c.l.b16 %v1482
    %v1522 = vunpack.c.l.b16 %v1483
    %v1523 = vunpack.c.l.b16 %v1484
    %v1524 = vunpack.c.l.b16 %v1485
    %v1525 = vunpack.c.l.b16 %v1486
    %v1526 = vunpack.c.l.b16 %v1487
    %v1527 = vunpack.c.l.b16 %v1488
    %v1528 = vunpack.c.l.b16 %v1489
    %v1529 = vunpack.c.l.b16 %v1490
    %v1530 = vunpack.c.l.b16 %v1491
    %v1531 = vunpack.c.l.b16 %v1492
    %v1532 = vunpack.c.l.b16 %v1493
    %v1533 = vpack.c.b16 %v1518, %v1517
    %v1534 = vpack.c.b16 %v1520, %v1519
    %v1535 = vpack.c.b16 %v1522, %v1521
    %v1536 = vpack.c.b16 %v1524, %v1523
    %v1537 = vpack.c.b16 %v1526, %v1525
    %v1538 = vpack.c.b16 %v1528, %v1527
    %v1539 = vpack.c.b16 %v1530, %v1529
    %v1540 = vpack.c.b16 %v1532, %v1531
    %1549 = vmatprep.subr.bf16.mxu0 0
    %1550 = vmatpush1.bf16.msra.mxu0 %v1533
    %1551 = vmatprep.subr.bf16.mxu0 0
    %1552 = vmatpush1.bf16.msra.mxu0 %v1534
    %1553 = vmatprep.subr.bf16.mxu0 0
    %1554 = vmatpush1.bf16.msra.mxu0 %v1535
    %1555 = vmatprep.subr.bf16.mxu0 0
    %1556 = vmatpush1.bf16.msra.mxu0 %v1536
    %1557 = vmatprep.subr.bf16.mxu0 0
    %1558 = vmatpush1.bf16.msra.mxu0 %v1537
    %1559 = vmatprep.subr.bf16.mxu0 0
    %1560 = vmatpush1.bf16.msra.mxu0 %v1538
    %1561 = vmatprep.subr.bf16.mxu0 0
    %1562 = vmatpush1.bf16.msra.mxu0 %v1539
    %1563 = vmatprep.subr.bf16.mxu0 0
    %1564 = vmatpush1.bf16.msra.mxu0 %v1540
    %1565 = vmatprep.subr.bf16.mxu0 0
    %1566 = vmatpush1.bf16.msra.mxu0 0
    %1567 = vmatprep.subr.bf16.mxu0 0
    %1568 = vmatpush1.bf16.msra.mxu0 0
    %1569 = vmatprep.subr.bf16.mxu0 0
    %1570 = vmatpush1.bf16.msra.mxu0 0
    %1571 = vmatprep.subr.bf16.mxu0 0
    %1572 = vmatpush1.bf16.msra.mxu0 0
    %1573 = vmatprep.subr.bf16.mxu0 0
    %1574 = vmatpush1.bf16.msra.mxu0 0
    %1575 = vmatprep.subr.bf16.mxu0 0
    %1576 = vmatpush1.bf16.msra.mxu0 0
    %1577 = vmatprep.subr.bf16.mxu0 0
    %1578 = vmatpush1.bf16.msra.mxu0 0
    %1579 = vmatprep.subr.bf16.mxu0 0
    %1580 = vmatpush1.bf16.msra.mxu0 0
    %1581 = vmatprep.mubr.bf16.mxu0 0
    %1582 = vmatmul.mubr.bf16.gmra.mrb[0].mxu0 %v1477
    %v1583 = vpop.f32.mrb[0].mxu0
    %v1584 = vadd.f32 %v1499, %v1583
    %v1585 = vpop.f32.mrb[0].mxu0
    %v1586 = vpop.f32.mrb[0].mxu0
    %v1587 = vadd.f32 %v1499, %v1586
    %v1588 = vpop.f32.mrb[0].mxu0
    %1589 = vdwg.mxu0
    %v1590 = vadd.f32 %v1360, %v1584
    %v1591 = vadd.f32 %v1361, %v1587
    %v1592 = vld [vmem:[%s19] sm:$0x1]
    %v1593 = vld [vmem:[%s20] sm:$0x1]
    %1594 = vadd.xlane.f32.xlu0 %v1590
    %v1595 = vpop.xlane.xlu0 %1594
    %1596 = vadd.xlane.f32.xlu0 %v1591
    %v1597 = vpop.xlane.xlu0 %1596
    %v1598 = vmul.f32 %v1595, 0.03125
    %v1599 = vmul.f32 %v1597, 0.03125
    %v1600 = vsub.f32 %v1590, %v1598
    %v1601 = vsub.f32 %v1591, %v1599
    %v1602 = vmul.f32 %v1600, %v385
    %v1603 = vmul.f32 %v1601, %v385
    %v1604 = vmul.f32 %v1602, %v1602
    %v1605 = vmul.f32 %v1603, %v1603
    %1606 = vadd.xlane.f32.xlu0 %v1604
    %v1607 = vpop.xlane.xlu0 %1606
    %1608 = vadd.xlane.f32.xlu0 %v1605
    %v1609 = vpop.xlane.xlu0 %1608
    %v1610 = vmul.f32 %v1607, 0.03125
    %v1611 = vmul.f32 %v1609, 0.03125
    %v1612 = vadd.f32 %v1610, 1e-05
    %v1613 = vadd.f32 %v1611, 1e-05
    %v1614 = vrsqrt.pop %v1612
    %v1615 = vrsqrt.pop %v1613
    %v1616 = vmul.f32 %v1600, %v1614
    %v1617 = vmul.f32 %v1601, %v1615
    %v1619 = vlaneseq
    %v1620 = vshrl.u32 %v1619, 7
    %v1621 = vsub.s32 0, %v1620
    %v1622 = vrot.slane %v1592, %v1621
    %v1624 = vmul.f32 %v1616, %v1622
    %v1625 = vmul.f32 %v1617, %v1622
    %v1627 = vlaneseq
    %v1628 = vshrl.u32 %v1627, 7
    %v1629 = vsub.s32 0, %v1628
    %v1630 = vrot.slane %v1593, %v1629
    %v1632 = vadd.f32 %v1624, %v1630
    %v1633 = vadd.f32 %v1625, %v1630
    %v1634 = vpack.c.bf16 %v1633, %v1632
    %s1635 = scalar_lea.vmem [#allocation2], 384
    %v1636 = vld [vmem:[%s1635] sm:$0xff]
    %v1637 = vld [vmem:[%s1635 + $0x8] sm:$0xff]
    %v1638 = vld [vmem:[%s1635 + $0x10] sm:$0xff]
    %v1639 = vld [vmem:[%s1635 + $0x18] sm:$0xff]
    %v1640 = vld [vmem:[%s1635 + $0x20] sm:$0xff]
    %v1641 = vld [vmem:[%s1635 + $0x28] sm:$0xff]
    %v1642 = vld [vmem:[%s1635 + $0x30] sm:$0xff]
    %v1643 = vld [vmem:[%s1635 + $0x38] sm:$0xff]
    %v1644 = vld [vmem:[%s1635 + $0x40] sm:$0xff]
    %v1645 = vld [vmem:[%s1635 + $0x48] sm:$0xff]
    %v1646 = vld [vmem:[%s1635 + $0x50] sm:$0xff]
    %v1647 = vld [vmem:[%s1635 + $0x58] sm:$0xff]
    %v1648 = vld [vmem:[%s1635 + $0x60] sm:$0xff]
    %v1649 = vld [vmem:[%s1635 + $0x68] sm:$0xff]
    %v1650 = vld [vmem:[%s1635 + $0x70] sm:$0xff]
    %v1651 = vld [vmem:[%s1635 + $0x78] sm:$0xff]
    %v1652 = vld [vmem:[%s1635 + $0x80] sm:$0xff]
    %v1653 = vld [vmem:[%s1635 + $0x88] sm:$0xff]
    %v1654 = vld [vmem:[%s1635 + $0x90] sm:$0xff]
    %v1655 = vld [vmem:[%s1635 + $0x98] sm:$0xff]
    %v1656 = vld [vmem:[%s1635 + $0xa0] sm:$0xff]
    %v1657 = vld [vmem:[%s1635 + $0xa8] sm:$0xff]
    %v1658 = vld [vmem:[%s1635 + $0xb0] sm:$0xff]
    %v1659 = vld [vmem:[%s1635 + $0xb8] sm:$0xff]
    %v1660 = vld [vmem:[%s1635 + $0xc0] sm:$0xff]
    %v1661 = vld [vmem:[%s1635 + $0xc8] sm:$0xff]
    %v1662 = vld [vmem:[%s1635 + $0xd0] sm:$0xff]
    %v1663 = vld [vmem:[%s1635 + $0xd8] sm:$0xff]
    %v1664 = vld [vmem:[%s1635 + $0xe0] sm:$0xff]
    %v1665 = vld [vmem:[%s1635 + $0xe8] sm:$0xff]
    %v1666 = vld [vmem:[%s1635 + $0xf0] sm:$0xff]
    %v1667 = vld [vmem:[%s1635 + $0xf8] sm:$0xff]
    %v1668 = vld [vmem:[%s1635 + $0x100] sm:$0xff]
    %v1669 = vld [vmem:[%s1635 + $0x108] sm:$0xff]
    %v1670 = vld [vmem:[%s1635 + $0x110] sm:$0xff]
    %v1671 = vld [vmem:[%s1635 + $0x118] sm:$0xff]
    %v1672 = vld [vmem:[%s1635 + $0x120] sm:$0xff]
    %v1673 = vld [vmem:[%s1635 + $0x128] sm:$0xff]
    %v1674 = vld [vmem:[%s1635 + $0x130] sm:$0xff]
    %v1675 = vld [vmem:[%s1635 + $0x138] sm:$0xff]
    %v1676 = vld [vmem:[%s1635 + $0x140] sm:$0xff]
    %v1677 = vld [vmem:[%s1635 + $0x148] sm:$0xff]
    %v1678 = vld [vmem:[%s1635 + $0x150] sm:$0xff]
    %v1679 = vld [vmem:[%s1635 + $0x158] sm:$0xff]
    %v1680 = vld [vmem:[%s1635 + $0x160] sm:$0xff]
    %v1681 = vld [vmem:[%s1635 + $0x168] sm:$0xff]
    %v1682 = vld [vmem:[%s1635 + $0x170] sm:$0xff]
    %v1683 = vld [vmem:[%s1635 + $0x178] sm:$0xff]
    %s1684 = scalar_lea.vmem %s10, 6
    %v1685 = vld [vmem:[%s1684] sm:$0x3f]
    %v1687 = vlaneseq
    %v1688 = vshrl.u32 %v1687, 7
    %v1689 = vsub.s32 0, %v1688
    %v1690 = vrot.slane %v1685, %v1689
    %v1691 = vlaneseq
    %v1692 = vshrl.u32 %v1691, 7
    %v1693 = vsub.s32 1, %v1692
    %v1694 = vrot.slane %v1685, %v1693
    %v1695 = vlaneseq
    %v1696 = vshrl.u32 %v1695, 7
    %v1697 = vsub.s32 2, %v1696
    %v1698 = vrot.slane %v1685, %v1697
    %v1699 = vlaneseq
    %v1700 = vshrl.u32 %v1699, 7
    %v1701 = vsub.s32 3, %v1700
    %v1702 = vrot.slane %v1685, %v1701
    %v1703 = vlaneseq
    %v1704 = vshrl.u32 %v1703, 7
    %v1705 = vsub.s32 4, %v1704
    %v1706 = vrot.slane %v1685, %v1705
    %v1707 = vlaneseq
    %v1708 = vshrl.u32 %v1707, 7
    %v1709 = vsub.s32 5, %v1708
    %v1710 = vrot.slane %v1685, %v1709
    %v1765 = vunpack.c.l.b16 %v1636
    %v1766 = vunpack.c.h.b16 %v1636
    %v1767 = vunpack.c.l.b16 %v1637
    %v1768 = vunpack.c.h.b16 %v1637
    %v1769 = vunpack.c.l.b16 %v1638
    %v1770 = vunpack.c.h.b16 %v1638
    %v1771 = vunpack.c.l.b16 %v1639
    %v1772 = vunpack.c.h.b16 %v1639
    %v1773 = vunpack.c.l.b16 %v1640
    %v1774 = vunpack.c.h.b16 %v1640
    %v1775 = vunpack.c.l.b16 %v1641
    %v1776 = vunpack.c.h.b16 %v1641
    %v1777 = vunpack.c.l.b16 %v1642
    %v1778 = vunpack.c.h.b16 %v1642
    %v1779 = vunpack.c.l.b16 %v1643
    %v1780 = vunpack.c.h.b16 %v1643
    %v1781 = vunpack.c.l.b16 %v1644
    %v1782 = vunpack.c.h.b16 %v1644
    %v1783 = vunpack.c.l.b16 %v1645
    %v1784 = vunpack.c.h.b16 %v1645
    %v1785 = vunpack.c.l.b16 %v1646
    %v1786 = vunpack.c.h.b16 %v1646
    %v1787 = vunpack.c.l.b16 %v1647
    %v1788 = vunpack.c.h.b16 %v1647
    %v1789 = vunpack.c.l.b16 %v1648
    %v1790 = vunpack.c.h.b16 %v1648
    %v1791 = vunpack.c.l.b16 %v1649
    %v1792 = vunpack.c.h.b16 %v1649
    %v1793 = vunpack.c.l.b16 %v1650
    %v1794 = vunpack.c.h.b16 %v1650
    %v1795 = vunpack.c.l.b16 %v1651
    %v1796 = vunpack.c.h.b16 %v1651
    %v1797 = vunpack.c.l.b16 %v1652
    %v1798 = vunpack.c.h.b16 %v1652
    %v1799 = vunpack.c.l.b16 %v1653
    %v1800 = vunpack.c.h.b16 %v1653
    %v1801 = vunpack.c.l.b16 %v1654
    %v1802 = vunpack.c.h.b16 %v1654
    %v1803 = vunpack.c.l.b16 %v1655
    %v1804 = vunpack.c.h.b16 %v1655
    %v1805 = vunpack.c.l.b16 %v1656
    %v1806 = vunpack.c.h.b16 %v1656
    %v1807 = vunpack.c.l.b16 %v1657
    %v1808 = vunpack.c.h.b16 %v1657
    %v1809 = vunpack.c.l.b16 %v1658
    %v1810 = vunpack.c.h.b16 %v1658
    %v1811 = vunpack.c.l.b16 %v1659
    %v1812 = vunpack.c.h.b16 %v1659
    %v1813 = vunpack.c.l.b16 %v1660
    %v1814 = vunpack.c.h.b16 %v1660
    %v1815 = vunpack.c.l.b16 %v1661
    %v1816 = vunpack.c.h.b16 %v1661
    %v1817 = vunpack.c.l.b16 %v1662
    %v1818 = vunpack.c.h.b16 %v1662
    %v1819 = vunpack.c.l.b16 %v1663
    %v1820 = vunpack.c.h.b16 %v1663
    %v1821 = vunpack.c.l.b16 %v1664
    %v1822 = vunpack.c.h.b16 %v1664
    %v1823 = vunpack.c.l.b16 %v1665
    %v1824 = vunpack.c.h.b16 %v1665
    %v1825 = vunpack.c.l.b16 %v1666
    %v1826 = vunpack.c.h.b16 %v1666
    %v1827 = vunpack.c.l.b16 %v1667
    %v1828 = vunpack.c.h.b16 %v1667
    %v1829 = vunpack.c.l.b16 %v1668
    %v1830 = vunpack.c.h.b16 %v1668
    %v1831 = vunpack.c.l.b16 %v1669
    %v1832 = vunpack.c.h.b16 %v1669
    %v1833 = vunpack.c.l.b16 %v1670
    %v1834 = vunpack.c.h.b16 %v1670
    %v1835 = vunpack.c.l.b16 %v1671
    %v1836 = vunpack.c.h.b16 %v1671
    %v1837 = vunpack.c.l.b16 %v1672
    %v1838 = vunpack.c.h.b16 %v1672
    %v1839 = vunpack.c.l.b16 %v1673
    %v1840 = vunpack.c.h.b16 %v1673
    %v1841 = vunpack.c.l.b16 %v1674
    %v1842 = vunpack.c.h.b16 %v1674
    %v1843 = vunpack.c.l.b16 %v1675
    %v1844 = vunpack.c.h.b16 %v1675
    %v1845 = vunpack.c.l.b16 %v1676
    %v1846 = vunpack.c.h.b16 %v1676
    %v1847 = vunpack.c.l.b16 %v1677
    %v1848 = vunpack.c.h.b16 %v1677
    %v1849 = vunpack.c.l.b16 %v1678
    %v1850 = vunpack.c.h.b16 %v1678
    %v1851 = vunpack.c.l.b16 %v1679
    %v1852 = vunpack.c.h.b16 %v1679
    %v1853 = vunpack.c.l.b16 %v1680
    %v1854 = vunpack.c.h.b16 %v1680
    %v1855 = vunpack.c.l.b16 %v1681
    %v1856 = vunpack.c.h.b16 %v1681
    %v1857 = vunpack.c.l.b16 %v1682
    %v1858 = vunpack.c.h.b16 %v1682
    %v1859 = vunpack.c.l.b16 %v1683
    %v1860 = vunpack.c.h.b16 %v1683
    %v1861 = vpack.c.b16 %v1771, %v1765
    %v1862 = vpack.c.b16 %v1772, %v1766
    %v1863 = vpack.c.b16 %v1773, %v1767
    %v1864 = vpack.c.b16 %v1774, %v1768
    %v1865 = vpack.c.b16 %v1775, %v1769
    %v1866 = vpack.c.b16 %v1776, %v1770
    %v1867 = vpack.c.b16 %v1783, %v1777
    %v1868 = vpack.c.b16 %v1784, %v1778
    %v1869 = vpack.c.b16 %v1785, %v1779
    %v1870 = vpack.c.b16 %v1786, %v1780
    %v1871 = vpack.c.b16 %v1787, %v1781
    %v1872 = vpack.c.b16 %v1788, %v1782
    %v1873 = vpack.c.b16 %v1795, %v1789
    %v1874 = vpack.c.b16 %v1796, %v1790
    %v1875 = vpack.c.b16 %v1797, %v1791
    %v1876 = vpack.c.b16 %v1798, %v1792
    %v1877 = vpack.c.b16 %v1799, %v1793
    %v1878 = vpack.c.b16 %v1800, %v1794
    %v1879 = vpack.c.b16 %v1807, %v1801
    %v1880 = vpack.c.b16 %v1808, %v1802
    %v1881 = vpack.c.b16 %v1809, %v1803
    %v1882 = vpack.c.b16 %v1810, %v1804
    %v1883 = vpack.c.b16 %v1811, %v1805
    %v1884 = vpack.c.b16 %v1812, %v1806
    %v1885 = vpack.c.b16 %v1819, %v1813
    %v1886 = vpack.c.b16 %v1820, %v1814
    %v1887 = vpack.c.b16 %v1821, %v1815
    %v1888 = vpack.c.b16 %v1822, %v1816
    %v1889 = vpack.c.b16 %v1823, %v1817
    %v1890 = vpack.c.b16 %v1824, %v1818
    %v1891 = vpack.c.b16 %v1831, %v1825
    %v1892 = vpack.c.b16 %v1832, %v1826
    %v1893 = vpack.c.b16 %v1833, %v1827
    %v1894 = vpack.c.b16 %v1834, %v1828
    %v1895 = vpack.c.b16 %v1835, %v1829
    %v1896 = vpack.c.b16 %v1836, %v1830
    %v1897 = vpack.c.b16 %v1843, %v1837
    %v1898 = vpack.c.b16 %v1844, %v1838
    %v1899 = vpack.c.b16 %v1845, %v1839
    %v1900 = vpack.c.b16 %v1846, %v1840
    %v1901 = vpack.c.b16 %v1847, %v1841
    %v1902 = vpack.c.b16 %v1848, %v1842
    %v1903 = vpack.c.b16 %v1855, %v1849
    %v1904 = vpack.c.b16 %v1856, %v1850
    %v1905 = vpack.c.b16 %v1857, %v1851
    %v1906 = vpack.c.b16 %v1858, %v1852
    %v1907 = vpack.c.b16 %v1859, %v1853
    %v1908 = vpack.c.b16 %v1860, %v1854
    %1957 = vmatprep.subr.bf16.mxu0 %v1862
    %1958 = vmatpush1.bf16.msra.mxu0 %v1861
    %1959 = vmatprep.subr.bf16.mxu0 %v1868
    %1960 = vmatpush1.bf16.msra.mxu0 %v1867
    %1961 = vmatprep.subr.bf16.mxu0 %v1874
    %1962 = vmatpush1.bf16.msra.mxu0 %v1873
    %1963 = vmatprep.subr.bf16.mxu0 %v1880
    %1964 = vmatpush1.bf16.msra.mxu0 %v1879
    %1965 = vmatprep.subr.bf16.mxu0 %v1886
    %1966 = vmatpush1.bf16.msra.mxu0 %v1885
    %1967 = vmatprep.subr.bf16.mxu0 %v1892
    %1968 = vmatpush1.bf16.msra.mxu0 %v1891
    %1969 = vmatprep.subr.bf16.mxu0 %v1898
    %1970 = vmatpush1.bf16.msra.mxu0 %v1897
    %1971 = vmatprep.subr.bf16.mxu0 %v1904
    %1972 = vmatpush1.bf16.msra.mxu0 %v1903
    %1973 = vmatprep.subr.bf16.mxu0 0
    %1974 = vmatpush1.bf16.msra.mxu0 0
    %1975 = vmatprep.subr.bf16.mxu0 0
    %1976 = vmatpush1.bf16.msra.mxu0 0
    %1977 = vmatprep.subr.bf16.mxu0 0
    %1978 = vmatpush1.bf16.msra.mxu0 0
    %1979 = vmatprep.subr.bf16.mxu0 0
    %1980 = vmatpush1.bf16.msra.mxu0 0
    %1981 = vmatprep.subr.bf16.mxu0 0
    %1982 = vmatpush1.bf16.msra.mxu0 0
    %1983 = vmatprep.subr.bf16.mxu0 0
    %1984 = vmatpush1.bf16.msra.mxu0 0
    %1985 = vmatprep.subr.bf16.mxu0 0
    %1986 = vmatpush1.bf16.msra.mxu0 0
    %1987 = vmatprep.subr.bf16.mxu0 0
    %1988 = vmatpush1.bf16.msra.mxu0 0
    %1989 = vmatprep.mubr.bf16.mxu0 0
    %1990 = vmatmul.mubr.bf16.gmra.mrb[0].mxu0 %v1634
    %v1991 = vpop.f32.mrb[0].mxu0
    %v1992 = vadd.f32 %v1690, %v1991
    %v1993 = vpop.f32.mrb[0].mxu0
    %v1994 = vadd.f32 %v1694, %v1993
    %v1995 = vpop.f32.mrb[0].mxu0
    %v1996 = vadd.f32 %v1690, %v1995
    %v1997 = vpop.f32.mrb[0].mxu0
    %v1998 = vadd.f32 %v1694, %v1997
    %1999 = vdwg.mxu0
    %2000 = vmatprep.subr.bf16.mxu0 %v1864
    %2001 = vmatpush1.bf16.msra.mxu0 %v1863
    %2002 = vmatprep.subr.bf16.mxu0 %v1870
    %2003 = vmatpush1.bf16.msra.mxu0 %v1869
    %2004 = vmatprep.subr.bf16.mxu0 %v1876
    %2005 = vmatpush1.bf16.msra.mxu0 %v1875
    %2006 = vmatprep.subr.bf16.mxu0 %v1882
    %2007 = vmatpush1.bf16.msra.mxu0 %v1881
    %2008 = vmatprep.subr.bf16.mxu0 %v1888
    %2009 = vmatpush1.bf16.msra.mxu0 %v1887
    %2010 = vmatprep.subr.bf16.mxu0 %v1894
    %2011 = vmatpush1.bf16.msra.mxu0 %v1893
    %2012 = vmatprep.subr.bf16.mxu0 %v1900
    %2013 = vmatpush1.bf16.msra.mxu0 %v1899
    %2014 = vmatprep.subr.bf16.mxu0 %v1906
    %2015 = vmatpush1.bf16.msra.mxu0 %v1905
    %2016 = vmatprep.subr.bf16.mxu0 0
    %2017 = vmatpush1.bf16.msra.mxu0 0
    %2018 = vmatprep.subr.bf16.mxu0 0
    %2019 = vmatpush1.bf16.msra.mxu0 0
    %2020 = vmatprep.subr.bf16.mxu0 0
    %2021 = vmatpush1.bf16.msra.mxu0 0
    %2022 = vmatprep.subr.bf16.mxu0 0
    %2023 = vmatpush1.bf16.msra.mxu0 0
    %2024 = vmatprep.subr.bf16.mxu0 0
    %2025 = vmatpush1.bf16.msra.mxu0 0
    %2026 = vmatprep.subr.bf16.mxu0 0
    %2027 = vmatpush1.bf16.msra.mxu0 0
    %2028 = vmatprep.subr.bf16.mxu0 0
    %2029 = vmatpush1.bf16.msra.mxu0 0
    %2030 = vmatprep.subr.bf16.mxu0 0
    %2031 = vmatpush1.bf16.msra.mxu0 0
    %2032 = vmatprep.mubr.bf16.mxu0 0
    %2033 = vmatmul.mubr.bf16.gmra.mrb[0].mxu0 %v1634
    %v2034 = vpop.f32.mrb[0].mxu0
    %v2035 = vadd.f32 %v1698, %v2034
    %v2036 = vpop.f32.mrb[0].mxu0
    %v2037 = vadd.f32 %v1702, %v2036
    %v2038 = vpop.f32.mrb[0].mxu0
    %v2039 = vadd.f32 %v1698, %v2038
    %v2040 = vpop.f32.mrb[0].mxu0
    %v2041 = vadd.f32 %v1702, %v2040
    %2042 = vdwg.mxu0
    %2043 = vmatprep.subr.bf16.mxu0 %v1866
    %2044 = vmatpush1.bf16.msra.mxu0 %v1865
    %2045 = vmatprep.subr.bf16.mxu0 %v1872
    %2046 = vmatpush1.bf16.msra.mxu0 %v1871
    %2047 = vmatprep.subr.bf16.mxu0 %v1878
    %2048 = vmatpush1.bf16.msra.mxu0 %v1877
    %2049 = vmatprep.subr.bf16.mxu0 %v1884
    %2050 = vmatpush1.bf16.msra.mxu0 %v1883
    %2051 = vmatprep.subr.bf16.mxu0 %v1890
    %2052 = vmatpush1.bf16.msra.mxu0 %v1889
    %2053 = vmatprep.subr.bf16.mxu0 %v1896
    %2054 = vmatpush1.bf16.msra.mxu0 %v1895
    %2055 = vmatprep.subr.bf16.mxu0 %v1902
    %2056 = vmatpush1.bf16.msra.mxu0 %v1901
    %2057 = vmatprep.subr.bf16.mxu0 %v1908
    %2058 = vmatpush1.bf16.msra.mxu0 %v1907
    %2059 = vmatprep.subr.bf16.mxu0 0
    %2060 = vmatpush1.bf16.msra.mxu0 0
    %2061 = vmatprep.subr.bf16.mxu0 0
    %2062 = vmatpush1.bf16.msra.mxu0 0
    %2063 = vmatprep.subr.bf16.mxu0 0
    %2064 = vmatpush1.bf16.msra.mxu0 0
    %2065 = vmatprep.subr.bf16.mxu0 0
    %2066 = vmatpush1.bf16.msra.mxu0 0
    %2067 = vmatprep.subr.bf16.mxu0 0
    %2068 = vmatpush1.bf16.msra.mxu0 0
    %2069 = vmatprep.subr.bf16.mxu0 0
    %2070 = vmatpush1.bf16.msra.mxu0 0
    %2071 = vmatprep.subr.bf16.mxu0 0
    %2072 = vmatpush1.bf16.msra.mxu0 0
    %2073 = vmatprep.subr.bf16.mxu0 0
    %2074 = vmatpush1.bf16.msra.mxu0 0
    %2075 = vmatprep.mubr.bf16.mxu0 0
    %2076 = vmatmul.mubr.bf16.gmra.mrb[0].mxu0 %v1634
    %v2077 = vpop.f32.mrb[0].mxu0
    %v2078 = vadd.f32 %v1706, %v2077
    %v2079 = vpop.f32.mrb[0].mxu0
    %v2080 = vadd.f32 %v1710, %v2079
    %v2081 = vpop.f32.mrb[0].mxu0
    %v2082 = vadd.f32 %v1706, %v2081
    %v2083 = vpop.f32.mrb[0].mxu0
    %v2084 = vadd.f32 %v1710, %v2083
    %2085 = vdwg.mxu0
    %s2086 = scalar_lea.vmem [#allocation4], 128
    %v2087 = vld [vmem:[%s2086] sm:$0xf]
    %v2088 = vld [vmem:[%s2086 + $0x4] sm:$0xf]
    %v2089 = vld [vmem:[%s2086 + $0x8] sm:$0xf]
    %v2090 = vld [vmem:[%s2086 + $0xc] sm:$0xf]
    %v2091 = vld [vmem:[%s2086 + $0x10] sm:$0xf]
    %v2092 = vld [vmem:[%s2086 + $0x14] sm:$0xf]
    %v2093 = vld [vmem:[%s2086 + $0x18] sm:$0xf]
    %v2094 = vld [vmem:[%s2086 + $0x1c] sm:$0xf]
    %v2095 = vld [vmem:[%s2086 + $0x20] sm:$0xf]
    %v2096 = vld [vmem:[%s2086 + $0x24] sm:$0xf]
    %v2097 = vld [vmem:[%s2086 + $0x28] sm:$0xf]
    %v2098 = vld [vmem:[%s2086 + $0x2c] sm:$0xf]
    %v2099 = vld [vmem:[%s2086 + $0x30] sm:$0xf]
    %v2100 = vld [vmem:[%s2086 + $0x34] sm:$0xf]
    %v2101 = vld [vmem:[%s2086 + $0x38] sm:$0xf]
    %v2102 = vld [vmem:[%s2086 + $0x3c] sm:$0xf]
    %v2103 = vld [vmem:[%s2086 + $0x40] sm:$0xf]
    %v2104 = vld [vmem:[%s2086 + $0x44] sm:$0xf]
    %v2105 = vld [vmem:[%s2086 + $0x48] sm:$0xf]
    %v2106 = vld [vmem:[%s2086 + $0x4c] sm:$0xf]
    %v2107 = vld [vmem:[%s2086 + $0x50] sm:$0xf]
    %v2108 = vld [vmem:[%s2086 + $0x54] sm:$0xf]
    %v2109 = vld [vmem:[%s2086 + $0x58] sm:$0xf]
    %v2110 = vld [vmem:[%s2086 + $0x5c] sm:$0xf]
    %v2111 = vld [vmem:[%s2086 + $0x60] sm:$0xf]
    %v2112 = vld [vmem:[%s2086 + $0x64] sm:$0xf]
    %v2113 = vld [vmem:[%s2086 + $0x68] sm:$0xf]
    %v2114 = vld [vmem:[%s2086 + $0x6c] sm:$0xf]
    %v2115 = vld [vmem:[%s2086 + $0x70] sm:$0xf]
    %v2116 = vld [vmem:[%s2086 + $0x74] sm:$0xf]
    %v2117 = vld [vmem:[%s2086 + $0x78] sm:$0xf]
    %v2118 = vld [vmem:[%s2086 + $0x7c] sm:$0xf]
    %s2119 = scalar_lea.vmem %s12, 1
    %v2120 = vld [vmem:[%s2119] sm:$0x1]
    %v2121 = vmul.f32 %v1992, 0.25
    %v2122 = vmul.f32 %v1996, 0.25
    %v2123 = vpack.c.bf16 %v2122, %v2121
    %v2124 = vpack.c.bf16 %v2039, %v2035
    %v2125 = vpack.c.bf16 %v2082, %v2078
    %2126 = vmatprep.subr.bf16.mxu0 0
    %2127 = vmatpush1.bf16.xpose.msra.mxu0 %v2124
    %2128 = vmatprep.subr.bf16.mxu0 0
    %2129 = vmatpush1.bf16.xpose.msra.mxu0 0
    %2130 = vmatprep.subr.bf16.mxu0 0
    %2131 = vmatpush1.bf16.xpose.msra.mxu0 0
    %2132 = vmatprep.subr.bf16.mxu0 0
    %2133 = vmatpush1.bf16.xpose.msra.mxu0 0
    %2134 = vmatprep.subr.bf16.mxu0 0
    %2135 = vmatpush1.bf16.xpose.msra.mxu0 0
    %2136 = vmatprep.subr.bf16.mxu0 0
    %2137 = vmatpush1.bf16.xpose.msra.mxu0 0
    %2138 = vmatprep.subr.bf16.mxu0 0
    %2139 = vmatpush1.bf16.xpose.msra.mxu0 0
    %2140 = vmatprep.subr.bf16.mxu0 0
    %2141 = vmatpush1.bf16.xpose.msra.mxu0 0
    %2142 = vmatprep.subr.bf16.mxu0 0
    %2143 = vmatpush1.bf16.xpose.msra.mxu0 0
    %2144 = vmatprep.subr.bf16.mxu0 0
    %2145 = vmatpush1.bf16.xpose.msra.mxu0 0
    %2146 = vmatprep.subr.bf16.mxu0 0
    %2147 = vmatpush1.bf16.xpose.msra.mxu0 0
    %2148 = vmatprep.subr.bf16.mxu0 0
    %2149 = vmatpush1.bf16.xpose.msra.mxu0 0
    %2150 = vmatprep.subr.bf16.mxu0 0
    %2151 = vmatpush1.bf16.xpose.msra.mxu0 0
    %2152 = vmatprep.subr.bf16.mxu0 0
    %2153 = vmatpush1.bf16.xpose.msra.mxu0 0
    %2154 = vmatprep.subr.bf16.mxu0 0
    %2155 = vmatpush1.bf16.xpose.msra.mxu0 0
    %2156 = vmatprep.subr.bf16.mxu0 0
    %2157 = vmatpush1.bf16.xpose.msra.mxu0 0
    %2158 = vmatprep.mubr.bf16.mxu0 0
    %2159 = vmatmul.mubr.bf16.gmra.mrb[0].mxu0 %v2123
    %v2160 = vpop.f32.mrb[0].mxu0
    %v2161 = vadd.f32 0.0, %v2160
    %v2162 = vpop.f32.mrb[0].mxu0
    %v2163 = vpop.f32.mrb[0].mxu0
    %v2164 = vadd.f32 0.0, %v2163
    %v2165 = vpop.f32.mrb[0].mxu0
    %2166 = vdwg.mxu0
    %v2167 = vsel %vm282, %v2161, -inf
    %2168 = vmax.xlane.f32.xlu0 %v2167
    %v2169 = vpop.xlane.xlu0 %2168
    %v2170 = vsel %vm282, %v2164, -inf
    %2171 = vmax.xlane.f32.xlu0 %v2170
    %v2172 = vpop.xlane.xlu0 %2171
    %v2173 = vsub.f32 %v2161, %v2169
    %v2174 = vsub.f32 %v2164, %v2172
    %v2175 = vmul.f32 %v2173, 1.442695
    %v2176 = vpow.pop %v2175
    %v2177 = vmul.f32 %v2174, 1.442695
    %v2178 = vpow.pop %v2177
    %v2179 = vsel %vm282, %v2176, 0.0
    %2180 = vadd.xlane.f32.xlu0 %v2179
    %v2181 = vpop.xlane.xlu0 %2180
    %v2182 = vsel %vm282, %v2178, 0.0
    %2183 = vadd.xlane.f32.xlu0 %v2182
    %v2184 = vpop.xlane.xlu0 %2183
    %v2185 = vrcp.pop %v2181
    %v2186 = vrcp.pop %v2184
    %v2187 = vpack.c.bf16 %v2178, %v2176
    %v2189 = vsel %vm282, %v2187, 0
    %2191 = vmatprep.subr.bf16.mxu0 0
    %2192 = vmatpush1.bf16.msra.mxu0 %v2125
    %2193 = vmatprep.subr.bf16.mxu0 0
    %2194 = vmatpush1.bf16.msra.mxu0 0
    %2195 = vmatprep.subr.bf16.mxu0 0
    %2196 = vmatpush1.bf16.msra.mxu0 0
    %2197 = vmatprep.subr.bf16.mxu0 0
    %2198 = vmatpush1.bf16.msra.mxu0 0
    %2199 = vmatprep.subr.bf16.mxu0 0
    %2200 = vmatpush1.bf16.msra.mxu0 0
    %2201 = vmatprep.subr.bf16.mxu0 0
    %2202 = vmatpush1.bf16.msra.mxu0 0
    %2203 = vmatprep.subr.bf16.mxu0 0
    %2204 = vmatpush1.bf16.msra.mxu0 0
    %2205 = vmatprep.subr.bf16.mxu0 0
    %2206 = vmatpush1.bf16.msra.mxu0 0
    %2207 = vmatprep.subr.bf16.mxu0 0
    %2208 = vmatpush1.bf16.msra.mxu0 0
    %2209 = vmatprep.subr.bf16.mxu0 0
    %2210 = vmatpush1.bf16.msra.mxu0 0
    %2211 = vmatprep.subr.bf16.mxu0 0
    %2212 = vmatpush1.bf16.msra.mxu0 0
    %2213 = vmatprep.subr.bf16.mxu0 0
    %2214 = vmatpush1.bf16.msra.mxu0 0
    %2215 = vmatprep.subr.bf16.mxu0 0
    %2216 = vmatpush1.bf16.msra.mxu0 0
    %2217 = vmatprep.subr.bf16.mxu0 0
    %2218 = vmatpush1.bf16.msra.mxu0 0
    %2219 = vmatprep.subr.bf16.mxu0 0
    %2220 = vmatpush1.bf16.msra.mxu0 0
    %2221 = vmatprep.subr.bf16.mxu0 0
    %2222 = vmatpush1.bf16.msra.mxu0 0
    %2223 = vmatprep.mubr.bf16.mxu0 0
    %2224 = vmatmul.mubr.bf16.gmra.mrb[0].mxu0 %v2189
    %v2225 = vpop.f32.mrb[0].mxu0
    %v2226 = vadd.f32 0.0, %v2225
    %v2227 = vpop.f32.mrb[0].mxu0
    %v2228 = vpop.f32.mrb[0].mxu0
    %v2229 = vadd.f32 0.0, %v2228
    %v2230 = vpop.f32.mrb[0].mxu0
    %2231 = vdwg.mxu0
    %v2232 = vmul.f32 %v2226, %v2185
    %v2233 = vmul.f32 %v2229, %v2186
    %v2234 = vpack.c.bf16 %v2233, %v2232
    %v2251 = vunpack.c.l.b16 %v2087
    %v2252 = vunpack.c.l.b16 %v2088
    %v2253 = vunpack.c.l.b16 %v2089
    %v2254 = vunpack.c.l.b16 %v2090
    %v2255 = vunpack.c.l.b16 %v2091
    %v2256 = vunpack.c.l.b16 %v2092
    %v2257 = vunpack.c.l.b16 %v2093
    %v2258 = vunpack.c.l.b16 %v2094
    %v2259 = vunpack.c.l.b16 %v2095
    %v2260 = vunpack.c.l.b16 %v2096
    %v2261 = vunpack.c.l.b16 %v2097
    %v2262 = vunpack.c.l.b16 %v2098
    %v2263 = vunpack.c.l.b16 %v2099
    %v2264 = vunpack.c.l.b16 %v2100
    %v2265 = vunpack.c.l.b16 %v2101
    %v2266 = vunpack.c.l.b16 %v2102
    %v2267 = vpack.c.b16 %v2252, %v2251
    %v2268 = vpack.c.b16 %v2254, %v2253
    %v2269 = vpack.c.b16 %v2256, %v2255
    %v2270 = vpack.c.b16 %v2258, %v2257
    %v2271 = vpack.c.b16 %v2260, %v2259
    %v2272 = vpack.c.b16 %v2262, %v2261
    %v2273 = vpack.c.b16 %v2264, %v2263
    %v2274 = vpack.c.b16 %v2266, %v2265
    %2283 = vmatprep.subr.bf16.mxu0 0
    %2284 = vmatpush1.bf16.msra.mxu0 %v2267
    %2285 = vmatprep.subr.bf16.mxu0 0
    %2286 = vmatpush1.bf16.msra.mxu0 %v2268
    %2287 = vmatprep.subr.bf16.mxu0 0
    %2288 = vmatpush1.bf16.msra.mxu0 %v2269
    %2289 = vmatprep.subr.bf16.mxu0 0
    %2290 = vmatpush1.bf16.msra.mxu0 %v2270
    %2291 = vmatprep.subr.bf16.mxu0 0
    %2292 = vmatpush1.bf16.msra.mxu0 %v2271
    %2293 = vmatprep.subr.bf16.mxu0 0
    %2294 = vmatpush1.bf16.msra.mxu0 %v2272
    %2295 = vmatprep.subr.bf16.mxu0 0
    %2296 = vmatpush1.bf16.msra.mxu0 %v2273
    %2297 = vmatprep.subr.bf16.mxu0 0
    %2298 = vmatpush1.bf16.msra.mxu0 %v2274
    %2299 = vmatprep.subr.bf16.mxu0 0
    %2300 = vmatpush1.bf16.msra.mxu0 0
    %2301 = vmatprep.subr.bf16.mxu0 0
    %2302 = vmatpush1.bf16.msra.mxu0 0
    %2303 = vmatprep.subr.bf16.mxu0 0
    %2304 = vmatpush1.bf16.msra.mxu0 0
    %2305 = vmatprep.subr.bf16.mxu0 0
    %2306 = vmatpush1.bf16.msra.mxu0 0
    %2307 = vmatprep.subr.bf16.mxu0 0
    %2308 = vmatpush1.bf16.msra.mxu0 0
    %2309 = vmatprep.subr.bf16.mxu0 0
    %2310 = vmatpush1.bf16.msra.mxu0 0
    %2311 = vmatprep.subr.bf16.mxu0 0
    %2312 = vmatpush1.bf16.msra.mxu0 0
    %2313 = vmatprep.subr.bf16.mxu0 0
    %2314 = vmatpush1.bf16.msra.mxu0 0
    %2315 = vmatprep.mubr.bf16.mxu0 0
    %2316 = vmatmul.mubr.bf16.gmra.mrb[0].mxu0 %v2234
    %v2317 = vpop.f32.mrb[0].mxu0
    %v2318 = vadd.f32 0.0, %v2317
    %v2319 = vpop.f32.mrb[0].mxu0
    %v2320 = vpop.f32.mrb[0].mxu0
    %v2321 = vadd.f32 0.0, %v2320
    %v2322 = vpop.f32.mrb[0].mxu0
    %2323 = vdwg.mxu0
    %v2325 = vlaneseq
    %v2326 = vshrl.u32 %v2325, 7
    %v2327 = vsub.s32 0, %v2326
    %v2328 = vrot.slane %v2120, %v2327
    %v2330 = vadd.f32 %v2328, %v2318
    %v2331 = vadd.f32 %v2328, %v2321
    %v2332 = vmul.f32 %v1994, 0.25
    %v2333 = vmul.f32 %v1998, 0.25
    %v2334 = vpack.c.bf16 %v2333, %v2332
    %v2335 = vpack.c.bf16 %v2041, %v2037
    %v2336 = vpack.c.bf16 %v2084, %v2080
    %2337 = vmatprep.subr.bf16.mxu0 0
    %2338 = vmatpush1.bf16.xpose.msra.mxu0 %v2335
    %2339 = vmatprep.subr.bf16.mxu0 0
    %2340 = vmatpush1.bf16.xpose.msra.mxu0 0
    %2341 = vmatprep.subr.bf16.mxu0 0
    %2342 = vmatpush1.bf16.xpose.msra.mxu0 0
    %2343 = vmatprep.subr.bf16.mxu0 0
    %2344 = vmatpush1.bf16.xpose.msra.mxu0 0
    %2345 = vmatprep.subr.bf16.mxu0 0
    %2346 = vmatpush1.bf16.xpose.msra.mxu0 0
    %2347 = vmatprep.subr.bf16.mxu0 0
    %2348 = vmatpush1.bf16.xpose.msra.mxu0 0
    %2349 = vmatprep.subr.bf16.mxu0 0
    %2350 = vmatpush1.bf16.xpose.msra.mxu0 0
    %2351 = vmatprep.subr.bf16.mxu0 0
    %2352 = vmatpush1.bf16.xpose.msra.mxu0 0
    %2353 = vmatprep.subr.bf16.mxu0 0
    %2354 = vmatpush1.bf16.xpose.msra.mxu0 0
    %2355 = vmatprep.subr.bf16.mxu0 0
    %2356 = vmatpush1.bf16.xpose.msra.mxu0 0
    %2357 = vmatprep.subr.bf16.mxu0 0
    %2358 = vmatpush1.bf16.xpose.msra.mxu0 0
    %2359 = vmatprep.subr.bf16.mxu0 0
    %2360 = vmatpush1.bf16.xpose.msra.mxu0 0
    %2361 = vmatprep.subr.bf16.mxu0 0
    %2362 = vmatpush1.bf16.xpose.msra.mxu0 0
    %2363 = vmatprep.subr.bf16.mxu0 0
    %2364 = vmatpush1.bf16.xpose.msra.mxu0 0
    %2365 = vmatprep.subr.bf16.mxu0 0
    %2366 = vmatpush1.bf16.xpose.msra.mxu0 0
    %2367 = vmatprep.subr.bf16.mxu0 0
    %2368 = vmatpush1.bf16.xpose.msra.mxu0 0
    %2369 = vmatprep.mubr.bf16.mxu0 0
    %2370 = vmatmul.mubr.bf16.gmra.mrb[0].mxu0 %v2334
    %v2371 = vpop.f32.mrb[0].mxu0
    %v2372 = vadd.f32 0.0, %v2371
    %v2373 = vpop.f32.mrb[0].mxu0
    %v2374 = vpop.f32.mrb[0].mxu0
    %v2375 = vadd.f32 0.0, %v2374
    %v2376 = vpop.f32.mrb[0].mxu0
    %2377 = vdwg.mxu0
    %v2378 = vsel %vm282, %v2372, -inf
    %2379 = vmax.xlane.f32.xlu0 %v2378
    %v2380 = vpop.xlane.xlu0 %2379
    %v2381 = vsel %vm282, %v2375, -inf
    %2382 = vmax.xlane.f32.xlu0 %v2381
    %v2383 = vpop.xlane.xlu0 %2382
    %v2384 = vsub.f32 %v2372, %v2380
    %v2385 = vsub.f32 %v2375, %v2383
    %v2386 = vmul.f32 %v2384, 1.442695
    %v2387 = vpow.pop %v2386
    %v2388 = vmul.f32 %v2385, 1.442695
    %v2389 = vpow.pop %v2388
    %v2390 = vsel %vm282, %v2387, 0.0
    %2391 = vadd.xlane.f32.xlu0 %v2390
    %v2392 = vpop.xlane.xlu0 %2391
    %v2393 = vsel %vm282, %v2389, 0.0
    %2394 = vadd.xlane.f32.xlu0 %v2393
    %v2395 = vpop.xlane.xlu0 %2394
    %v2396 = vrcp.pop %v2392
    %v2397 = vrcp.pop %v2395
    %v2398 = vpack.c.bf16 %v2389, %v2387
    %v2400 = vsel %vm282, %v2398, 0
    %2402 = vmatprep.subr.bf16.mxu0 0
    %2403 = vmatpush1.bf16.msra.mxu0 %v2336
    %2404 = vmatprep.subr.bf16.mxu0 0
    %2405 = vmatpush1.bf16.msra.mxu0 0
    %2406 = vmatprep.subr.bf16.mxu0 0
    %2407 = vmatpush1.bf16.msra.mxu0 0
    %2408 = vmatprep.subr.bf16.mxu0 0
    %2409 = vmatpush1.bf16.msra.mxu0 0
    %2410 = vmatprep.subr.bf16.mxu0 0
    %2411 = vmatpush1.bf16.msra.mxu0 0
    %2412 = vmatprep.subr.bf16.mxu0 0
    %2413 = vmatpush1.bf16.msra.mxu0 0
    %2414 = vmatprep.subr.bf16.mxu0 0
    %2415 = vmatpush1.bf16.msra.mxu0 0
    %2416 = vmatprep.subr.bf16.mxu0 0
    %2417 = vmatpush1.bf16.msra.mxu0 0
    %2418 = vmatprep.subr.bf16.mxu0 0
    %2419 = vmatpush1.bf16.msra.mxu0 0
    %2420 = vmatprep.subr.bf16.mxu0 0
    %2421 = vmatpush1.bf16.msra.mxu0 0
    %2422 = vmatprep.subr.bf16.mxu0 0
    %2423 = vmatpush1.bf16.msra.mxu0 0
    %2424 = vmatprep.subr.bf16.mxu0 0
    %2425 = vmatpush1.bf16.msra.mxu0 0
    %2426 = vmatprep.subr.bf16.mxu0 0
    %2427 = vmatpush1.bf16.msra.mxu0 0
    %2428 = vmatprep.subr.bf16.mxu0 0
    %2429 = vmatpush1.bf16.msra.mxu0 0
    %2430 = vmatprep.subr.bf16.mxu0 0
    %2431 = vmatpush1.bf16.msra.mxu0 0
    %2432 = vmatprep.subr.bf16.mxu0 0
    %2433 = vmatpush1.bf16.msra.mxu0 0
    %2434 = vmatprep.mubr.bf16.mxu0 0
    %2435 = vmatmul.mubr.bf16.gmra.mrb[0].mxu0 %v2400
    %v2436 = vpop.f32.mrb[0].mxu0
    %v2437 = vadd.f32 0.0, %v2436
    %v2438 = vpop.f32.mrb[0].mxu0
    %v2439 = vpop.f32.mrb[0].mxu0
    %v2440 = vadd.f32 0.0, %v2439
    %v2441 = vpop.f32.mrb[0].mxu0
    %2442 = vdwg.mxu0
    %v2443 = vmul.f32 %v2437, %v2396
    %v2444 = vmul.f32 %v2440, %v2397
    %v2445 = vpack.c.bf16 %v2444, %v2443
    %v2462 = vunpack.c.l.b16 %v2103
    %v2463 = vunpack.c.l.b16 %v2104
    %v2464 = vunpack.c.l.b16 %v2105
    %v2465 = vunpack.c.l.b16 %v2106
    %v2466 = vunpack.c.l.b16 %v2107
    %v2467 = vunpack.c.l.b16 %v2108
    %v2468 = vunpack.c.l.b16 %v2109
    %v2469 = vunpack.c.l.b16 %v2110
    %v2470 = vunpack.c.l.b16 %v2111
    %v2471 = vunpack.c.l.b16 %v2112
    %v2472 = vunpack.c.l.b16 %v2113
    %v2473 = vunpack.c.l.b16 %v2114
    %v2474 = vunpack.c.l.b16 %v2115
    %v2475 = vunpack.c.l.b16 %v2116
    %v2476 = vunpack.c.l.b16 %v2117
    %v2477 = vunpack.c.l.b16 %v2118
    %v2478 = vpack.c.b16 %v2463, %v2462
    %v2479 = vpack.c.b16 %v2465, %v2464
    %v2480 = vpack.c.b16 %v2467, %v2466
    %v2481 = vpack.c.b16 %v2469, %v2468
    %v2482 = vpack.c.b16 %v2471, %v2470
    %v2483 = vpack.c.b16 %v2473, %v2472
    %v2484 = vpack.c.b16 %v2475, %v2474
    %v2485 = vpack.c.b16 %v2477, %v2476
    %2494 = vmatprep.subr.bf16.mxu0 0
    %2495 = vmatpush1.bf16.msra.mxu0 %v2478
    %2496 = vmatprep.subr.bf16.mxu0 0
    %2497 = vmatpush1.bf16.msra.mxu0 %v2479
    %2498 = vmatprep.subr.bf16.mxu0 0
    %2499 = vmatpush1.bf16.msra.mxu0 %v2480
    %2500 = vmatprep.subr.bf16.mxu0 0
    %2501 = vmatpush1.bf16.msra.mxu0 %v2481
    %2502 = vmatprep.subr.bf16.mxu0 0
    %2503 = vmatpush1.bf16.msra.mxu0 %v2482
    %2504 = vmatprep.subr.bf16.mxu0 0
    %2505 = vmatpush1.bf16.msra.mxu0 %v2483
    %2506 = vmatprep.subr.bf16.mxu0 0
    %2507 = vmatpush1.bf16.msra.mxu0 %v2484
    %2508 = vmatprep.subr.bf16.mxu0 0
    %2509 = vmatpush1.bf16.msra.mxu0 %v2485
    %2510 = vmatprep.subr.bf16.mxu0 0
    %2511 = vmatpush1.bf16.msra.mxu0 0
    %2512 = vmatprep.subr.bf16.mxu0 0
    %2513 = vmatpush1.bf16.msra.mxu0 0
    %2514 = vmatprep.subr.bf16.mxu0 0
    %2515 = vmatpush1.bf16.msra.mxu0 0
    %2516 = vmatprep.subr.bf16.mxu0 0
    %2517 = vmatpush1.bf16.msra.mxu0 0
    %2518 = vmatprep.subr.bf16.mxu0 0
    %2519 = vmatpush1.bf16.msra.mxu0 0
    %2520 = vmatprep.subr.bf16.mxu0 0
    %2521 = vmatpush1.bf16.msra.mxu0 0
    %2522 = vmatprep.subr.bf16.mxu0 0
    %2523 = vmatpush1.bf16.msra.mxu0 0
    %2524 = vmatprep.subr.bf16.mxu0 0
    %2525 = vmatpush1.bf16.msra.mxu0 0
    %2526 = vmatprep.mubr.bf16.mxu0 0
    %2527 = vmatmul.mubr.bf16.gmra.mrb[0].mxu0 %v2445
    %v2528 = vpop.f32.mrb[0].mxu0
    %v2529 = vadd.f32 0.0, %v2528
    %v2530 = vpop.f32.mrb[0].mxu0
    %v2531 = vpop.f32.mrb[0].mxu0
    %v2532 = vadd.f32 0.0, %v2531
    %v2533 = vpop.f32.mrb[0].mxu0
    %2534 = vdwg.mxu0
    %v2535 = vadd.f32 %v2330, %v2529
    %v2536 = vadd.f32 %v2331, %v2532
    %v2537 = vadd.f32 %v1632, %v2535
    %v2538 = vadd.f32 %v1633, %v2536
    %s2539 = scalar_lea.vmem %s13, 1
    %v2540 = vld [vmem:[%s2539] sm:$0x1]
    %s2541 = scalar_lea.vmem %s14, 1
    %v2542 = vld [vmem:[%s2541] sm:$0x1]
    %2543 = vadd.xlane.f32.xlu0 %v2537
    %v2544 = vpop.xlane.xlu0 %2543
    %2545 = vadd.xlane.f32.xlu0 %v2538
    %v2546 = vpop.xlane.xlu0 %2545
    %v2547 = vmul.f32 %v2544, 0.03125
    %v2548 = vmul.f32 %v2546, 0.03125
    %v2549 = vsub.f32 %v2537, %v2547
    %v2550 = vsub.f32 %v2538, %v2548
    %v2551 = vmul.f32 %v2549, %v385
    %v2552 = vmul.f32 %v2550, %v385
    %v2553 = vmul.f32 %v2551, %v2551
    %v2554 = vmul.f32 %v2552, %v2552
    %2555 = vadd.xlane.f32.xlu0 %v2553
    %v2556 = vpop.xlane.xlu0 %2555
    %2557 = vadd.xlane.f32.xlu0 %v2554
    %v2558 = vpop.xlane.xlu0 %2557
    %v2559 = vmul.f32 %v2556, 0.03125
    %v2560 = vmul.f32 %v2558, 0.03125
    %v2561 = vadd.f32 %v2559, 1e-05
    %v2562 = vadd.f32 %v2560, 1e-05
    %v2563 = vrsqrt.pop %v2561
    %v2564 = vrsqrt.pop %v2562
    %v2565 = vmul.f32 %v2549, %v2563
    %v2566 = vmul.f32 %v2550, %v2564
    %v2568 = vlaneseq
    %v2569 = vshrl.u32 %v2568, 7
    %v2570 = vsub.s32 0, %v2569
    %v2571 = vrot.slane %v2540, %v2570
    %v2573 = vmul.f32 %v2565, %v2571
    %v2574 = vmul.f32 %v2566, %v2571
    %v2576 = vlaneseq
    %v2577 = vshrl.u32 %v2576, 7
    %v2578 = vsub.s32 0, %v2577
    %v2579 = vrot.slane %v2542, %v2578
    %v2581 = vadd.f32 %v2573, %v2579
    %v2582 = vadd.f32 %v2574, %v2579
    %v2583 = vpack.c.bf16 %v2582, %v2581
    %s2584 = scalar_lea.vmem [#allocation6], 64
    %v2585 = vld [vmem:[%s2584] sm:$0xf]
    %v2586 = vld [vmem:[%s2584 + $0x4] sm:$0xf]
    %v2587 = vld [vmem:[%s2584 + $0x8] sm:$0xf]
    %v2588 = vld [vmem:[%s2584 + $0xc] sm:$0xf]
    %v2589 = vld [vmem:[%s2584 + $0x10] sm:$0xf]
    %v2590 = vld [vmem:[%s2584 + $0x14] sm:$0xf]
    %v2591 = vld [vmem:[%s2584 + $0x18] sm:$0xf]
    %v2592 = vld [vmem:[%s2584 + $0x1c] sm:$0xf]
    %v2593 = vld [vmem:[%s2584 + $0x20] sm:$0xf]
    %v2594 = vld [vmem:[%s2584 + $0x24] sm:$0xf]
    %v2595 = vld [vmem:[%s2584 + $0x28] sm:$0xf]
    %v2596 = vld [vmem:[%s2584 + $0x2c] sm:$0xf]
    %v2597 = vld [vmem:[%s2584 + $0x30] sm:$0xf]
    %v2598 = vld [vmem:[%s2584 + $0x34] sm:$0xf]
    %v2599 = vld [vmem:[%s2584 + $0x38] sm:$0xf]
    %v2600 = vld [vmem:[%s2584 + $0x3c] sm:$0xf]
    %s2601 = scalar_lea.vmem %s16, 1
    %v2602 = vld [vmem:[%s2601] sm:$0x1]
    %v2604 = vlaneseq
    %v2605 = vshrl.u32 %v2604, 7
    %v2606 = vsub.s32 0, %v2605
    %v2607 = vrot.slane %v2602, %v2606
    %v2625 = vunpack.c.l.b16 %v2585
    %v2626 = vunpack.c.l.b16 %v2586
    %v2627 = vunpack.c.l.b16 %v2587
    %v2628 = vunpack.c.l.b16 %v2588
    %v2629 = vunpack.c.l.b16 %v2589
    %v2630 = vunpack.c.l.b16 %v2590
    %v2631 = vunpack.c.l.b16 %v2591
    %v2632 = vunpack.c.l.b16 %v2592
    %v2633 = vunpack.c.l.b16 %v2593
    %v2634 = vunpack.c.l.b16 %v2594
    %v2635 = vunpack.c.l.b16 %v2595
    %v2636 = vunpack.c.l.b16 %v2596
    %v2637 = vunpack.c.l.b16 %v2597
    %v2638 = vunpack.c.l.b16 %v2598
    %v2639 = vunpack.c.l.b16 %v2599
    %v2640 = vunpack.c.l.b16 %v2600
    %v2641 = vpack.c.b16 %v2626, %v2625
    %v2642 = vpack.c.b16 %v2628, %v2627
    %v2643 = vpack.c.b16 %v2630, %v2629
    %v2644 = vpack.c.b16 %v2632, %v2631
    %v2645 = vpack.c.b16 %v2634, %v2633
    %v2646 = vpack.c.b16 %v2636, %v2635
    %v2647 = vpack.c.b16 %v2638, %v2637
    %v2648 = vpack.c.b16 %v2640, %v2639
    %2657 = vmatprep.subr.bf16.mxu0 0
    %2658 = vmatpush1.bf16.msra.mxu0 %v2641
    %2659 = vmatprep.subr.bf16.mxu0 0
    %2660 = vmatpush1.bf16.msra.mxu0 %v2642
    %2661 = vmatprep.subr.bf16.mxu0 0
    %2662 = vmatpush1.bf16.msra.mxu0 %v2643
    %2663 = vmatprep.subr.bf16.mxu0 0
    %2664 = vmatpush1.bf16.msra.mxu0 %v2644
    %2665 = vmatprep.subr.bf16.mxu0 0
    %2666 = vmatpush1.bf16.msra.mxu0 %v2645
    %2667 = vmatprep.subr.bf16.mxu0 0
    %2668 = vmatpush1.bf16.msra.mxu0 %v2646
    %2669 = vmatprep.subr.bf16.mxu0 0
    %2670 = vmatpush1.bf16.msra.mxu0 %v2647
    %2671 = vmatprep.subr.bf16.mxu0 0
    %2672 = vmatpush1.bf16.msra.mxu0 %v2648
    %2673 = vmatprep.subr.bf16.mxu0 0
    %2674 = vmatpush1.bf16.msra.mxu0 0
    %2675 = vmatprep.subr.bf16.mxu0 0
    %2676 = vmatpush1.bf16.msra.mxu0 0
    %2677 = vmatprep.subr.bf16.mxu0 0
    %2678 = vmatpush1.bf16.msra.mxu0 0
    %2679 = vmatprep.subr.bf16.mxu0 0
    %2680 = vmatpush1.bf16.msra.mxu0 0
    %2681 = vmatprep.subr.bf16.mxu0 0
    %2682 = vmatpush1.bf16.msra.mxu0 0
    %2683 = vmatprep.subr.bf16.mxu0 0
    %2684 = vmatpush1.bf16.msra.mxu0 0
    %2685 = vmatprep.subr.bf16.mxu0 0
    %2686 = vmatpush1.bf16.msra.mxu0 0
    %2687 = vmatprep.subr.bf16.mxu0 0
    %2688 = vmatpush1.bf16.msra.mxu0 0
    %2689 = vmatprep.mubr.bf16.mxu0 0
    %2690 = vmatmul.mubr.bf16.gmra.mrb[0].mxu0 %v2583
    %v2691 = vpop.f32.mrb[0].mxu0
    %v2692 = vadd.f32 %v2607, %v2691
    %v2693 = vpop.f32.mrb[0].mxu0
    %v2694 = vpop.f32.mrb[0].mxu0
    %v2695 = vadd.f32 %v2607, %v2694
    %v2696 = vpop.f32.mrb[0].mxu0
    %2697 = vdwg.mxu0
    %v2698 = vmax.f32 %v2692, 0.0
    %v2699 = vmax.f32 %v2695, 0.0
    %v2700 = vpack.c.bf16 %v2699, %v2698
    %s2701 = scalar_lea.vmem [#allocation7], 64
    %v2702 = vld [vmem:[%s2701] sm:$0xf]
    %v2703 = vld [vmem:[%s2701 + $0x4] sm:$0xf]
    %v2704 = vld [vmem:[%s2701 + $0x8] sm:$0xf]
    %v2705 = vld [vmem:[%s2701 + $0xc] sm:$0xf]
    %v2706 = vld [vmem:[%s2701 + $0x10] sm:$0xf]
    %v2707 = vld [vmem:[%s2701 + $0x14] sm:$0xf]
    %v2708 = vld [vmem:[%s2701 + $0x18] sm:$0xf]
    %v2709 = vld [vmem:[%s2701 + $0x1c] sm:$0xf]
    %v2710 = vld [vmem:[%s2701 + $0x20] sm:$0xf]
    %v2711 = vld [vmem:[%s2701 + $0x24] sm:$0xf]
    %v2712 = vld [vmem:[%s2701 + $0x28] sm:$0xf]
    %v2713 = vld [vmem:[%s2701 + $0x2c] sm:$0xf]
    %v2714 = vld [vmem:[%s2701 + $0x30] sm:$0xf]
    %v2715 = vld [vmem:[%s2701 + $0x34] sm:$0xf]
    %v2716 = vld [vmem:[%s2701 + $0x38] sm:$0xf]
    %v2717 = vld [vmem:[%s2701 + $0x3c] sm:$0xf]
    %s2718 = scalar_lea.vmem %s18, 1
    %v2719 = vld [vmem:[%s2718] sm:$0x1]
    %v2721 = vlaneseq
    %v2722 = vshrl.u32 %v2721, 7
    %v2723 = vsub.s32 0, %v2722
    %v2724 = vrot.slane %v2719, %v2723
    %v2742 = vunpack.c.l.b16 %v2702
    %v2743 = vunpack.c.l.b16 %v2703
    %v2744 = vunpack.c.l.b16 %v2704
    %v2745 = vunpack.c.l.b16 %v2705
    %v2746 = vunpack.c.l.b16 %v2706
    %v2747 = vunpack.c.l.b16 %v2707
    %v2748 = vunpack.c.l.b16 %v2708
    %v2749 = vunpack.c.l.b16 %v2709
    %v2750 = vunpack.c.l.b16 %v2710
    %v2751 = vunpack.c.l.b16 %v2711
    %v2752 = vunpack.c.l.b16 %v2712
    %v2753 = vunpack.c.l.b16 %v2713
    %v2754 = vunpack.c.l.b16 %v2714
    %v2755 = vunpack.c.l.b16 %v2715
    %v2756 = vunpack.c.l.b16 %v2716
    %v2757 = vunpack.c.l.b16 %v2717
    %v2758 = vpack.c.b16 %v2743, %v2742
    %v2759 = vpack.c.b16 %v2745, %v2744
    %v2760 = vpack.c.b16 %v2747, %v2746
    %v2761 = vpack.c.b16 %v2749, %v2748
    %v2762 = vpack.c.b16 %v2751, %v2750
    %v2763 = vpack.c.b16 %v2753, %v2752
    %v2764 = vpack.c.b16 %v2755, %v2754
    %v2765 = vpack.c.b16 %v2757, %v2756
    %2774 = vmatprep.subr.bf16.mxu0 0
    %2775 = vmatpush1.bf16.msra.mxu0 %v2758
    %2776 = vmatprep.subr.bf16.mxu0 0
    %2777 = vmatpush1.bf16.msra.mxu0 %v2759
    %2778 = vmatprep.subr.bf16.mxu0 0
    %2779 = vmatpush1.bf16.msra.mxu0 %v2760
    %2780 = vmatprep.subr.bf16.mxu0 0
    %2781 = vmatpush1.bf16.msra.mxu0 %v2761
    %2782 = vmatprep.subr.bf16.mxu0 0
    %2783 = vmatpush1.bf16.msra.mxu0 %v2762
    %2784 = vmatprep.subr.bf16.mxu0 0
    %2785 = vmatpush1.bf16.msra.mxu0 %v2763
    %2786 = vmatprep.subr.bf16.mxu0 0
    %2787 = vmatpush1.bf16.msra.mxu0 %v2764
    %2788 = vmatprep.subr.bf16.mxu0 0
    %2789 = vmatpush1.bf16.msra.mxu0 %v2765
    %2790 = vmatprep.subr.bf16.mxu0 0
    %2791 = vmatpush1.bf16.msra.mxu0 0
    %2792 = vmatprep.subr.bf16.mxu0 0
    %2793 = vmatpush1.bf16.msra.mxu0 0
    %2794 = vmatprep.subr.bf16.mxu0 0
    %2795 = vmatpush1.bf16.msra.mxu0 0
    %2796 = vmatprep.subr.bf16.mxu0 0
    %2797 = vmatpush1.bf16.msra.mxu0 0
    %2798 = vmatprep.subr.bf16.mxu0 0
    %2799 = vmatpush1.bf16.msra.mxu0 0
    %2800 = vmatprep.subr.bf16.mxu0 0
    %2801 = vmatpush1.bf16.msra.mxu0 0
    %2802 = vmatprep.subr.bf16.mxu0 0
    %2803 = vmatpush1.bf16.msra.mxu0 0
    %2804 = vmatprep.subr.bf16.mxu0 0
    %2805 = vmatpush1.bf16.msra.mxu0 0
    %2806 = vmatprep.mubr.bf16.mxu0 0
    %2807 = vmatmul.mubr.bf16.gmra.mrb[0].mxu0 %v2700
    %v2808 = vpop.f32.mrb[0].mxu0
    %v2809 = vadd.f32 %v2724, %v2808
    %v2810 = vpop.f32.mrb[0].mxu0
    %v2811 = vpop.f32.mrb[0].mxu0
    %v2812 = vadd.f32 %v2724, %v2811
    %v2813 = vpop.f32.mrb[0].mxu0
    %2814 = vdwg.mxu0
    %v2815 = vadd.f32 %v2581, %v2809
    %v2816 = vadd.f32 %v2582, %v2812
    %s2817 = scalar_lea.vmem %s19, 1
    %v2818 = vld [vmem:[%s2817] sm:$0x1]
    %s2819 = scalar_lea.vmem %s20, 1
    %v2820 = vld [vmem:[%s2819] sm:$0x1]
    %2821 = vadd.xlane.f32.xlu0 %v2815
    %v2822 = vpop.xlane.xlu0 %2821
    %2823 = vadd.xlane.f32.xlu0 %v2816
    %v2824 = vpop.xlane.xlu0 %2823
    %v2825 = vmul.f32 %v2822, 0.03125
    %v2826 = vmul.f32 %v2824, 0.03125
    %v2827 = vsub.f32 %v2815, %v2825
    %v2828 = vsub.f32 %v2816, %v2826
    %v2829 = vmul.f32 %v2827, %v385
    %v2830 = vmul.f32 %v2828, %v385
    %v2831 = vmul.f32 %v2829, %v2829
    %v2832 = vmul.f32 %v2830, %v2830
    %2833 = vadd.xlane.f32.xlu0 %v2831
    %v2834 = vpop.xlane.xlu0 %2833
    %2835 = vadd.xlane.f32.xlu0 %v2832
    %v2836 = vpop.xlane.xlu0 %2835
    %v2837 = vmul.f32 %v2834, 0.03125
    %v2838 = vmul.f32 %v2836, 0.03125
    %v2839 = vadd.f32 %v2837, 1e-05
    %v2840 = vadd.f32 %v2838, 1e-05
    %v2841 = vrsqrt.pop %v2839
    %v2842 = vrsqrt.pop %v2840
    %v2843 = vmul.f32 %v2827, %v2841
    %v2844 = vmul.f32 %v2828, %v2842
    %v2846 = vlaneseq
    %v2847 = vshrl.u32 %v2846, 7
    %v2848 = vsub.s32 0, %v2847
    %v2849 = vrot.slane %v2818, %v2848
    %v2851 = vmul.f32 %v2843, %v2849
    %v2852 = vmul.f32 %v2844, %v2849
    %v2854 = vlaneseq
    %v2855 = vshrl.u32 %v2854, 7
    %v2856 = vsub.s32 0, %v2855
    %v2857 = vrot.slane %v2820, %v2856
    %v2859 = vadd.f32 %v2851, %v2857
    %v2860 = vadd.f32 %v2852, %v2857
    %v2861 = vld [vmem:[%s21] sm:$0x1]
    %v2862 = vld [vmem:[#allocation9] sm:$0x1]
    %2863 = vadd.xlane.f32.xlu0 %v2859
    %v2864 = vpop.xlane.xlu0 %2863
    %2865 = vadd.xlane.f32.xlu0 %v2860
    %v2866 = vpop.xlane.xlu0 %2865
    %v2867 = vmul.f32 %v2864, 0.03125
    %v2868 = vmul.f32 %v2866, 0.03125
    %v2869 = vsub.f32 %v2859, %v2867
    %v2870 = vsub.f32 %v2860, %v2868
    %v2871 = vmul.f32 %v2869, %v385
    %v2872 = vmul.f32 %v2870, %v385
    %v2873 = vmul.f32 %v2871, %v2871
    %v2874 = vmul.f32 %v2872, %v2872
    %2875 = vadd.xlane.f32.xlu0 %v2873
    %v2876 = vpop.xlane.xlu0 %2875
    %2877 = vadd.xlane.f32.xlu0 %v2874
    %v2878 = vpop.xlane.xlu0 %2877
    %v2879 = vmul.f32 %v2876, 0.03125
    %v2880 = vmul.f32 %v2878, 0.03125
    %v2881 = vadd.f32 %v2879, 1e-05
    %v2882 = vadd.f32 %v2880, 1e-05
    %v2883 = vrsqrt.pop %v2881
    %v2884 = vrsqrt.pop %v2882
    %v2885 = vmul.f32 %v2869, %v2883
    %v2886 = vmul.f32 %v2870, %v2884
    %v2888 = vlaneseq
    %v2889 = vshrl.u32 %v2888, 7
    %v2890 = vsub.s32 0, %v2889
    %v2891 = vrot.slane %v2861, %v2890
    %v2893 = vmul.f32 %v2885, %v2891
    %v2894 = vmul.f32 %v2886, %v2891
    %v2896 = vlaneseq
    %v2897 = vshrl.u32 %v2896, 7
    %v2898 = vsub.s32 0, %v2897
    %v2899 = vrot.slane %v2862, %v2898
    %v2901 = vadd.f32 %v2893, %v2899
    %v2902 = vadd.f32 %v2894, %v2899
    %v2903 = vpack.c.bf16 %v2902, %v2901
    %v2904 = vld [vmem:[%s23] sm:$0xf]
    %v2905 = vld [vmem:[%s23 + $0x4] sm:$0xf]
    %v2906 = vld [vmem:[%s23 + $0x8] sm:$0xf]
    %v2907 = vld [vmem:[%s23 + $0xc] sm:$0xf]
    %v2908 = vld [vmem:[%s23 + $0x10] sm:$0xf]
    %v2909 = vld [vmem:[%s23 + $0x14] sm:$0xf]
    %v2910 = vld [vmem:[%s23 + $0x18] sm:$0xf]
    %v2911 = vld [vmem:[%s23 + $0x1c] sm:$0xf]
    %v2912 = vld [vmem:[%s23 + $0x20] sm:$0xf]
    %v2913 = vld [vmem:[%s23 + $0x24] sm:$0xf]
    %v2914 = vld [vmem:[%s23 + $0x28] sm:$0xf]
    %v2915 = vld [vmem:[%s23 + $0x2c] sm:$0xf]
    %v2916 = vld [vmem:[%s23 + $0x30] sm:$0xf]
    %v2917 = vld [vmem:[%s23 + $0x34] sm:$0xf]
    %v2918 = vld [vmem:[%s23 + $0x38] sm:$0xf]
    %v2919 = vld [vmem:[%s23 + $0x3c] sm:$0xf]
    %v2920 = vld [vmem:[%s24] sm:$0x1]
    %v2922 = vlaneseq
    %v2923 = vshrl.u32 %v2922, 7
    %v2924 = vsub.s32 0, %v2923
    %v2925 = vrot.slane %v2920, %v2924
    %v2943 = vunpack.c.l.b16 %v2904
    %v2944 = vunpack.c.l.b16 %v2905
    %v2945 = vunpack.c.l.b16 %v2906
    %v2946 = vunpack.c.l.b16 %v2907
    %v2947 = vunpack.c.l.b16 %v2908
    %v2948 = vunpack.c.l.b16 %v2909
    %v2949 = vunpack.c.l.b16 %v2910
    %v2950 = vunpack.c.l.b16 %v2911
    %v2951 = vunpack.c.l.b16 %v2912
    %v2952 = vunpack.c.l.b16 %v2913
    %v2953 = vunpack.c.l.b16 %v2914
    %v2954 = vunpack.c.l.b16 %v2915
    %v2955 = vunpack.c.l.b16 %v2916
    %v2956 = vunpack.c.l.b16 %v2917
    %v2957 = vunpack.c.l.b16 %v2918
    %v2958 = vunpack.c.l.b16 %v2919
    %v2959 = vpack.c.b16 %v2944, %v2943
    %v2960 = vpack.c.b16 %v2946, %v2945
    %v2961 = vpack.c.b16 %v2948, %v2947
    %v2962 = vpack.c.b16 %v2950, %v2949
    %v2963 = vpack.c.b16 %v2952, %v2951
    %v2964 = vpack.c.b16 %v2954, %v2953
    %v2965 = vpack.c.b16 %v2956, %v2955
    %v2966 = vpack.c.b16 %v2958, %v2957
    %2975 = vmatprep.subr.bf16.mxu0 0
    %2976 = vmatpush1.bf16.msra.mxu0 %v2959
    %2977 = vmatprep.subr.bf16.mxu0 0
    %2978 = vmatpush1.bf16.msra.mxu0 %v2960
    %2979 = vmatprep.subr.bf16.mxu0 0
    %2980 = vmatpush1.bf16.msra.mxu0 %v2961
    %2981 = vmatprep.subr.bf16.mxu0 0
    %2982 = vmatpush1.bf16.msra.mxu0 %v2962
    %2983 = vmatprep.subr.bf16.mxu0 0
    %2984 = vmatpush1.bf16.msra.mxu0 %v2963
    %2985 = vmatprep.subr.bf16.mxu0 0
    %2986 = vmatpush1.bf16.msra.mxu0 %v2964
    %2987 = vmatprep.subr.bf16.mxu0 0
    %2988 = vmatpush1.bf16.msra.mxu0 %v2965
    %2989 = vmatprep.subr.bf16.mxu0 0
    %2990 = vmatpush1.bf16.msra.mxu0 %v2966
    %2991 = vmatprep.subr.bf16.mxu0 0
    %2992 = vmatpush1.bf16.msra.mxu0 0
    %2993 = vmatprep.subr.bf16.mxu0 0
    %2994 = vmatpush1.bf16.msra.mxu0 0
    %2995 = vmatprep.subr.bf16.mxu0 0
    %2996 = vmatpush1.bf16.msra.mxu0 0
    %2997 = vmatprep.subr.bf16.mxu0 0
    %2998 = vmatpush1.bf16.msra.mxu0 0
    %2999 = vmatprep.subr.bf16.mxu0 0
    %3000 = vmatpush1.bf16.msra.mxu0 0
    %3001 = vmatprep.subr.bf16.mxu0 0
    %3002 = vmatpush1.bf16.msra.mxu0 0
    %3003 = vmatprep.subr.bf16.mxu0 0
    %3004 = vmatpush1.bf16.msra.mxu0 0
    %3005 = vmatprep.subr.bf16.mxu0 0
    %3006 = vmatpush1.bf16.msra.mxu0 0
    %3007 = vmatprep.mubr.bf16.mxu0 0
    %3008 = vmatmul.mubr.bf16.gmra.mrb[0].mxu0 %v2903
    %v3009 = vpop.f32.mrb[0].mxu0
    %v3010 = vadd.f32 %v2925, %v3009
    %v3011 = vpop.f32.mrb[0].mxu0
    %v3012 = vpop.f32.mrb[0].mxu0
    %v3013 = vadd.f32 %v2925, %v3012
    %v3014 = vpop.f32.mrb[0].mxu0
    %3015 = vdwg.mxu0
    %3016 = vst [vmem:[%s25] sm:$0xff] %v3010
    %3017 = vst [vmem:[%s25 + $0x8] sm:$0xff] %v3013
    // Predicated region
    $region122: #{gat_transformer_forward.1} parent=1 // pred_check
      _
    $region123: #{gat_transformer_forward.1} parent=1 // pred_check_branch
      %3019 = sbr.rel (0) target = $region125
    $region124: #{gat_transformer_forward.1} parent=1 // pred_region
      _
    $region125: #{gat_transformer_forward.1} parent=1 // pred_fallthru
      _
    // Predicated region
    $region126: #{gat_transformer_forward.1} parent=1 // pred_check
      _
    $region127: #{gat_transformer_forward.1} parent=1 // pred_check_branch
      %3021 = sbr.rel (0) target = $region129
    $region128: #{gat_transformer_forward.1} parent=1 // pred_region
      _
    $region129: #{gat_transformer_forward.1} parent=1 // pred_fallthru
      _
    %3022 = vsyncpa [#allocation3], 1
    %3023 = vsyncpa [#allocation5], 1
    %3024 = vsyncpa [#allocation8], 1

</llo_original>
